<compile_context>
chip_gen: v7x
topology: tpu7x:2x2x1
jax: 0.10.0
libtpu: 0.0.40
codegen_flags: <defaults>
</compile_context>

<pallas_src>
import math
import jax
import jax.numpy as jnp
from jax.experimental import pallas as pl
from jax.experimental.pallas import tpu as pltpu

B, T, C = 2, 8, 32          # batch, sequence, hidden_size (real channels)
CP = 128                    # channel dim padded to full lane width
BT = B * T                  # flattened rows processed in one shot
N_HEAD = 8
HEAD_DIM = C // N_HEAD
NUM_CONVS = 2
KSIZE = 7
PAD = KSIZE // 2
LN_EPS = 1e-5
NEG_INF = -10000000000.0

# vecs slab row layout
R_CLN_G, R_CLN_B, R_ALN_G, R_ALN_B, R_FLN_G, R_FLN_B, R_DW0 = 0, 1, 2, 3, 4, 5, 6
N_VEC_ROWS = R_DW0 + KSIZE
# mats / bvec column-block layout (units of CP)
M_WQ, M_WK, M_WV, M_PW, M_WP, M_W1, M_W2 = 0, 1, 2, 3, 4, 5, 6
N_MATS = 7


def block_kernel(x_ref, pos_ref, bias_ref, vecs_ref, mats_ref, bvec_ref, o_ref):
    inv_c = 1.0 / C

    def ln(h, g, b):
        # padded lanes of h are zero by construction, so sums over 128 lanes
        # are sums over the real C channels.
        mu = jnp.sum(h, axis=-1, keepdims=True) * inv_c
        var = jnp.sum(h * h, axis=-1, keepdims=True) * inv_c - mu * mu
        return (h - mu) * jax.lax.rsqrt(var + LN_EPS) * g + b

    x = x_ref[...] + pos_ref[...]                       # (BT, CP) position-encoding add
    residual = x

    # ---- conv sub-blocks: LN -> depthwise conv(k=7) -> pointwise conv -> ReLU ----
    cln_g = vecs_ref[R_CLN_G:R_CLN_G + 1, :]
    cln_b = vecs_ref[R_CLN_B:R_CLN_B + 1, :]
    dw = vecs_ref[R_DW0:R_DW0 + KSIZE, :]               # (KSIZE, CP), loaded once
    pw_w = mats_ref[:, M_PW * CP:(M_PW + 1) * CP]       # (CP, CP), loaded once
    pw_b = bvec_ref[:, M_PW * CP:(M_PW + 1) * CP]
    # time index within each sequence (for conv boundary masking on the flattened rows)
    tpos = jax.lax.broadcasted_iota(jnp.int32, (BT, CP), 0) % T

    for _ in range(NUM_CONVS):
        h = ln(x, cln_g, cln_b)
        acc = jnp.zeros((BT, CP), jnp.float32)
        for k in range(KSIZE):
            off = k - PAD
            if off == 0:
                tap = h
            else:
                tap = pltpu.roll(h, shift=(-off) % BT, axis=0)   # tap[i] = h[i + off]
                src = tpos + off
                tap = jnp.where(jnp.logical_and(src >= 0, src < T), tap, 0.0)
            acc = acc + tap * dw[k:k + 1, :]
        h = jnp.maximum(
            jnp.dot(acc, pw_w, preferred_element_type=jnp.float32) + pw_b, 0.0)
        x = h + residual
        residual = x

    # ---- multi-head self-attention ----
    aln_g = vecs_ref[R_ALN_G:R_ALN_G + 1, :]
    aln_b = vecs_ref[R_ALN_B:R_ALN_B + 1, :]
    h = ln(x, aln_g, aln_b)
    # fused QKV projection: one (BT,CP)x(CP,3CP) matmul (scale already folded into wq/bq)
    qkv = jnp.dot(h, mats_ref[:, 0:3 * CP], preferred_element_type=jnp.float32) \
        + bvec_ref[:, 0:3 * CP]
    q = qkv[:, 0:CP]
    k_ = qkv[:, CP:2 * CP]
    v = qkv[:, 2 * CP:3 * CP]
    bias = bias_ref[...]                                # (BT, BT) additive mask bias
    lane = jax.lax.broadcasted_iota(jnp.int32, (1, CP), 1)
    y = jnp.zeros((BT, CP), jnp.float32)
    for hd in range(N_HEAD):
        hsel = jnp.logical_and(lane >= hd * HEAD_DIM, lane < (hd + 1) * HEAD_DIM)
        qh = jnp.where(hsel, q, 0.0)                    # query-side head mask only
        s = jax.lax.dot_general(qh, k_, (((1,), (1,)), ((), ())),
                                preferred_element_type=jnp.float32) + bias
        m = jnp.max(s, axis=-1, keepdims=True)
        e = jnp.exp(s - m)
        att = e * pl.reciprocal(jnp.sum(e, axis=-1, keepdims=True), approx=True)
        yh = jnp.dot(att, v, preferred_element_type=jnp.float32)
        y = y + jnp.where(hsel, yh, 0.0)
    y = jnp.dot(y, mats_ref[:, M_WP * CP:(M_WP + 1) * CP],
                preferred_element_type=jnp.float32) + bvec_ref[:, M_WP * CP:(M_WP + 1) * CP]
    x = h + y + residual
    residual = x

    # ---- feed forward ----
    fln_g = vecs_ref[R_FLN_G:R_FLN_G + 1, :]
    fln_b = vecs_ref[R_FLN_B:R_FLN_B + 1, :]
    h = ln(x, fln_g, fln_b)
    h = jnp.maximum(
        jnp.dot(h, mats_ref[:, M_W1 * CP:(M_W1 + 1) * CP],
                preferred_element_type=jnp.float32) + bvec_ref[:, M_W1 * CP:(M_W1 + 1) * CP],
        0.0)
    h = jnp.dot(h, mats_ref[:, M_W2 * CP:(M_W2 + 1) * CP],
                preferred_element_type=jnp.float32) + bvec_ref[:, M_W2 * CP:(M_W2 + 1) * CP]
    o_ref[...] = h + residual


@jax.jit
def qanet_block(x, mask, prep):
    # lane-dense activation slab: (B,T,C) -> (B*T, CP), zero-padded channels
    xf = jnp.zeros((BT, CP), jnp.float32).at[:, :C].set(x.reshape(BT, C))
    # block-diagonal additive attention bias: 0 for valid same-batch keys, -1e10 otherwise
    seg = jnp.arange(BT, dtype=jnp.int32) // T
    keyok = mask.reshape(BT) > 0.0
    bias = jnp.where(jnp.logical_and(seg[:, None] == seg[None, :], keyok[None, :]),
                     0.0, NEG_INF).astype(jnp.float32)

    out = pl.pallas_call(
        block_kernel,
        out_shape=jax.ShapeDtypeStruct((BT, CP), jnp.float32),
        in_specs=[pl.BlockSpec(memory_space=pltpu.MemorySpace.VMEM)] * 6,
        out_specs=pl.BlockSpec(memory_space=pltpu.MemorySpace.VMEM),
    )(xf, prep['pos'], bias, prep['vecs'], prep['mats'], prep['bvec'])
    return out[:, :C].reshape(B, T, C)


def prepare_params(p):
    """One-time packing: pad channels to CP and consolidate params into 3 slabs."""
    scale = 1.0 / math.sqrt(HEAD_DIM)

    def padmat(w):   # (C, C) -> (CP, CP)
        return jnp.zeros((CP, CP), jnp.float32).at[:C, :C].set(w)

    def padvec(v):   # (1, C) -> (1, CP)
        return jnp.zeros((1, CP), jnp.float32).at[:, :C].set(v)

    mats = jnp.concatenate(
        [padmat(p['wq'] * scale), padmat(p['wk']), padmat(p['wv']),
         padmat(p['pw_w']), padmat(p['wp']), padmat(p['w1']), padmat(p['w2'])], axis=1)
    bvec = jnp.concatenate(
        [padvec(p['bq'] * scale), padvec(p['bk']), padvec(p['bv']),
         padvec(p['pw_b']), padvec(p['bp']), padvec(p['b1']), padvec(p['b2'])], axis=1)
    vecs = jnp.concatenate(
        [padvec(p['cln_g']), padvec(p['cln_b']),
         padvec(p['aln_g']), padvec(p['aln_b']),
         padvec(p['fln_g']), padvec(p['fln_b']),
         jnp.zeros((KSIZE, CP), jnp.float32).at[:, :C].set(p['dw_w'])], axis=0)
    pos = jnp.tile(jnp.zeros((T, CP), jnp.float32).at[:, :C].set(p['pos']), (B, 1))
    return dict(pos=pos, vecs=vecs, mats=mats, bvec=bvec)


def init_params(key):
    keys = jax.random.split(key, 16)

    # position encoding (sin/cos), same formula as the PyTorch module
    pos_idx = jnp.arange(T, dtype=jnp.float32)[:, None]
    val = jnp.exp(jnp.arange(0, C, 2, dtype=jnp.float32) * -(math.log(10000.0) / C))
    pe = jnp.zeros((T, C), jnp.float32)
    pe = pe.at[:, 0::2].set(jnp.sin(pos_idx * val))
    pe = pe.at[:, 1::2].set(jnp.cos(pos_idx * val))

    def dense(k, shape, scale=0.1):
        return scale * jax.random.normal(k, shape, jnp.float32)

    return dict(
        pos=pe,
        cln_g=jnp.ones((1, C), jnp.float32), cln_b=jnp.zeros((1, C), jnp.float32),
        dw_w=dense(keys[0], (KSIZE, C)),                            # depthwise conv [k, c]
        pw_w=dense(keys[1], (C, C)), pw_b=dense(keys[2], (1, C)),   # pointwise conv (in, out)
        aln_g=jnp.ones((1, C), jnp.float32), aln_b=jnp.zeros((1, C), jnp.float32),
        wq=dense(keys[3], (C, C)), bq=dense(keys[4], (1, C)),
        wk=dense(keys[5], (C, C)), bk=dense(keys[6], (1, C)),
        wv=dense(keys[7], (C, C)), bv=dense(keys[8], (1, C)),
        wp=dense(keys[9], (C, C)), bp=dense(keys[10], (1, C)),
        fln_g=jnp.ones((1, C), jnp.float32), fln_b=jnp.zeros((1, C), jnp.float32),
        w1=dense(keys[11], (C, C)), b1=dense(keys[12], (1, C)),
        w2=dense(keys[13], (C, C)), b2=dense(keys[14], (1, C)),
    )


def _layer_norm_ref(h, g, b):
    mu = jnp.mean(h, axis=-1, keepdims=True)
    var = jnp.mean((h - mu) ** 2, axis=-1, keepdims=True)
    return (h - mu) * jax.lax.rsqrt(var + LN_EPS) * g + b


def reference(x, mask, p):
    """Pure-JAX reference matching the PyTorch forward (eval mode)."""
    x = x + p['pos'][None]
    residual = x
    for _ in range(NUM_CONVS):
        h = _layer_norm_ref(x, p['cln_g'], p['cln_b'])
        hp = jnp.pad(h, ((0, 0), (PAD, PAD), (0, 0)))
        acc = sum(hp[:, k:k + T, :] * p['dw_w'][k] for k in range(KSIZE))
        h = jax.nn.relu(acc @ p['pw_w'] + p['pw_b'])
        x = h + residual
        residual = x
    h = _layer_norm_ref(x, p['aln_g'], p['aln_b'])
    q = (h @ p['wq'] + p['bq']).reshape(B, T, N_HEAD, HEAD_DIM).transpose(0, 2, 1, 3)
    k = (h @ p['wk'] + p['bk']).reshape(B, T, N_HEAD, HEAD_DIM).transpose(0, 2, 1, 3)
    v = (h @ p['wv'] + p['bv']).reshape(B, T, N_HEAD, HEAD_DIM).transpose(0, 2, 1, 3)
    att = jnp.einsum('bhqd,bhkd->bhqk', q, k) / math.sqrt(HEAD_DIM)
    att = jnp.where(mask[:, None, None, :] == 0.0, NEG_INF, att)
    att = jax.nn.softmax(att, axis=-1)
    y = jnp.einsum('bhqk,bhkd->bhqd', att, v).transpose(0, 2, 1, 3).reshape(B, T, C)
    y = y @ p['wp'] + p['bp']
    x = h + y + residual
    residual = x
    h = _layer_norm_ref(x, p['fln_g'], p['fln_b'])
    h = jax.nn.relu(h @ p['w1'] + p['b1'])
    h = h @ p['w2'] + p['b2']
    return h + residual


if __name__ == "__main__":
    key = jax.random.PRNGKey(0)
    kx, kp = jax.random.split(key)
    x = jax.random.normal(kx, (B, T, C), jnp.float32)
    lengths = jnp.array([T, 5])
    mask = (jnp.arange(T)[None, :] < lengths[:, None]).astype(jnp.float32)   # (B, T)
    params = init_params(kp)
    prep = prepare_params(params)

    out = qanet_block(x, mask, prep)
    out = jax.block_until_ready(out)

    ref = reference(x, mask, params)
    assert out.shape == (B, T, C)
    err = jnp.max(jnp.abs(out - ref))
    assert jnp.allclose(out, ref, atol=2e-3, rtol=2e-3), f"max abs err {err}"
    print("KERNEL_OK")
</pallas_src>

<mosaic_0001>
module attributes {stable_mosaic.version = 11 : i64} {
  func.func @block_kernel(%arg0: memref<16x128xf32, #tpu.memory_space<vmem>>, %arg1: memref<16x128xf32, #tpu.memory_space<vmem>>, %arg2: memref<16x16xf32, #tpu.memory_space<vmem>>, %arg3: memref<13x128xf32, #tpu.memory_space<vmem>>, %arg4: memref<128x896xf32, #tpu.memory_space<vmem>>, %arg5: memref<1x896xf32, #tpu.memory_space<vmem>>, %arg6: memref<16x128xf32, #tpu.memory_space<vmem>>) attributes {dimension_semantics = [], scalar_prefetch = 0 : i64, scratch_operands = 0 : i64, tpu.core_type = #tpu.core_type<tc>} {
    %c0 = arith.constant 0 : index
    %c0_0 = arith.constant 0 : index
    %0 = vector.load %arg0[%c0, %c0_0] : memref<16x128xf32, #tpu.memory_space<vmem>>, vector<16x128xf32>
    %c0_1 = arith.constant 0 : index
    %c0_2 = arith.constant 0 : index
    %1 = vector.load %arg1[%c0_1, %c0_2] : memref<16x128xf32, #tpu.memory_space<vmem>>, vector<16x128xf32>
    %2 = arith.addf %0, %1 : vector<16x128xf32>
    %c0_3 = arith.constant 0 : index
    %c0_4 = arith.constant 0 : index
    %3 = vector.load %arg3[%c0_3, %c0_4] : memref<13x128xf32, #tpu.memory_space<vmem>>, vector<1x128xf32>
    %c1 = arith.constant 1 : index
    %c0_5 = arith.constant 0 : index
    %4 = vector.load %arg3[%c1, %c0_5] : memref<13x128xf32, #tpu.memory_space<vmem>>, vector<1x128xf32>
    %c6 = arith.constant 6 : index
    %c0_6 = arith.constant 0 : index
    %5 = vector.load %arg3[%c6, %c0_6] : memref<13x128xf32, #tpu.memory_space<vmem>>, vector<7x128xf32>
    %c0_7 = arith.constant 0 : index
    %c384 = arith.constant 384 : index
    %6 = vector.load %arg4[%c0_7, %c384] : memref<128x896xf32, #tpu.memory_space<vmem>>, vector<128x128xf32>
    %c0_8 = arith.constant 0 : index
    %c384_9 = arith.constant 384 : index
    %7 = vector.load %arg5[%c0_8, %c384_9] : memref<1x896xf32, #tpu.memory_space<vmem>>, vector<1x128xf32>
    %8 = tpu.iota {dimensions = array<i32: 0>} : vector<16x128xi32>
    %c8_i32 = arith.constant 8 : i32
    %c0_i32 = arith.constant 0 : i32
    %9 = arith.cmpi eq, %c8_i32, %c0_i32 : i32
    %c1_i32 = arith.constant 1 : i32
    %10 = arith.select %9, %c1_i32, %c8_i32 : i32
    %11 = vector.broadcast %10 : i32 to vector<16x128xi32>
    %12 = arith.remsi %8, %11 : vector<16x128xi32>
    %c0_i32_10 = arith.constant 0 : i32
    %13 = vector.broadcast %c0_i32_10 : i32 to vector<16x128xi32>
    %14 = arith.cmpi ne, %12, %13 : vector<16x128xi32>
    %c0_i32_11 = arith.constant 0 : i32
    %15 = vector.broadcast %c0_i32_11 : i32 to vector<16x128xi32>
    %16 = arith.cmpi slt, %12, %15 : vector<16x128xi32>
    %c0_i32_12 = arith.constant 0 : i32
    %17 = arith.cmpi slt, %10, %c0_i32_12 : i32
    %18 = vector.broadcast %17 : i1 to vector<16x128xi1>
    %19 = vector.broadcast %18 : vector<16x128xi1> to vector<16x128xi1>
    %20 = arith.xori %16, %19 : vector<16x128xi1>
    %21 = arith.andi %20, %14 : vector<16x128xi1>
    %22 = vector.broadcast %10 : i32 to vector<16x128xi32>
    %23 = arith.addi %12, %22 : vector<16x128xi32>
    %24 = arith.select %21, %23, %12 : vector<16x128xi1>, vector<16x128xi32>
    %cst = arith.constant dense<0.000000e+00> : vector<16xf32>
    %25 = vector.multi_reduction <add>, %2, %cst [1] : vector<16x128xf32> to vector<16xf32>
    %26 = vector.shape_cast %25 : vector<16xf32> to vector<16x1xf32>
    %cst_13 = arith.constant 3.125000e-02 : f32
    %27 = vector.broadcast %cst_13 : f32 to vector<16x1xf32>
    %28 = arith.mulf %26, %27 : vector<16x1xf32>
    %29 = arith.mulf %2, %2 : vector<16x128xf32>
    %cst_14 = arith.constant dense<0.000000e+00> : vector<16xf32>
    %30 = vector.multi_reduction <add>, %29, %cst_14 [1] : vector<16x128xf32> to vector<16xf32>
    %31 = vector.shape_cast %30 : vector<16xf32> to vector<16x1xf32>
    %cst_15 = arith.constant 3.125000e-02 : f32
    %32 = vector.broadcast %cst_15 : f32 to vector<16x1xf32>
    %33 = arith.mulf %31, %32 : vector<16x1xf32>
    %34 = arith.mulf %28, %28 : vector<16x1xf32>
    %35 = arith.subf %33, %34 : vector<16x1xf32>
    %36 = vector.broadcast %28 : vector<16x1xf32> to vector<16x128xf32>
    %37 = arith.subf %2, %36 : vector<16x128xf32>
    %cst_16 = arith.constant 9.99999974E-6 : f32
    %38 = vector.broadcast %cst_16 : f32 to vector<16x1xf32>
    %39 = arith.addf %35, %38 : vector<16x1xf32>
    %40 = math.rsqrt %39 : vector<16x1xf32>
    %41 = vector.broadcast %40 : vector<16x1xf32> to vector<16x128xf32>
    %42 = arith.mulf %37, %41 : vector<16x128xf32>
    %43 = vector.broadcast %3 : vector<1x128xf32> to vector<16x128xf32>
    %44 = arith.mulf %42, %43 : vector<16x128xf32>
    %45 = vector.broadcast %4 : vector<1x128xf32> to vector<16x128xf32>
    %46 = arith.addf %44, %45 : vector<16x128xf32>
    %cst_17 = arith.constant 0.000000e+00 : f32
    %47 = vector.broadcast %cst_17 : f32 to vector<16x128xf32>
    %c3_i32 = arith.constant 3 : i32
    %48 = tpu.dynamic_rotate %46 by %c3_i32 dim 0 : vector<16x128xf32>, i32 -> vector<16x128xf32>
    %c-3_i32 = arith.constant -3 : i32
    %49 = vector.broadcast %c-3_i32 : i32 to vector<16x128xi32>
    %50 = arith.addi %24, %49 : vector<16x128xi32>
    %c0_i32_18 = arith.constant 0 : i32
    %51 = vector.broadcast %c0_i32_18 : i32 to vector<16x128xi32>
    %52 = arith.cmpi sge, %50, %51 : vector<16x128xi32>
    %c8_i32_19 = arith.constant 8 : i32
    %53 = vector.broadcast %c8_i32_19 : i32 to vector<16x128xi32>
    %54 = arith.cmpi slt, %50, %53 : vector<16x128xi32>
    %55 = arith.andi %52, %54 : vector<16x128xi1>
    %cst_20 = arith.constant 0.000000e+00 : f32
    %56 = vector.broadcast %cst_20 : f32 to vector<16x128xf32>
    %57 = arith.select %55, %48, %56 : vector<16x128xi1>, vector<16x128xf32>
    %58 = vector.extract_strided_slice %5 {offsets = [0, 0], sizes = [1, 128], strides = [1, 1]} : vector<7x128xf32> to vector<1x128xf32>
    %59 = vector.broadcast %58 : vector<1x128xf32> to vector<16x128xf32>
    %60 = arith.mulf %57, %59 : vector<16x128xf32>
    %61 = arith.addf %47, %60 : vector<16x128xf32>
    %c2_i32 = arith.constant 2 : i32
    %62 = tpu.dynamic_rotate %46 by %c2_i32 dim 0 : vector<16x128xf32>, i32 -> vector<16x128xf32>
    %c-2_i32 = arith.constant -2 : i32
    %63 = vector.broadcast %c-2_i32 : i32 to vector<16x128xi32>
    %64 = arith.addi %24, %63 : vector<16x128xi32>
    %c0_i32_21 = arith.constant 0 : i32
    %65 = vector.broadcast %c0_i32_21 : i32 to vector<16x128xi32>
    %66 = arith.cmpi sge, %64, %65 : vector<16x128xi32>
    %c8_i32_22 = arith.constant 8 : i32
    %67 = vector.broadcast %c8_i32_22 : i32 to vector<16x128xi32>
    %68 = arith.cmpi slt, %64, %67 : vector<16x128xi32>
    %69 = arith.andi %66, %68 : vector<16x128xi1>
    %cst_23 = arith.constant 0.000000e+00 : f32
    %70 = vector.broadcast %cst_23 : f32 to vector<16x128xf32>
    %71 = arith.select %69, %62, %70 : vector<16x128xi1>, vector<16x128xf32>
    %72 = vector.extract_strided_slice %5 {offsets = [1, 0], sizes = [1, 128], strides = [1, 1]} : vector<7x128xf32> to vector<1x128xf32>
    %73 = vector.broadcast %72 : vector<1x128xf32> to vector<16x128xf32>
    %74 = arith.mulf %71, %73 : vector<16x128xf32>
    %75 = arith.addf %61, %74 : vector<16x128xf32>
    %c1_i32_24 = arith.constant 1 : i32
    %76 = tpu.dynamic_rotate %46 by %c1_i32_24 dim 0 : vector<16x128xf32>, i32 -> vector<16x128xf32>
    %c-1_i32 = arith.constant -1 : i32
    %77 = vector.broadcast %c-1_i32 : i32 to vector<16x128xi32>
    %78 = arith.addi %24, %77 : vector<16x128xi32>
    %c0_i32_25 = arith.constant 0 : i32
    %79 = vector.broadcast %c0_i32_25 : i32 to vector<16x128xi32>
    %80 = arith.cmpi sge, %78, %79 : vector<16x128xi32>
    %c8_i32_26 = arith.constant 8 : i32
    %81 = vector.broadcast %c8_i32_26 : i32 to vector<16x128xi32>
    %82 = arith.cmpi slt, %78, %81 : vector<16x128xi32>
    %83 = arith.andi %80, %82 : vector<16x128xi1>
    %cst_27 = arith.constant 0.000000e+00 : f32
    %84 = vector.broadcast %cst_27 : f32 to vector<16x128xf32>
    %85 = arith.select %83, %76, %84 : vector<16x128xi1>, vector<16x128xf32>
    %86 = vector.extract_strided_slice %5 {offsets = [2, 0], sizes = [1, 128], strides = [1, 1]} : vector<7x128xf32> to vector<1x128xf32>
    %87 = vector.broadcast %86 : vector<1x128xf32> to vector<16x128xf32>
    %88 = arith.mulf %85, %87 : vector<16x128xf32>
    %89 = arith.addf %75, %88 : vector<16x128xf32>
    %90 = vector.extract_strided_slice %5 {offsets = [3, 0], sizes = [1, 128], strides = [1, 1]} : vector<7x128xf32> to vector<1x128xf32>
    %91 = vector.broadcast %90 : vector<1x128xf32> to vector<16x128xf32>
    %92 = arith.mulf %46, %91 : vector<16x128xf32>
    %93 = arith.addf %89, %92 : vector<16x128xf32>
    %c15_i32 = arith.constant 15 : i32
    %94 = tpu.dynamic_rotate %46 by %c15_i32 dim 0 : vector<16x128xf32>, i32 -> vector<16x128xf32>
    %c1_i32_28 = arith.constant 1 : i32
    %95 = vector.broadcast %c1_i32_28 : i32 to vector<16x128xi32>
    %96 = arith.addi %24, %95 : vector<16x128xi32>
    %c0_i32_29 = arith.constant 0 : i32
    %97 = vector.broadcast %c0_i32_29 : i32 to vector<16x128xi32>
    %98 = arith.cmpi sge, %96, %97 : vector<16x128xi32>
    %c8_i32_30 = arith.constant 8 : i32
    %99 = vector.broadcast %c8_i32_30 : i32 to vector<16x128xi32>
    %100 = arith.cmpi slt, %96, %99 : vector<16x128xi32>
    %101 = arith.andi %98, %100 : vector<16x128xi1>
    %cst_31 = arith.constant 0.000000e+00 : f32
    %102 = vector.broadcast %cst_31 : f32 to vector<16x128xf32>
    %103 = arith.select %101, %94, %102 : vector<16x128xi1>, vector<16x128xf32>
    %104 = vector.extract_strided_slice %5 {offsets = [4, 0], sizes = [1, 128], strides = [1, 1]} : vector<7x128xf32> to vector<1x128xf32>
    %105 = vector.broadcast %104 : vector<1x128xf32> to vector<16x128xf32>
    %106 = arith.mulf %103, %105 : vector<16x128xf32>
    %107 = arith.addf %93, %106 : vector<16x128xf32>
    %c14_i32 = arith.constant 14 : i32
    %108 = tpu.dynamic_rotate %46 by %c14_i32 dim 0 : vector<16x128xf32>, i32 -> vector<16x128xf32>
    %c2_i32_32 = arith.constant 2 : i32
    %109 = vector.broadcast %c2_i32_32 : i32 to vector<16x128xi32>
    %110 = arith.addi %24, %109 : vector<16x128xi32>
    %c0_i32_33 = arith.constant 0 : i32
    %111 = vector.broadcast %c0_i32_33 : i32 to vector<16x128xi32>
    %112 = arith.cmpi sge, %110, %111 : vector<16x128xi32>
    %c8_i32_34 = arith.constant 8 : i32
    %113 = vector.broadcast %c8_i32_34 : i32 to vector<16x128xi32>
    %114 = arith.cmpi slt, %110, %113 : vector<16x128xi32>
    %115 = arith.andi %112, %114 : vector<16x128xi1>
    %cst_35 = arith.constant 0.000000e+00 : f32
    %116 = vector.broadcast %cst_35 : f32 to vector<16x128xf32>
    %117 = arith.select %115, %108, %116 : vector<16x128xi1>, vector<16x128xf32>
    %118 = vector.extract_strided_slice %5 {offsets = [5, 0], sizes = [1, 128], strides = [1, 1]} : vector<7x128xf32> to vector<1x128xf32>
    %119 = vector.broadcast %118 : vector<1x128xf32> to vector<16x128xf32>
    %120 = arith.mulf %117, %119 : vector<16x128xf32>
    %121 = arith.addf %107, %120 : vector<16x128xf32>
    %c13_i32 = arith.constant 13 : i32
    %122 = tpu.dynamic_rotate %46 by %c13_i32 dim 0 : vector<16x128xf32>, i32 -> vector<16x128xf32>
    %c3_i32_36 = arith.constant 3 : i32
    %123 = vector.broadcast %c3_i32_36 : i32 to vector<16x128xi32>
    %124 = arith.addi %24, %123 : vector<16x128xi32>
    %c0_i32_37 = arith.constant 0 : i32
    %125 = vector.broadcast %c0_i32_37 : i32 to vector<16x128xi32>
    %126 = arith.cmpi sge, %124, %125 : vector<16x128xi32>
    %c8_i32_38 = arith.constant 8 : i32
    %127 = vector.broadcast %c8_i32_38 : i32 to vector<16x128xi32>
    %128 = arith.cmpi slt, %124, %127 : vector<16x128xi32>
    %129 = arith.andi %126, %128 : vector<16x128xi1>
    %cst_39 = arith.constant 0.000000e+00 : f32
    %130 = vector.broadcast %cst_39 : f32 to vector<16x128xf32>
    %131 = arith.select %129, %122, %130 : vector<16x128xi1>, vector<16x128xf32>
    %132 = vector.extract_strided_slice %5 {offsets = [6, 0], sizes = [1, 128], strides = [1, 1]} : vector<7x128xf32> to vector<1x128xf32>
    %133 = vector.broadcast %132 : vector<1x128xf32> to vector<16x128xf32>
    %134 = arith.mulf %131, %133 : vector<16x128xf32>
    %135 = arith.addf %121, %134 : vector<16x128xf32>
    %cst_40 = arith.constant dense<0.000000e+00> : vector<16x128xf32>
    %136 = tpu.matmul %135, %6, %cst_40 {dimension_numbers = #tpu.dot_dimension_numbers<[1], [0], [0], [1], [0, 0, 1, 1], [], []>} : vector<16x128xf32>, vector<128x128xf32>, vector<16x128xf32> -> vector<16x128xf32>
    %137 = vector.broadcast %7 : vector<1x128xf32> to vector<16x128xf32>
    %138 = arith.addf %136, %137 : vector<16x128xf32>
    %cst_41 = arith.constant 0.000000e+00 : f32
    %139 = vector.broadcast %cst_41 : f32 to vector<16x128xf32>
    %140 = arith.maximumf %138, %139 : vector<16x128xf32>
    %141 = arith.addf %140, %2 : vector<16x128xf32>
    %cst_42 = arith.constant dense<0.000000e+00> : vector<16xf32>
    %142 = vector.multi_reduction <add>, %141, %cst_42 [1] : vector<16x128xf32> to vector<16xf32>
    %143 = vector.shape_cast %142 : vector<16xf32> to vector<16x1xf32>
    %cst_43 = arith.constant 3.125000e-02 : f32
    %144 = vector.broadcast %cst_43 : f32 to vector<16x1xf32>
    %145 = arith.mulf %143, %144 : vector<16x1xf32>
    %146 = arith.mulf %141, %141 : vector<16x128xf32>
    %cst_44 = arith.constant dense<0.000000e+00> : vector<16xf32>
    %147 = vector.multi_reduction <add>, %146, %cst_44 [1] : vector<16x128xf32> to vector<16xf32>
    %148 = vector.shape_cast %147 : vector<16xf32> to vector<16x1xf32>
    %cst_45 = arith.constant 3.125000e-02 : f32
    %149 = vector.broadcast %cst_45 : f32 to vector<16x1xf32>
    %150 = arith.mulf %148, %149 : vector<16x1xf32>
    %151 = arith.mulf %145, %145 : vector<16x1xf32>
    %152 = arith.subf %150, %151 : vector<16x1xf32>
    %153 = vector.broadcast %145 : vector<16x1xf32> to vector<16x128xf32>
    %154 = arith.subf %141, %153 : vector<16x128xf32>
    %cst_46 = arith.constant 9.99999974E-6 : f32
    %155 = vector.broadcast %cst_46 : f32 to vector<16x1xf32>
    %156 = arith.addf %152, %155 : vector<16x1xf32>
    %157 = math.rsqrt %156 : vector<16x1xf32>
    %158 = vector.broadcast %157 : vector<16x1xf32> to vector<16x128xf32>
    %159 = arith.mulf %154, %158 : vector<16x128xf32>
    %160 = vector.broadcast %3 : vector<1x128xf32> to vector<16x128xf32>
    %161 = arith.mulf %159, %160 : vector<16x128xf32>
    %162 = vector.broadcast %4 : vector<1x128xf32> to vector<16x128xf32>
    %163 = arith.addf %161, %162 : vector<16x128xf32>
    %cst_47 = arith.constant 0.000000e+00 : f32
    %164 = vector.broadcast %cst_47 : f32 to vector<16x128xf32>
    %c3_i32_48 = arith.constant 3 : i32
    %165 = tpu.dynamic_rotate %163 by %c3_i32_48 dim 0 : vector<16x128xf32>, i32 -> vector<16x128xf32>
    %c-3_i32_49 = arith.constant -3 : i32
    %166 = vector.broadcast %c-3_i32_49 : i32 to vector<16x128xi32>
    %167 = arith.addi %24, %166 : vector<16x128xi32>
    %c0_i32_50 = arith.constant 0 : i32
    %168 = vector.broadcast %c0_i32_50 : i32 to vector<16x128xi32>
    %169 = arith.cmpi sge, %167, %168 : vector<16x128xi32>
    %c8_i32_51 = arith.constant 8 : i32
    %170 = vector.broadcast %c8_i32_51 : i32 to vector<16x128xi32>
    %171 = arith.cmpi slt, %167, %170 : vector<16x128xi32>
    %172 = arith.andi %169, %171 : vector<16x128xi1>
    %cst_52 = arith.constant 0.000000e+00 : f32
    %173 = vector.broadcast %cst_52 : f32 to vector<16x128xf32>
    %174 = arith.select %172, %165, %173 : vector<16x128xi1>, vector<16x128xf32>
    %175 = vector.extract_strided_slice %5 {offsets = [0, 0], sizes = [1, 128], strides = [1, 1]} : vector<7x128xf32> to vector<1x128xf32>
    %176 = vector.broadcast %175 : vector<1x128xf32> to vector<16x128xf32>
    %177 = arith.mulf %174, %176 : vector<16x128xf32>
    %178 = arith.addf %164, %177 : vector<16x128xf32>
    %c2_i32_53 = arith.constant 2 : i32
    %179 = tpu.dynamic_rotate %163 by %c2_i32_53 dim 0 : vector<16x128xf32>, i32 -> vector<16x128xf32>
    %c-2_i32_54 = arith.constant -2 : i32
    %180 = vector.broadcast %c-2_i32_54 : i32 to vector<16x128xi32>
    %181 = arith.addi %24, %180 : vector<16x128xi32>
    %c0_i32_55 = arith.constant 0 : i32
    %182 = vector.broadcast %c0_i32_55 : i32 to vector<16x128xi32>
    %183 = arith.cmpi sge, %181, %182 : vector<16x128xi32>
    %c8_i32_56 = arith.constant 8 : i32
    %184 = vector.broadcast %c8_i32_56 : i32 to vector<16x128xi32>
    %185 = arith.cmpi slt, %181, %184 : vector<16x128xi32>
    %186 = arith.andi %183, %185 : vector<16x128xi1>
    %cst_57 = arith.constant 0.000000e+00 : f32
    %187 = vector.broadcast %cst_57 : f32 to vector<16x128xf32>
    %188 = arith.select %186, %179, %187 : vector<16x128xi1>, vector<16x128xf32>
    %189 = vector.extract_strided_slice %5 {offsets = [1, 0], sizes = [1, 128], strides = [1, 1]} : vector<7x128xf32> to vector<1x128xf32>
    %190 = vector.broadcast %189 : vector<1x128xf32> to vector<16x128xf32>
    %191 = arith.mulf %188, %190 : vector<16x128xf32>
    %192 = arith.addf %178, %191 : vector<16x128xf32>
    %c1_i32_58 = arith.constant 1 : i32
    %193 = tpu.dynamic_rotate %163 by %c1_i32_58 dim 0 : vector<16x128xf32>, i32 -> vector<16x128xf32>
    %c-1_i32_59 = arith.constant -1 : i32
    %194 = vector.broadcast %c-1_i32_59 : i32 to vector<16x128xi32>
    %195 = arith.addi %24, %194 : vector<16x128xi32>
    %c0_i32_60 = arith.constant 0 : i32
    %196 = vector.broadcast %c0_i32_60 : i32 to vector<16x128xi32>
    %197 = arith.cmpi sge, %195, %196 : vector<16x128xi32>
    %c8_i32_61 = arith.constant 8 : i32
    %198 = vector.broadcast %c8_i32_61 : i32 to vector<16x128xi32>
    %199 = arith.cmpi slt, %195, %198 : vector<16x128xi32>
    %200 = arith.andi %197, %199 : vector<16x128xi1>
    %cst_62 = arith.constant 0.000000e+00 : f32
    %201 = vector.broadcast %cst_62 : f32 to vector<16x128xf32>
    %202 = arith.select %200, %193, %201 : vector<16x128xi1>, vector<16x128xf32>
    %203 = vector.extract_strided_slice %5 {offsets = [2, 0], sizes = [1, 128], strides = [1, 1]} : vector<7x128xf32> to vector<1x128xf32>
    %204 = vector.broadcast %203 : vector<1x128xf32> to vector<16x128xf32>
    %205 = arith.mulf %202, %204 : vector<16x128xf32>
    %206 = arith.addf %192, %205 : vector<16x128xf32>
    %207 = vector.extract_strided_slice %5 {offsets = [3, 0], sizes = [1, 128], strides = [1, 1]} : vector<7x128xf32> to vector<1x128xf32>
    %208 = vector.broadcast %207 : vector<1x128xf32> to vector<16x128xf32>
    %209 = arith.mulf %163, %208 : vector<16x128xf32>
    %210 = arith.addf %206, %209 : vector<16x128xf32>
    %c15_i32_63 = arith.constant 15 : i32
    %211 = tpu.dynamic_rotate %163 by %c15_i32_63 dim 0 : vector<16x128xf32>, i32 -> vector<16x128xf32>
    %c1_i32_64 = arith.constant 1 : i32
    %212 = vector.broadcast %c1_i32_64 : i32 to vector<16x128xi32>
    %213 = arith.addi %24, %212 : vector<16x128xi32>
    %c0_i32_65 = arith.constant 0 : i32
    %214 = vector.broadcast %c0_i32_65 : i32 to vector<16x128xi32>
    %215 = arith.cmpi sge, %213, %214 : vector<16x128xi32>
    %c8_i32_66 = arith.constant 8 : i32
    %216 = vector.broadcast %c8_i32_66 : i32 to vector<16x128xi32>
    %217 = arith.cmpi slt, %213, %216 : vector<16x128xi32>
    %218 = arith.andi %215, %217 : vector<16x128xi1>
    %cst_67 = arith.constant 0.000000e+00 : f32
    %219 = vector.broadcast %cst_67 : f32 to vector<16x128xf32>
    %220 = arith.select %218, %211, %219 : vector<16x128xi1>, vector<16x128xf32>
    %221 = vector.extract_strided_slice %5 {offsets = [4, 0], sizes = [1, 128], strides = [1, 1]} : vector<7x128xf32> to vector<1x128xf32>
    %222 = vector.broadcast %221 : vector<1x128xf32> to vector<16x128xf32>
    %223 = arith.mulf %220, %222 : vector<16x128xf32>
    %224 = arith.addf %210, %223 : vector<16x128xf32>
    %c14_i32_68 = arith.constant 14 : i32
    %225 = tpu.dynamic_rotate %163 by %c14_i32_68 dim 0 : vector<16x128xf32>, i32 -> vector<16x128xf32>
    %c2_i32_69 = arith.constant 2 : i32
    %226 = vector.broadcast %c2_i32_69 : i32 to vector<16x128xi32>
    %227 = arith.addi %24, %226 : vector<16x128xi32>
    %c0_i32_70 = arith.constant 0 : i32
    %228 = vector.broadcast %c0_i32_70 : i32 to vector<16x128xi32>
    %229 = arith.cmpi sge, %227, %228 : vector<16x128xi32>
    %c8_i32_71 = arith.constant 8 : i32
    %230 = vector.broadcast %c8_i32_71 : i32 to vector<16x128xi32>
    %231 = arith.cmpi slt, %227, %230 : vector<16x128xi32>
    %232 = arith.andi %229, %231 : vector<16x128xi1>
    %cst_72 = arith.constant 0.000000e+00 : f32
    %233 = vector.broadcast %cst_72 : f32 to vector<16x128xf32>
    %234 = arith.select %232, %225, %233 : vector<16x128xi1>, vector<16x128xf32>
    %235 = vector.extract_strided_slice %5 {offsets = [5, 0], sizes = [1, 128], strides = [1, 1]} : vector<7x128xf32> to vector<1x128xf32>
    %236 = vector.broadcast %235 : vector<1x128xf32> to vector<16x128xf32>
    %237 = arith.mulf %234, %236 : vector<16x128xf32>
    %238 = arith.addf %224, %237 : vector<16x128xf32>
    %c13_i32_73 = arith.constant 13 : i32
    %239 = tpu.dynamic_rotate %163 by %c13_i32_73 dim 0 : vector<16x128xf32>, i32 -> vector<16x128xf32>
    %c3_i32_74 = arith.constant 3 : i32
    %240 = vector.broadcast %c3_i32_74 : i32 to vector<16x128xi32>
    %241 = arith.addi %24, %240 : vector<16x128xi32>
    %c0_i32_75 = arith.constant 0 : i32
    %242 = vector.broadcast %c0_i32_75 : i32 to vector<16x128xi32>
    %243 = arith.cmpi sge, %241, %242 : vector<16x128xi32>
    %c8_i32_76 = arith.constant 8 : i32
    %244 = vector.broadcast %c8_i32_76 : i32 to vector<16x128xi32>
    %245 = arith.cmpi slt, %241, %244 : vector<16x128xi32>
    %246 = arith.andi %243, %245 : vector<16x128xi1>
    %cst_77 = arith.constant 0.000000e+00 : f32
    %247 = vector.broadcast %cst_77 : f32 to vector<16x128xf32>
    %248 = arith.select %246, %239, %247 : vector<16x128xi1>, vector<16x128xf32>
    %249 = vector.extract_strided_slice %5 {offsets = [6, 0], sizes = [1, 128], strides = [1, 1]} : vector<7x128xf32> to vector<1x128xf32>
    %250 = vector.broadcast %249 : vector<1x128xf32> to vector<16x128xf32>
    %251 = arith.mulf %248, %250 : vector<16x128xf32>
    %252 = arith.addf %238, %251 : vector<16x128xf32>
    %cst_78 = arith.constant dense<0.000000e+00> : vector<16x128xf32>
    %253 = tpu.matmul %252, %6, %cst_78 {dimension_numbers = #tpu.dot_dimension_numbers<[1], [0], [0], [1], [0, 0, 1, 1], [], []>} : vector<16x128xf32>, vector<128x128xf32>, vector<16x128xf32> -> vector<16x128xf32>
    %254 = vector.broadcast %7 : vector<1x128xf32> to vector<16x128xf32>
    %255 = arith.addf %253, %254 : vector<16x128xf32>
    %cst_79 = arith.constant 0.000000e+00 : f32
    %256 = vector.broadcast %cst_79 : f32 to vector<16x128xf32>
    %257 = arith.maximumf %255, %256 : vector<16x128xf32>
    %258 = arith.addf %257, %141 : vector<16x128xf32>
    %c2 = arith.constant 2 : index
    %c0_80 = arith.constant 0 : index
    %259 = vector.load %arg3[%c2, %c0_80] : memref<13x128xf32, #tpu.memory_space<vmem>>, vector<1x128xf32>
    %c3 = arith.constant 3 : index
    %c0_81 = arith.constant 0 : index
    %260 = vector.load %arg3[%c3, %c0_81] : memref<13x128xf32, #tpu.memory_space<vmem>>, vector<1x128xf32>
    %cst_82 = arith.constant dense<0.000000e+00> : vector<16xf32>
    %261 = vector.multi_reduction <add>, %258, %cst_82 [1] : vector<16x128xf32> to vector<16xf32>
    %262 = vector.shape_cast %261 : vector<16xf32> to vector<16x1xf32>
    %cst_83 = arith.constant 3.125000e-02 : f32
    %263 = vector.broadcast %cst_83 : f32 to vector<16x1xf32>
    %264 = arith.mulf %262, %263 : vector<16x1xf32>
    %265 = arith.mulf %258, %258 : vector<16x128xf32>
    %cst_84 = arith.constant dense<0.000000e+00> : vector<16xf32>
    %266 = vector.multi_reduction <add>, %265, %cst_84 [1] : vector<16x128xf32> to vector<16xf32>
    %267 = vector.shape_cast %266 : vector<16xf32> to vector<16x1xf32>
    %cst_85 = arith.constant 3.125000e-02 : f32
    %268 = vector.broadcast %cst_85 : f32 to vector<16x1xf32>
    %269 = arith.mulf %267, %268 : vector<16x1xf32>
    %270 = arith.mulf %264, %264 : vector<16x1xf32>
    %271 = arith.subf %269, %270 : vector<16x1xf32>
    %272 = vector.broadcast %264 : vector<16x1xf32> to vector<16x128xf32>
    %273 = arith.subf %258, %272 : vector<16x128xf32>
    %cst_86 = arith.constant 9.99999974E-6 : f32
    %274 = vector.broadcast %cst_86 : f32 to vector<16x1xf32>
    %275 = arith.addf %271, %274 : vector<16x1xf32>
    %276 = math.rsqrt %275 : vector<16x1xf32>
    %277 = vector.broadcast %276 : vector<16x1xf32> to vector<16x128xf32>
    %278 = arith.mulf %273, %277 : vector<16x128xf32>
    %279 = vector.broadcast %259 : vector<1x128xf32> to vector<16x128xf32>
    %280 = arith.mulf %278, %279 : vector<16x128xf32>
    %281 = vector.broadcast %260 : vector<1x128xf32> to vector<16x128xf32>
    %282 = arith.addf %280, %281 : vector<16x128xf32>
    %c0_87 = arith.constant 0 : index
    %c0_88 = arith.constant 0 : index
    %283 = vector.load %arg4[%c0_87, %c0_88] : memref<128x896xf32, #tpu.memory_space<vmem>>, vector<128x384xf32>
    %cst_89 = arith.constant dense<0.000000e+00> : vector<16x384xf32>
    %284 = tpu.matmul %282, %283, %cst_89 {dimension_numbers = #tpu.dot_dimension_numbers<[1], [0], [0], [1], [0, 0, 1, 1], [], []>} : vector<16x128xf32>, vector<128x384xf32>, vector<16x384xf32> -> vector<16x384xf32>
    %c0_90 = arith.constant 0 : index
    %c0_91 = arith.constant 0 : index
    %285 = vector.load %arg5[%c0_90, %c0_91] : memref<1x896xf32, #tpu.memory_space<vmem>>, vector<1x384xf32>
    %286 = vector.broadcast %285 : vector<1x384xf32> to vector<16x384xf32>
    %287 = arith.addf %284, %286 : vector<16x384xf32>
    %288 = vector.extract_strided_slice %287 {offsets = [0, 0], sizes = [16, 128], strides = [1, 1]} : vector<16x384xf32> to vector<16x128xf32>
    %289 = vector.extract_strided_slice %287 {offsets = [0, 128], sizes = [16, 128], strides = [1, 1]} : vector<16x384xf32> to vector<16x128xf32>
    %290 = vector.extract_strided_slice %287 {offsets = [0, 256], sizes = [16, 128], strides = [1, 1]} : vector<16x384xf32> to vector<16x128xf32>
    %c0_92 = arith.constant 0 : index
    %c0_93 = arith.constant 0 : index
    %291 = vector.load %arg2[%c0_92, %c0_93] : memref<16x16xf32, #tpu.memory_space<vmem>>, vector<16x16xf32>
    %292 = tpu.iota {dimensions = array<i32: 1>} : vector<1x128xi32>
    %cst_94 = arith.constant 0.000000e+00 : f32
    %293 = vector.broadcast %cst_94 : f32 to vector<16x128xf32>
    %c0_i32_95 = arith.constant 0 : i32
    %294 = vector.broadcast %c0_i32_95 : i32 to vector<1x128xi32>
    %295 = arith.cmpi sge, %292, %294 : vector<1x128xi32>
    %c4_i32 = arith.constant 4 : i32
    %296 = vector.broadcast %c4_i32 : i32 to vector<1x128xi32>
    %297 = arith.cmpi slt, %292, %296 : vector<1x128xi32>
    %298 = arith.andi %295, %297 : vector<1x128xi1>
    %cst_96 = arith.constant 0.000000e+00 : f32
    %299 = vector.shape_cast %298 : vector<1x128xi1> to vector<1x128xi1>
    %300 = vector.broadcast %299 : vector<1x128xi1> to vector<16x128xi1>
    %301 = vector.broadcast %cst_96 : f32 to vector<16x128xf32>
    %302 = arith.select %300, %288, %301 : vector<16x128xi1>, vector<16x128xf32>
    %cst_97 = arith.constant dense<0.000000e+00> : vector<16x16xf32>
    %303 = tpu.matmul %302, %289, %cst_97 {dimension_numbers = #tpu.dot_dimension_numbers<[1], [1], [0], [0], [0, 0, 1, 0], [], []>} : vector<16x128xf32>, vector<16x128xf32>, vector<16x16xf32> -> vector<16x16xf32>
    %304 = arith.addf %303, %291 : vector<16x16xf32>
    %cst_98 = arith.constant dense<0xFF800000> : vector<16xf32>
    %305 = vector.multi_reduction <maximumf>, %304, %cst_98 [1] : vector<16x16xf32> to vector<16xf32>
    %306 = vector.shape_cast %305 : vector<16xf32> to vector<16x1xf32>
    %307 = vector.broadcast %306 : vector<16x1xf32> to vector<16x16xf32>
    %308 = arith.subf %304, %307 : vector<16x16xf32>
    %309 = math.exp %308 : vector<16x16xf32>
    %cst_99 = arith.constant dense<0.000000e+00> : vector<16xf32>
    %310 = vector.multi_reduction <add>, %309, %cst_99 [1] : vector<16x16xf32> to vector<16xf32>
    %311 = vector.shape_cast %310 : vector<16xf32> to vector<16x1xf32>
    %312 = tpu.reciprocal %311 {approx = true} : vector<16x1xf32> -> vector<16x1xf32>
    %313 = vector.broadcast %312 : vector<16x1xf32> to vector<16x16xf32>
    %314 = arith.mulf %309, %313 : vector<16x16xf32>
    %cst_100 = arith.constant dense<0.000000e+00> : vector<16x128xf32>
    %315 = tpu.matmul %314, %290, %cst_100 {dimension_numbers = #tpu.dot_dimension_numbers<[1], [0], [0], [1], [0, 0, 1, 1], [], []>} : vector<16x16xf32>, vector<16x128xf32>, vector<16x128xf32> -> vector<16x128xf32>
    %cst_101 = arith.constant 0.000000e+00 : f32
    %316 = vector.shape_cast %298 : vector<1x128xi1> to vector<1x128xi1>
    %317 = vector.broadcast %316 : vector<1x128xi1> to vector<16x128xi1>
    %318 = vector.broadcast %cst_101 : f32 to vector<16x128xf32>
    %319 = arith.select %317, %315, %318 : vector<16x128xi1>, vector<16x128xf32>
    %320 = arith.addf %293, %319 : vector<16x128xf32>
    %c4_i32_102 = arith.constant 4 : i32
    %321 = vector.broadcast %c4_i32_102 : i32 to vector<1x128xi32>
    %322 = arith.cmpi sge, %292, %321 : vector<1x128xi32>
    %c8_i32_103 = arith.constant 8 : i32
    %323 = vector.broadcast %c8_i32_103 : i32 to vector<1x128xi32>
    %324 = arith.cmpi slt, %292, %323 : vector<1x128xi32>
    %325 = arith.andi %322, %324 : vector<1x128xi1>
    %cst_104 = arith.constant 0.000000e+00 : f32
    %326 = vector.shape_cast %325 : vector<1x128xi1> to vector<1x128xi1>
    %327 = vector.broadcast %326 : vector<1x128xi1> to vector<16x128xi1>
    %328 = vector.broadcast %cst_104 : f32 to vector<16x128xf32>
    %329 = arith.select %327, %288, %328 : vector<16x128xi1>, vector<16x128xf32>
    %cst_105 = arith.constant dense<0.000000e+00> : vector<16x16xf32>
    %330 = tpu.matmul %329, %289, %cst_105 {dimension_numbers = #tpu.dot_dimension_numbers<[1], [1], [0], [0], [0, 0, 1, 0], [], []>} : vector<16x128xf32>, vector<16x128xf32>, vector<16x16xf32> -> vector<16x16xf32>
    %331 = arith.addf %330, %291 : vector<16x16xf32>
    %cst_106 = arith.constant dense<0xFF800000> : vector<16xf32>
    %332 = vector.multi_reduction <maximumf>, %331, %cst_106 [1] : vector<16x16xf32> to vector<16xf32>
    %333 = vector.shape_cast %332 : vector<16xf32> to vector<16x1xf32>
    %334 = vector.broadcast %333 : vector<16x1xf32> to vector<16x16xf32>
    %335 = arith.subf %331, %334 : vector<16x16xf32>
    %336 = math.exp %335 : vector<16x16xf32>
    %cst_107 = arith.constant dense<0.000000e+00> : vector<16xf32>
    %337 = vector.multi_reduction <add>, %336, %cst_107 [1] : vector<16x16xf32> to vector<16xf32>
    %338 = vector.shape_cast %337 : vector<16xf32> to vector<16x1xf32>
    %339 = tpu.reciprocal %338 {approx = true} : vector<16x1xf32> -> vector<16x1xf32>
    %340 = vector.broadcast %339 : vector<16x1xf32> to vector<16x16xf32>
    %341 = arith.mulf %336, %340 : vector<16x16xf32>
    %cst_108 = arith.constant dense<0.000000e+00> : vector<16x128xf32>
    %342 = tpu.matmul %341, %290, %cst_108 {dimension_numbers = #tpu.dot_dimension_numbers<[1], [0], [0], [1], [0, 0, 1, 1], [], []>} : vector<16x16xf32>, vector<16x128xf32>, vector<16x128xf32> -> vector<16x128xf32>
    %cst_109 = arith.constant 0.000000e+00 : f32
    %343 = vector.shape_cast %325 : vector<1x128xi1> to vector<1x128xi1>
    %344 = vector.broadcast %343 : vector<1x128xi1> to vector<16x128xi1>
    %345 = vector.broadcast %cst_109 : f32 to vector<16x128xf32>
    %346 = arith.select %344, %342, %345 : vector<16x128xi1>, vector<16x128xf32>
    %347 = arith.addf %320, %346 : vector<16x128xf32>
    %c8_i32_110 = arith.constant 8 : i32
    %348 = vector.broadcast %c8_i32_110 : i32 to vector<1x128xi32>
    %349 = arith.cmpi sge, %292, %348 : vector<1x128xi32>
    %c12_i32 = arith.constant 12 : i32
    %350 = vector.broadcast %c12_i32 : i32 to vector<1x128xi32>
    %351 = arith.cmpi slt, %292, %350 : vector<1x128xi32>
    %352 = arith.andi %349, %351 : vector<1x128xi1>
    %cst_111 = arith.constant 0.000000e+00 : f32
    %353 = vector.shape_cast %352 : vector<1x128xi1> to vector<1x128xi1>
    %354 = vector.broadcast %353 : vector<1x128xi1> to vector<16x128xi1>
    %355 = vector.broadcast %cst_111 : f32 to vector<16x128xf32>
    %356 = arith.select %354, %288, %355 : vector<16x128xi1>, vector<16x128xf32>
    %cst_112 = arith.constant dense<0.000000e+00> : vector<16x16xf32>
    %357 = tpu.matmul %356, %289, %cst_112 {dimension_numbers = #tpu.dot_dimension_numbers<[1], [1], [0], [0], [0, 0, 1, 0], [], []>} : vector<16x128xf32>, vector<16x128xf32>, vector<16x16xf32> -> vector<16x16xf32>
    %358 = arith.addf %357, %291 : vector<16x16xf32>
    %cst_113 = arith.constant dense<0xFF800000> : vector<16xf32>
    %359 = vector.multi_reduction <maximumf>, %358, %cst_113 [1] : vector<16x16xf32> to vector<16xf32>
    %360 = vector.shape_cast %359 : vector<16xf32> to vector<16x1xf32>
    %361 = vector.broadcast %360 : vector<16x1xf32> to vector<16x16xf32>
    %362 = arith.subf %358, %361 : vector<16x16xf32>
    %363 = math.exp %362 : vector<16x16xf32>
    %cst_114 = arith.constant dense<0.000000e+00> : vector<16xf32>
    %364 = vector.multi_reduction <add>, %363, %cst_114 [1] : vector<16x16xf32> to vector<16xf32>
    %365 = vector.shape_cast %364 : vector<16xf32> to vector<16x1xf32>
    %366 = tpu.reciprocal %365 {approx = true} : vector<16x1xf32> -> vector<16x1xf32>
    %367 = vector.broadcast %366 : vector<16x1xf32> to vector<16x16xf32>
    %368 = arith.mulf %363, %367 : vector<16x16xf32>
    %cst_115 = arith.constant dense<0.000000e+00> : vector<16x128xf32>
    %369 = tpu.matmul %368, %290, %cst_115 {dimension_numbers = #tpu.dot_dimension_numbers<[1], [0], [0], [1], [0, 0, 1, 1], [], []>} : vector<16x16xf32>, vector<16x128xf32>, vector<16x128xf32> -> vector<16x128xf32>
    %cst_116 = arith.constant 0.000000e+00 : f32
    %370 = vector.shape_cast %352 : vector<1x128xi1> to vector<1x128xi1>
    %371 = vector.broadcast %370 : vector<1x128xi1> to vector<16x128xi1>
    %372 = vector.broadcast %cst_116 : f32 to vector<16x128xf32>
    %373 = arith.select %371, %369, %372 : vector<16x128xi1>, vector<16x128xf32>
    %374 = arith.addf %347, %373 : vector<16x128xf32>
    %c12_i32_117 = arith.constant 12 : i32
    %375 = vector.broadcast %c12_i32_117 : i32 to vector<1x128xi32>
    %376 = arith.cmpi sge, %292, %375 : vector<1x128xi32>
    %c16_i32 = arith.constant 16 : i32
    %377 = vector.broadcast %c16_i32 : i32 to vector<1x128xi32>
    %378 = arith.cmpi slt, %292, %377 : vector<1x128xi32>
    %379 = arith.andi %376, %378 : vector<1x128xi1>
    %cst_118 = arith.constant 0.000000e+00 : f32
    %380 = vector.shape_cast %379 : vector<1x128xi1> to vector<1x128xi1>
    %381 = vector.broadcast %380 : vector<1x128xi1> to vector<16x128xi1>
    %382 = vector.broadcast %cst_118 : f32 to vector<16x128xf32>
    %383 = arith.select %381, %288, %382 : vector<16x128xi1>, vector<16x128xf32>
    %cst_119 = arith.constant dense<0.000000e+00> : vector<16x16xf32>
    %384 = tpu.matmul %383, %289, %cst_119 {dimension_numbers = #tpu.dot_dimension_numbers<[1], [1], [0], [0], [0, 0, 1, 0], [], []>} : vector<16x128xf32>, vector<16x128xf32>, vector<16x16xf32> -> vector<16x16xf32>
    %385 = arith.addf %384, %291 : vector<16x16xf32>
    %cst_120 = arith.constant dense<0xFF800000> : vector<16xf32>
    %386 = vector.multi_reduction <maximumf>, %385, %cst_120 [1] : vector<16x16xf32> to vector<16xf32>
    %387 = vector.shape_cast %386 : vector<16xf32> to vector<16x1xf32>
    %388 = vector.broadcast %387 : vector<16x1xf32> to vector<16x16xf32>
    %389 = arith.subf %385, %388 : vector<16x16xf32>
    %390 = math.exp %389 : vector<16x16xf32>
    %cst_121 = arith.constant dense<0.000000e+00> : vector<16xf32>
    %391 = vector.multi_reduction <add>, %390, %cst_121 [1] : vector<16x16xf32> to vector<16xf32>
    %392 = vector.shape_cast %391 : vector<16xf32> to vector<16x1xf32>
    %393 = tpu.reciprocal %392 {approx = true} : vector<16x1xf32> -> vector<16x1xf32>
    %394 = vector.broadcast %393 : vector<16x1xf32> to vector<16x16xf32>
    %395 = arith.mulf %390, %394 : vector<16x16xf32>
    %cst_122 = arith.constant dense<0.000000e+00> : vector<16x128xf32>
    %396 = tpu.matmul %395, %290, %cst_122 {dimension_numbers = #tpu.dot_dimension_numbers<[1], [0], [0], [1], [0, 0, 1, 1], [], []>} : vector<16x16xf32>, vector<16x128xf32>, vector<16x128xf32> -> vector<16x128xf32>
    %cst_123 = arith.constant 0.000000e+00 : f32
    %397 = vector.shape_cast %379 : vector<1x128xi1> to vector<1x128xi1>
    %398 = vector.broadcast %397 : vector<1x128xi1> to vector<16x128xi1>
    %399 = vector.broadcast %cst_123 : f32 to vector<16x128xf32>
    %400 = arith.select %398, %396, %399 : vector<16x128xi1>, vector<16x128xf32>
    %401 = arith.addf %374, %400 : vector<16x128xf32>
    %c16_i32_124 = arith.constant 16 : i32
    %402 = vector.broadcast %c16_i32_124 : i32 to vector<1x128xi32>
    %403 = arith.cmpi sge, %292, %402 : vector<1x128xi32>
    %c20_i32 = arith.constant 20 : i32
    %404 = vector.broadcast %c20_i32 : i32 to vector<1x128xi32>
    %405 = arith.cmpi slt, %292, %404 : vector<1x128xi32>
    %406 = arith.andi %403, %405 : vector<1x128xi1>
    %cst_125 = arith.constant 0.000000e+00 : f32
    %407 = vector.shape_cast %406 : vector<1x128xi1> to vector<1x128xi1>
    %408 = vector.broadcast %407 : vector<1x128xi1> to vector<16x128xi1>
    %409 = vector.broadcast %cst_125 : f32 to vector<16x128xf32>
    %410 = arith.select %408, %288, %409 : vector<16x128xi1>, vector<16x128xf32>
    %cst_126 = arith.constant dense<0.000000e+00> : vector<16x16xf32>
    %411 = tpu.matmul %410, %289, %cst_126 {dimension_numbers = #tpu.dot_dimension_numbers<[1], [1], [0], [0], [0, 0, 1, 0], [], []>} : vector<16x128xf32>, vector<16x128xf32>, vector<16x16xf32> -> vector<16x16xf32>
    %412 = arith.addf %411, %291 : vector<16x16xf32>
    %cst_127 = arith.constant dense<0xFF800000> : vector<16xf32>
    %413 = vector.multi_reduction <maximumf>, %412, %cst_127 [1] : vector<16x16xf32> to vector<16xf32>
    %414 = vector.shape_cast %413 : vector<16xf32> to vector<16x1xf32>
    %415 = vector.broadcast %414 : vector<16x1xf32> to vector<16x16xf32>
    %416 = arith.subf %412, %415 : vector<16x16xf32>
    %417 = math.exp %416 : vector<16x16xf32>
    %cst_128 = arith.constant dense<0.000000e+00> : vector<16xf32>
    %418 = vector.multi_reduction <add>, %417, %cst_128 [1] : vector<16x16xf32> to vector<16xf32>
    %419 = vector.shape_cast %418 : vector<16xf32> to vector<16x1xf32>
    %420 = tpu.reciprocal %419 {approx = true} : vector<16x1xf32> -> vector<16x1xf32>
    %421 = vector.broadcast %420 : vector<16x1xf32> to vector<16x16xf32>
    %422 = arith.mulf %417, %421 : vector<16x16xf32>
    %cst_129 = arith.constant dense<0.000000e+00> : vector<16x128xf32>
    %423 = tpu.matmul %422, %290, %cst_129 {dimension_numbers = #tpu.dot_dimension_numbers<[1], [0], [0], [1], [0, 0, 1, 1], [], []>} : vector<16x16xf32>, vector<16x128xf32>, vector<16x128xf32> -> vector<16x128xf32>
    %cst_130 = arith.constant 0.000000e+00 : f32
    %424 = vector.shape_cast %406 : vector<1x128xi1> to vector<1x128xi1>
    %425 = vector.broadcast %424 : vector<1x128xi1> to vector<16x128xi1>
    %426 = vector.broadcast %cst_130 : f32 to vector<16x128xf32>
    %427 = arith.select %425, %423, %426 : vector<16x128xi1>, vector<16x128xf32>
    %428 = arith.addf %401, %427 : vector<16x128xf32>
    %c20_i32_131 = arith.constant 20 : i32
    %429 = vector.broadcast %c20_i32_131 : i32 to vector<1x128xi32>
    %430 = arith.cmpi sge, %292, %429 : vector<1x128xi32>
    %c24_i32 = arith.constant 24 : i32
    %431 = vector.broadcast %c24_i32 : i32 to vector<1x128xi32>
    %432 = arith.cmpi slt, %292, %431 : vector<1x128xi32>
    %433 = arith.andi %430, %432 : vector<1x128xi1>
    %cst_132 = arith.constant 0.000000e+00 : f32
    %434 = vector.shape_cast %433 : vector<1x128xi1> to vector<1x128xi1>
    %435 = vector.broadcast %434 : vector<1x128xi1> to vector<16x128xi1>
    %436 = vector.broadcast %cst_132 : f32 to vector<16x128xf32>
    %437 = arith.select %435, %288, %436 : vector<16x128xi1>, vector<16x128xf32>
    %cst_133 = arith.constant dense<0.000000e+00> : vector<16x16xf32>
    %438 = tpu.matmul %437, %289, %cst_133 {dimension_numbers = #tpu.dot_dimension_numbers<[1], [1], [0], [0], [0, 0, 1, 0], [], []>} : vector<16x128xf32>, vector<16x128xf32>, vector<16x16xf32> -> vector<16x16xf32>
    %439 = arith.addf %438, %291 : vector<16x16xf32>
    %cst_134 = arith.constant dense<0xFF800000> : vector<16xf32>
    %440 = vector.multi_reduction <maximumf>, %439, %cst_134 [1] : vector<16x16xf32> to vector<16xf32>
    %441 = vector.shape_cast %440 : vector<16xf32> to vector<16x1xf32>
    %442 = vector.broadcast %441 : vector<16x1xf32> to vector<16x16xf32>
    %443 = arith.subf %439, %442 : vector<16x16xf32>
    %444 = math.exp %443 : vector<16x16xf32>
    %cst_135 = arith.constant dense<0.000000e+00> : vector<16xf32>
    %445 = vector.multi_reduction <add>, %444, %cst_135 [1] : vector<16x16xf32> to vector<16xf32>
    %446 = vector.shape_cast %445 : vector<16xf32> to vector<16x1xf32>
    %447 = tpu.reciprocal %446 {approx = true} : vector<16x1xf32> -> vector<16x1xf32>
    %448 = vector.broadcast %447 : vector<16x1xf32> to vector<16x16xf32>
    %449 = arith.mulf %444, %448 : vector<16x16xf32>
    %cst_136 = arith.constant dense<0.000000e+00> : vector<16x128xf32>
    %450 = tpu.matmul %449, %290, %cst_136 {dimension_numbers = #tpu.dot_dimension_numbers<[1], [0], [0], [1], [0, 0, 1, 1], [], []>} : vector<16x16xf32>, vector<16x128xf32>, vector<16x128xf32> -> vector<16x128xf32>
    %cst_137 = arith.constant 0.000000e+00 : f32
    %451 = vector.shape_cast %433 : vector<1x128xi1> to vector<1x128xi1>
    %452 = vector.broadcast %451 : vector<1x128xi1> to vector<16x128xi1>
    %453 = vector.broadcast %cst_137 : f32 to vector<16x128xf32>
    %454 = arith.select %452, %450, %453 : vector<16x128xi1>, vector<16x128xf32>
    %455 = arith.addf %428, %454 : vector<16x128xf32>
    %c24_i32_138 = arith.constant 24 : i32
    %456 = vector.broadcast %c24_i32_138 : i32 to vector<1x128xi32>
    %457 = arith.cmpi sge, %292, %456 : vector<1x128xi32>
    %c28_i32 = arith.constant 28 : i32
    %458 = vector.broadcast %c28_i32 : i32 to vector<1x128xi32>
    %459 = arith.cmpi slt, %292, %458 : vector<1x128xi32>
    %460 = arith.andi %457, %459 : vector<1x128xi1>
    %cst_139 = arith.constant 0.000000e+00 : f32
    %461 = vector.shape_cast %460 : vector<1x128xi1> to vector<1x128xi1>
    %462 = vector.broadcast %461 : vector<1x128xi1> to vector<16x128xi1>
    %463 = vector.broadcast %cst_139 : f32 to vector<16x128xf32>
    %464 = arith.select %462, %288, %463 : vector<16x128xi1>, vector<16x128xf32>
    %cst_140 = arith.constant dense<0.000000e+00> : vector<16x16xf32>
    %465 = tpu.matmul %464, %289, %cst_140 {dimension_numbers = #tpu.dot_dimension_numbers<[1], [1], [0], [0], [0, 0, 1, 0], [], []>} : vector<16x128xf32>, vector<16x128xf32>, vector<16x16xf32> -> vector<16x16xf32>
    %466 = arith.addf %465, %291 : vector<16x16xf32>
    %cst_141 = arith.constant dense<0xFF800000> : vector<16xf32>
    %467 = vector.multi_reduction <maximumf>, %466, %cst_141 [1] : vector<16x16xf32> to vector<16xf32>
    %468 = vector.shape_cast %467 : vector<16xf32> to vector<16x1xf32>
    %469 = vector.broadcast %468 : vector<16x1xf32> to vector<16x16xf32>
    %470 = arith.subf %466, %469 : vector<16x16xf32>
    %471 = math.exp %470 : vector<16x16xf32>
    %cst_142 = arith.constant dense<0.000000e+00> : vector<16xf32>
    %472 = vector.multi_reduction <add>, %471, %cst_142 [1] : vector<16x16xf32> to vector<16xf32>
    %473 = vector.shape_cast %472 : vector<16xf32> to vector<16x1xf32>
    %474 = tpu.reciprocal %473 {approx = true} : vector<16x1xf32> -> vector<16x1xf32>
    %475 = vector.broadcast %474 : vector<16x1xf32> to vector<16x16xf32>
    %476 = arith.mulf %471, %475 : vector<16x16xf32>
    %cst_143 = arith.constant dense<0.000000e+00> : vector<16x128xf32>
    %477 = tpu.matmul %476, %290, %cst_143 {dimension_numbers = #tpu.dot_dimension_numbers<[1], [0], [0], [1], [0, 0, 1, 1], [], []>} : vector<16x16xf32>, vector<16x128xf32>, vector<16x128xf32> -> vector<16x128xf32>
    %cst_144 = arith.constant 0.000000e+00 : f32
    %478 = vector.shape_cast %460 : vector<1x128xi1> to vector<1x128xi1>
    %479 = vector.broadcast %478 : vector<1x128xi1> to vector<16x128xi1>
    %480 = vector.broadcast %cst_144 : f32 to vector<16x128xf32>
    %481 = arith.select %479, %477, %480 : vector<16x128xi1>, vector<16x128xf32>
    %482 = arith.addf %455, %481 : vector<16x128xf32>
    %c28_i32_145 = arith.constant 28 : i32
    %483 = vector.broadcast %c28_i32_145 : i32 to vector<1x128xi32>
    %484 = arith.cmpi sge, %292, %483 : vector<1x128xi32>
    %c32_i32 = arith.constant 32 : i32
    %485 = vector.broadcast %c32_i32 : i32 to vector<1x128xi32>
    %486 = arith.cmpi slt, %292, %485 : vector<1x128xi32>
    %487 = arith.andi %484, %486 : vector<1x128xi1>
    %cst_146 = arith.constant 0.000000e+00 : f32
    %488 = vector.shape_cast %487 : vector<1x128xi1> to vector<1x128xi1>
    %489 = vector.broadcast %488 : vector<1x128xi1> to vector<16x128xi1>
    %490 = vector.broadcast %cst_146 : f32 to vector<16x128xf32>
    %491 = arith.select %489, %288, %490 : vector<16x128xi1>, vector<16x128xf32>
    %cst_147 = arith.constant dense<0.000000e+00> : vector<16x16xf32>
    %492 = tpu.matmul %491, %289, %cst_147 {dimension_numbers = #tpu.dot_dimension_numbers<[1], [1], [0], [0], [0, 0, 1, 0], [], []>} : vector<16x128xf32>, vector<16x128xf32>, vector<16x16xf32> -> vector<16x16xf32>
    %493 = arith.addf %492, %291 : vector<16x16xf32>
    %cst_148 = arith.constant dense<0xFF800000> : vector<16xf32>
    %494 = vector.multi_reduction <maximumf>, %493, %cst_148 [1] : vector<16x16xf32> to vector<16xf32>
    %495 = vector.shape_cast %494 : vector<16xf32> to vector<16x1xf32>
    %496 = vector.broadcast %495 : vector<16x1xf32> to vector<16x16xf32>
    %497 = arith.subf %493, %496 : vector<16x16xf32>
    %498 = math.exp %497 : vector<16x16xf32>
    %cst_149 = arith.constant dense<0.000000e+00> : vector<16xf32>
    %499 = vector.multi_reduction <add>, %498, %cst_149 [1] : vector<16x16xf32> to vector<16xf32>
    %500 = vector.shape_cast %499 : vector<16xf32> to vector<16x1xf32>
    %501 = tpu.reciprocal %500 {approx = true} : vector<16x1xf32> -> vector<16x1xf32>
    %502 = vector.broadcast %501 : vector<16x1xf32> to vector<16x16xf32>
    %503 = arith.mulf %498, %502 : vector<16x16xf32>
    %cst_150 = arith.constant dense<0.000000e+00> : vector<16x128xf32>
    %504 = tpu.matmul %503, %290, %cst_150 {dimension_numbers = #tpu.dot_dimension_numbers<[1], [0], [0], [1], [0, 0, 1, 1], [], []>} : vector<16x16xf32>, vector<16x128xf32>, vector<16x128xf32> -> vector<16x128xf32>
    %cst_151 = arith.constant 0.000000e+00 : f32
    %505 = vector.shape_cast %487 : vector<1x128xi1> to vector<1x128xi1>
    %506 = vector.broadcast %505 : vector<1x128xi1> to vector<16x128xi1>
    %507 = vector.broadcast %cst_151 : f32 to vector<16x128xf32>
    %508 = arith.select %506, %504, %507 : vector<16x128xi1>, vector<16x128xf32>
    %509 = arith.addf %482, %508 : vector<16x128xf32>
    %c0_152 = arith.constant 0 : index
    %c512 = arith.constant 512 : index
    %510 = vector.load %arg4[%c0_152, %c512] : memref<128x896xf32, #tpu.memory_space<vmem>>, vector<128x128xf32>
    %cst_153 = arith.constant dense<0.000000e+00> : vector<16x128xf32>
    %511 = tpu.matmul %509, %510, %cst_153 {dimension_numbers = #tpu.dot_dimension_numbers<[1], [0], [0], [1], [0, 0, 1, 1], [], []>} : vector<16x128xf32>, vector<128x128xf32>, vector<16x128xf32> -> vector<16x128xf32>
    %c0_154 = arith.constant 0 : index
    %c512_155 = arith.constant 512 : index
    %512 = vector.load %arg5[%c0_154, %c512_155] : memref<1x896xf32, #tpu.memory_space<vmem>>, vector<1x128xf32>
    %513 = vector.broadcast %512 : vector<1x128xf32> to vector<16x128xf32>
    %514 = arith.addf %511, %513 : vector<16x128xf32>
    %515 = arith.addf %282, %514 : vector<16x128xf32>
    %516 = arith.addf %515, %258 : vector<16x128xf32>
    %c4 = arith.constant 4 : index
    %c0_156 = arith.constant 0 : index
    %517 = vector.load %arg3[%c4, %c0_156] : memref<13x128xf32, #tpu.memory_space<vmem>>, vector<1x128xf32>
    %c5 = arith.constant 5 : index
    %c0_157 = arith.constant 0 : index
    %518 = vector.load %arg3[%c5, %c0_157] : memref<13x128xf32, #tpu.memory_space<vmem>>, vector<1x128xf32>
    %cst_158 = arith.constant dense<0.000000e+00> : vector<16xf32>
    %519 = vector.multi_reduction <add>, %516, %cst_158 [1] : vector<16x128xf32> to vector<16xf32>
    %520 = vector.shape_cast %519 : vector<16xf32> to vector<16x1xf32>
    %cst_159 = arith.constant 3.125000e-02 : f32
    %521 = vector.broadcast %cst_159 : f32 to vector<16x1xf32>
    %522 = arith.mulf %520, %521 : vector<16x1xf32>
    %523 = arith.mulf %516, %516 : vector<16x128xf32>
    %cst_160 = arith.constant dense<0.000000e+00> : vector<16xf32>
    %524 = vector.multi_reduction <add>, %523, %cst_160 [1] : vector<16x128xf32> to vector<16xf32>
    %525 = vector.shape_cast %524 : vector<16xf32> to vector<16x1xf32>
    %cst_161 = arith.constant 3.125000e-02 : f32
    %526 = vector.broadcast %cst_161 : f32 to vector<16x1xf32>
    %527 = arith.mulf %525, %526 : vector<16x1xf32>
    %528 = arith.mulf %522, %522 : vector<16x1xf32>
    %529 = arith.subf %527, %528 : vector<16x1xf32>
    %530 = vector.broadcast %522 : vector<16x1xf32> to vector<16x128xf32>
    %531 = arith.subf %516, %530 : vector<16x128xf32>
    %cst_162 = arith.constant 9.99999974E-6 : f32
    %532 = vector.broadcast %cst_162 : f32 to vector<16x1xf32>
    %533 = arith.addf %529, %532 : vector<16x1xf32>
    %534 = math.rsqrt %533 : vector<16x1xf32>
    %535 = vector.broadcast %534 : vector<16x1xf32> to vector<16x128xf32>
    %536 = arith.mulf %531, %535 : vector<16x128xf32>
    %537 = vector.broadcast %517 : vector<1x128xf32> to vector<16x128xf32>
    %538 = arith.mulf %536, %537 : vector<16x128xf32>
    %539 = vector.broadcast %518 : vector<1x128xf32> to vector<16x128xf32>
    %540 = arith.addf %538, %539 : vector<16x128xf32>
    %c0_163 = arith.constant 0 : index
    %c640 = arith.constant 640 : index
    %541 = vector.load %arg4[%c0_163, %c640] : memref<128x896xf32, #tpu.memory_space<vmem>>, vector<128x128xf32>
    %cst_164 = arith.constant dense<0.000000e+00> : vector<16x128xf32>
    %542 = tpu.matmul %540, %541, %cst_164 {dimension_numbers = #tpu.dot_dimension_numbers<[1], [0], [0], [1], [0, 0, 1, 1], [], []>} : vector<16x128xf32>, vector<128x128xf32>, vector<16x128xf32> -> vector<16x128xf32>
    %c0_165 = arith.constant 0 : index
    %c640_166 = arith.constant 640 : index
    %543 = vector.load %arg5[%c0_165, %c640_166] : memref<1x896xf32, #tpu.memory_space<vmem>>, vector<1x128xf32>
    %544 = vector.broadcast %543 : vector<1x128xf32> to vector<16x128xf32>
    %545 = arith.addf %542, %544 : vector<16x128xf32>
    %cst_167 = arith.constant 0.000000e+00 : f32
    %546 = vector.broadcast %cst_167 : f32 to vector<16x128xf32>
    %547 = arith.maximumf %545, %546 : vector<16x128xf32>
    %c0_168 = arith.constant 0 : index
    %c768 = arith.constant 768 : index
    %548 = vector.load %arg4[%c0_168, %c768] : memref<128x896xf32, #tpu.memory_space<vmem>>, vector<128x128xf32>
    %cst_169 = arith.constant dense<0.000000e+00> : vector<16x128xf32>
    %549 = tpu.matmul %547, %548, %cst_169 {dimension_numbers = #tpu.dot_dimension_numbers<[1], [0], [0], [1], [0, 0, 1, 1], [], []>} : vector<16x128xf32>, vector<128x128xf32>, vector<16x128xf32> -> vector<16x128xf32>
    %c0_170 = arith.constant 0 : index
    %c768_171 = arith.constant 768 : index
    %550 = vector.load %arg5[%c0_170, %c768_171] : memref<1x896xf32, #tpu.memory_space<vmem>>, vector<1x128xf32>
    %551 = vector.broadcast %550 : vector<1x128xf32> to vector<16x128xf32>
    %552 = arith.addf %549, %551 : vector<16x128xf32>
    %553 = arith.addf %552, %516 : vector<16x128xf32>
    %c0_172 = arith.constant 0 : index
    %c0_173 = arith.constant 0 : index
    %554 = vector.load %arg6[%c0_172, %c0_173] : memref<16x128xf32, #tpu.memory_space<vmem>>, vector<16x128xf32>
    tpu.vector_store %arg6[%c0_172, %c0_173], %553 {strides = array<i32>} : memref<16x128xf32, #tpu.memory_space<vmem>>, vector<16x128xf32>,
    return
  }
}

</mosaic_0001>

<llo_original>
// kernel: qanet_block.1
$region0: #{qanet_block.1}
  #allocation0 [shape = 'u32[]', space=smem, size = 0x4, offset = 0x4, fixed_abs, tag = 'smem constant byte address 0x4 - core index']
  #allocation1 [shape = 'u32[144,128]{1,0:T(1,128)}', space=vmem, size = 0x12000, scoped, tag = 'internal scratch']
  %s0 = inlined_call_operand.vmem [shape: f32[16,128], index: 0, kind: input, shape index: {}]
  %s1 = inlined_call_operand.vmem [shape: f32[16,128], index: 1, kind: input, shape index: {}]
  %s2 = inlined_call_operand.vmem [shape: f32[16,16], index: 2, kind: input, shape index: {}]
  %s3 = inlined_call_operand.vmem [shape: f32[13,128], index: 3, kind: input, shape index: {}]
  %s4 = inlined_call_operand.hbm [shape: f32[128,896], index: 4, kind: input, shape index: {}]
  %s5 = inlined_call_operand.vmem [shape: f32[1,896], index: 5, kind: input, shape index: {}]
  %s6 = inlined_call_operand.vmem [shape: f32[16,128], index: 6, kind: output, shape index: {}]
  %s7 = sld [smem:[#allocation0]]
  $region38: #{qanet_block.1} parent=0
    _
  %s9 = ssub.s32 1, %s7
  %s10 = scalar_select 0, %s9, %s7
  $region1: #{qanet_block.1} parent=0
    #allocation2 [shape = 'u8[458752]{0}', space=vmem, size = 0x70000, scoped, tag = 'input window, operand 4, single buffered']
    #allocation3 [shape = 's32[1]{0}', space=sflag, size = 0x4, scoped, tag = 'scoped memory for qanet_block.1']
    %11 = vsyncpa [#allocation3], 0
    // Predicated region
    $region2: #{qanet_block.1} parent=1 // pred_check
      _
    $region3: #{qanet_block.1} parent=1 // pred_check_branch
      %13 = sbr.rel (0) target = $region5
    $region4: #{qanet_block.1} parent=1 // pred_region
      _
    $region5: #{qanet_block.1} parent=1 // pred_fallthru
      _
    // Predicated region
    $region6: #{qanet_block.1} parent=1 // pred_check
      _
    $region7: #{qanet_block.1} parent=1 // pred_check_branch
      %15 = sbr.rel (0) target = $region9
    $region8: #{qanet_block.1} parent=1 // pred_region
      _
    $region9: #{qanet_block.1} parent=1 // pred_fallthru
      _
    // Predicated region
    $region10: #{qanet_block.1} parent=1 // pred_check
      _
    $region11: #{qanet_block.1} parent=1 // pred_check_branch
      %17 = sbr.rel (0) target = $region13
    $region12: #{qanet_block.1} parent=1 // pred_region
      _
    $region13: #{qanet_block.1} parent=1 // pred_fallthru
      _
    // Predicated region
    $region14: #{qanet_block.1} parent=1 // pred_check
      _
    $region15: #{qanet_block.1} parent=1 // pred_check_branch
      %19 = sbr.rel (0) target = $region17
    $region16: #{qanet_block.1} parent=1 // pred_region
      _
    $region17: #{qanet_block.1} parent=1 // pred_fallthru
      _
    // Predicated region
    $region18: #{qanet_block.1} parent=1 // pred_check
      _
    $region19: #{qanet_block.1} parent=1 // pred_check_branch
      %21 = sbr.rel (0) target = $region21
    $region20: #{qanet_block.1} parent=1 // pred_region
      %s23 = ssub.s32 14336, 14336
      %24 = vsyncadd [#allocation3], %s23
      %s25 = sshll.u32 [#allocation2], 4
      %s26 = int_to_ptr.vmem [resolvable:$true] %s25
      %31 = dma.hbm_to_vmem [thread:$0]  %s4, 14336, %s26, [#allocation3], 896, 896, 56
    $region21: #{qanet_block.1} parent=1 // pred_fallthru
      _
    // Predicated region
    $region22: #{qanet_block.1} parent=1 // pred_check
      _
    $region23: #{qanet_block.1} parent=1 // pred_check_branch
      %33 = sbr.rel (0) target = $region25
    $region24: #{qanet_block.1} parent=1 // pred_region
      _
    $region25: #{qanet_block.1} parent=1 // pred_fallthru
      _
    // Predicated region
    $region26: #{qanet_block.1} parent=1 // pred_check
      _
    $region27: #{qanet_block.1} parent=1 // pred_check_branch
      %35 = sbr.rel (0) target = $region29
    $region28: #{qanet_block.1} parent=1 // pred_region
      %36 = dma.done [#allocation3], 14336
    $region29: #{qanet_block.1} parent=1 // pred_fallthru
      _
    %v37 = vld [vmem:[%s0] sm:$0xff]
    %v38 = vld [vmem:[%s0 + $0x8] sm:$0xff]
    %v39 = vld [vmem:[%s1] sm:$0xff]
    %v40 = vld [vmem:[%s1 + $0x8] sm:$0xff]
    %v41 = vadd.f32 %v37, %v39
    %v42 = vadd.f32 %v38, %v40
    %v43 = vld [vmem:[%s3] sm:$0x1]
    %v44 = vld [vmem:[%s3 + $0x1] sm:$0x1]
    %v45 = vld [vmem:[%s3 + $0x6] sm:$0x7f]
    %v46 = vld [vmem:[#allocation2 + $0x18] sm:$0xff]
    %v47 = vld [vmem:[#allocation2 + $0x50] sm:$0xff]
    %v48 = vld [vmem:[#allocation2 + $0x88] sm:$0xff]
    %v49 = vld [vmem:[#allocation2 + $0xc0] sm:$0xff]
    %v50 = vld [vmem:[#allocation2 + $0xf8] sm:$0xff]
    %v51 = vld [vmem:[#allocation2 + $0x130] sm:$0xff]
    %v52 = vld [vmem:[#allocation2 + $0x168] sm:$0xff]
    %v53 = vld [vmem:[#allocation2 + $0x1a0] sm:$0xff]
    %v54 = vld [vmem:[#allocation2 + $0x1d8] sm:$0xff]
    %v55 = vld [vmem:[#allocation2 + $0x210] sm:$0xff]
    %v56 = vld [vmem:[#allocation2 + $0x248] sm:$0xff]
    %v57 = vld [vmem:[#allocation2 + $0x280] sm:$0xff]
    %v58 = vld [vmem:[#allocation2 + $0x2b8] sm:$0xff]
    %v59 = vld [vmem:[#allocation2 + $0x2f0] sm:$0xff]
    %v60 = vld [vmem:[#allocation2 + $0x328] sm:$0xff]
    %v61 = vld [vmem:[#allocation2 + $0x360] sm:$0xff]
    %v62 = vld [vmem:[%s5 + $0x3] sm:$0x1]
    %v63 = vlaneseq
    %v64 = vshrl.u32 %v63, 7
    %v65 = vadd.s32 %v64, 8
    %vm66 = vcmp.lt.s32.totalorder %v64, 0
    %v67 = vsub.s32 0, %v64
    %v68 = vsel %vm66, %v67, %v64
    %v69 = vshrl.u32 %v68, 3
    %v70 = vand.u32 %v68, 7
    %v71 = vsub.s32 0, %v70
    %v72 = vsel %vm66, %v71, %v70
    %vm73 = vcmp.lt.s32.totalorder %v65, 0
    %v74 = vsub.s32 0, %v65
    %v75 = vsel %vm73, %v74, %v65
    %v76 = vshrl.u32 %v75, 3
    %v77 = vand.u32 %v75, 7
    %v78 = vsub.s32 0, %v77
    %v79 = vsel %vm73, %v78, %v77
    %vm80 = vcmp.ne.s32.totalorder %v72, 0
    %vm81 = vcmp.ne.s32.totalorder %v79, 0
    %vm82 = vcmp.lt.s32.totalorder %v72, 0
    %vm83 = vcmp.lt.s32.totalorder %v79, 0
    %vm84 = vmand %vm82, %vm80
    %vm85 = vmand %vm83, %vm81
    %v86 = vadd.s32 %v72, 8
    %v87 = vadd.s32 %v79, 8
    %v88 = vsel %vm84, %v86, %v72
    %v89 = vsel %vm85, %v87, %v79
    %90 = vadd.xlane.f32.xlu0 %v41
    %v91 = vpop.xlane.xlu0 %90
    %92 = vadd.xlane.f32.xlu0 %v42
    %v93 = vpop.xlane.xlu0 %92
    %v94 = vmul.f32 %v91, 0.03125
    %v95 = vmul.f32 %v93, 0.03125
    %v96 = vmul.f32 %v41, %v41
    %v97 = vmul.f32 %v42, %v42
    %98 = vadd.xlane.f32.xlu0 %v96
    %v99 = vpop.xlane.xlu0 %98
    %100 = vadd.xlane.f32.xlu0 %v97
    %v101 = vpop.xlane.xlu0 %100
    %v102 = vmul.f32 %v99, 0.03125
    %v103 = vmul.f32 %v101, 0.03125
    %v104 = vmul.f32 %v94, %v94
    %v105 = vmul.f32 %v95, %v95
    %v106 = vsub.f32 %v102, %v104
    %v107 = vsub.f32 %v103, %v105
    %v108 = vsub.f32 %v41, %v94
    %v109 = vsub.f32 %v42, %v95
    %v110 = vadd.f32 %v106, 1e-05
    %v111 = vadd.f32 %v107, 1e-05
    %v112 = vrsqrt.pop %v110
    %v113 = vrsqrt.pop %v111
    %v114 = vmul.f32 %v108, %v112
    %v115 = vmul.f32 %v109, %v113
    %v116 = vlaneseq
    %v117 = vshrl.u32 %v116, 7
    %v118 = vsub.s32 0, %v117
    %v119 = vrot.slane %v43, %v118
    %v120 = vmul.f32 %v114, %v119
    %v121 = vmul.f32 %v115, %v119
    %v122 = vlaneseq
    %v123 = vshrl.u32 %v122, 7
    %v124 = vsub.s32 0, %v123
    %v125 = vrot.slane %v44, %v124
    %v126 = vadd.f32 %v120, %v125
    %v127 = vadd.f32 %v121, %v125
    %v128 = vrot.slane %v126, 5
    %v129 = vrot.slane %v127, 5
    %vm130 = vcmp.lt.s32.totalorder %v64, 3
    %v131 = vsel %vm130, %v128, %v129
    %v132 = vsel %vm130, %v129, %v128
    %v133 = vadd.s32 %v88, 4294967293
    %v134 = vadd.s32 %v89, 4294967293
    %vm135 = vcmp.ge.s32.totalorder %v133, 0
    %vm136 = vcmp.ge.s32.totalorder %v134, 0
    %vm137 = vcmp.lt.s32.totalorder %v133, 8
    %vm138 = vcmp.lt.s32.totalorder %v134, 8
    %vm139 = vmand %vm135, %vm137
    %vm140 = vmand %vm136, %vm138
    %v141 = vsel %vm139, %v132, 0.0
    %v142 = vsel %vm140, %v131, 0.0
    %v143 = vlaneseq
    %v144 = vshrl.u32 %v143, 7
    %v145 = vsub.s32 0, %v144
    %v146 = vrot.slane %v45, %v145
    %v147 = vmul.f32 %v141, %v146
    %v148 = vmul.f32 %v142, %v146
    %v149 = vadd.f32 %v147, 0.0
    %v150 = vadd.f32 %v148, 0.0
    %v151 = vrot.slane %v126, 6
    %v152 = vrot.slane %v127, 6
    %vm153 = vcmp.lt.s32.totalorder %v64, 2
    %v154 = vsel %vm153, %v151, %v152
    %v155 = vsel %vm153, %v152, %v151
    %v156 = vadd.s32 %v88, 4294967294
    %v157 = vadd.s32 %v89, 4294967294
    %vm158 = vcmp.ge.s32.totalorder %v156, 0
    %vm159 = vcmp.ge.s32.totalorder %v157, 0
    %vm160 = vcmp.lt.s32.totalorder %v156, 8
    %vm161 = vcmp.lt.s32.totalorder %v157, 8
    %vm162 = vmand %vm158, %vm160
    %vm163 = vmand %vm159, %vm161
    %v164 = vsel %vm162, %v155, 0.0
    %v165 = vsel %vm163, %v154, 0.0
    %v166 = vlaneseq
    %v167 = vshrl.u32 %v166, 7
    %v168 = vsub.s32 1, %v167
    %v169 = vrot.slane %v45, %v168
    %v170 = vmul.f32 %v164, %v169
    %v171 = vmul.f32 %v165, %v169
    %v172 = vadd.f32 %v149, %v170
    %v173 = vadd.f32 %v150, %v171
    %v174 = vrot.slane %v126, 7
    %v175 = vrot.slane %v127, 7
    %vm176 = vcmp.lt.s32.totalorder %v64, 1
    %v177 = vsel %vm176, %v174, %v175
    %v178 = vsel %vm176, %v175, %v174
    %v179 = vadd.s32 %v88, 4294967295
    %v180 = vadd.s32 %v89, 4294967295
    %vm181 = vcmp.ge.s32.totalorder %v179, 0
    %vm182 = vcmp.ge.s32.totalorder %v180, 0
    %vm183 = vcmp.lt.s32.totalorder %v179, 8
    %vm184 = vcmp.lt.s32.totalorder %v180, 8
    %vm185 = vmand %vm181, %vm183
    %vm186 = vmand %vm182, %vm184
    %v187 = vsel %vm185, %v178, 0.0
    %v188 = vsel %vm186, %v177, 0.0
    %v189 = vlaneseq
    %v190 = vshrl.u32 %v189, 7
    %v191 = vsub.s32 2, %v190
    %v192 = vrot.slane %v45, %v191
    %v193 = vmul.f32 %v187, %v192
    %v194 = vmul.f32 %v188, %v192
    %v195 = vadd.f32 %v172, %v193
    %v196 = vadd.f32 %v173, %v194
    %v197 = vlaneseq
    %v198 = vshrl.u32 %v197, 7
    %v199 = vsub.s32 3, %v198
    %v200 = vrot.slane %v45, %v199
    %v201 = vmul.f32 %v126, %v200
    %v202 = vmul.f32 %v127, %v200
    %v203 = vadd.f32 %v195, %v201
    %v204 = vadd.f32 %v196, %v202
    %v205 = vrot.slane %v126, 1
    %v206 = vrot.slane %v127, 1
    %vm207 = vcmp.lt.s32.totalorder %v64, 7
    %v208 = vsel %vm207, %v205, %v206
    %v209 = vsel %vm207, %v206, %v205
    %v210 = vadd.s32 %v88, 1
    %v211 = vadd.s32 %v89, 1
    %vm212 = vcmp.ge.s32.totalorder %v210, 0
    %vm213 = vcmp.ge.s32.totalorder %v211, 0
    %vm214 = vcmp.lt.s32.totalorder %v210, 8
    %vm215 = vcmp.lt.s32.totalorder %v211, 8
    %vm216 = vmand %vm212, %vm214
    %vm217 = vmand %vm213, %vm215
    %v218 = vsel %vm216, %v208, 0.0
    %v219 = vsel %vm217, %v209, 0.0
    %v220 = vlaneseq
    %v221 = vshrl.u32 %v220, 7
    %v222 = vsub.s32 4, %v221
    %v223 = vrot.slane %v45, %v222
    %v224 = vmul.f32 %v218, %v223
    %v225 = vmul.f32 %v219, %v223
    %v226 = vadd.f32 %v203, %v224
    %v227 = vadd.f32 %v204, %v225
    %v228 = vrot.slane %v126, 2
    %v229 = vrot.slane %v127, 2
    %vm230 = vcmp.lt.s32.totalorder %v64, 6
    %v231 = vsel %vm230, %v228, %v229
    %v232 = vsel %vm230, %v229, %v228
    %v233 = vadd.s32 %v88, 2
    %v234 = vadd.s32 %v89, 2
    %vm235 = vcmp.ge.s32.totalorder %v233, 0
    %vm236 = vcmp.ge.s32.totalorder %v234, 0
    %vm237 = vcmp.lt.s32.totalorder %v233, 8
    %vm238 = vcmp.lt.s32.totalorder %v234, 8
    %vm239 = vmand %vm235, %vm237
    %vm240 = vmand %vm236, %vm238
    %v241 = vsel %vm239, %v231, 0.0
    %v242 = vsel %vm240, %v232, 0.0
    %v243 = vlaneseq
    %v244 = vshrl.u32 %v243, 7
    %v245 = vsub.s32 5, %v244
    %v246 = vrot.slane %v45, %v245
    %v247 = vmul.f32 %v241, %v246
    %v248 = vmul.f32 %v242, %v246
    %v249 = vadd.f32 %v226, %v247
    %v250 = vadd.f32 %v227, %v248
    %v251 = vrot.slane %v126, 3
    %v252 = vrot.slane %v127, 3
    %vm253 = vcmp.lt.s32.totalorder %v64, 5
    %v254 = vsel %vm253, %v251, %v252
    %v255 = vsel %vm253, %v252, %v251
    %v256 = vadd.s32 %v88, 3
    %v257 = vadd.s32 %v89, 3
    %vm258 = vcmp.ge.s32.totalorder %v256, 0
    %vm259 = vcmp.ge.s32.totalorder %v257, 0
    %vm260 = vcmp.lt.s32.totalorder %v256, 8
    %vm261 = vcmp.lt.s32.totalorder %v257, 8
    %vm262 = vmand %vm258, %vm260
    %vm263 = vmand %vm259, %vm261
    %v264 = vsel %vm262, %v254, 0.0
    %v265 = vsel %vm263, %v255, 0.0
    %v266 = vlaneseq
    %v267 = vshrl.u32 %v266, 7
    %v268 = vsub.s32 6, %v267
    %v269 = vrot.slane %v45, %v268
    %v270 = vmul.f32 %v264, %v269
    %v271 = vmul.f32 %v265, %v269
    %v272 = vadd.f32 %v249, %v270
    %v273 = vadd.f32 %v250, %v271
    %v275 = vlaneseq
    %v276 = vshrl.u32 %v275, 7
    %v277 = vsub.s32 0, %v276
    %v278 = vrot.slane %v62, %v277
    %280 = vmatprep.subr.mxu0 0.0
    %281 = vmatpush1.msra.mxu0 %v46
    %282 = vmatprep.subr.mxu0 0.0
    %283 = vmatpush1.msra.mxu0 %v47
    %284 = vmatprep.subr.mxu0 0.0
    %285 = vmatpush1.msra.mxu0 %v48
    %286 = vmatprep.subr.mxu0 0.0
    %287 = vmatpush1.msra.mxu0 %v49
    %288 = vmatprep.subr.mxu0 0.0
    %289 = vmatpush1.msra.mxu0 %v50
    %290 = vmatprep.subr.mxu0 0.0
    %291 = vmatpush1.msra.mxu0 %v51
    %292 = vmatprep.subr.mxu0 0.0
    %293 = vmatpush1.msra.mxu0 %v52
    %294 = vmatprep.subr.mxu0 0.0
    %295 = vmatpush1.msra.mxu0 %v53
    %296 = vmatprep.subr.mxu0 0.0
    %297 = vmatpush1.msra.mxu0 %v54
    %298 = vmatprep.subr.mxu0 0.0
    %299 = vmatpush1.msra.mxu0 %v55
    %300 = vmatprep.subr.mxu0 0.0
    %301 = vmatpush1.msra.mxu0 %v56
    %302 = vmatprep.subr.mxu0 0.0
    %303 = vmatpush1.msra.mxu0 %v57
    %304 = vmatprep.subr.mxu0 0.0
    %305 = vmatpush1.msra.mxu0 %v58
    %306 = vmatprep.subr.mxu0 0.0
    %307 = vmatpush1.msra.mxu0 %v59
    %308 = vmatprep.subr.mxu0 0.0
    %309 = vmatpush1.msra.mxu0 %v60
    %310 = vmatprep.subr.mxu0 0.0
    %311 = vmatpush1.msra.mxu0 %v61
    %312 = vmatprep.subr.mxu0 0.0
    %313 = vmatpush1.msra.mxu0 0.0
    %314 = vmatprep.subr.mxu0 0.0
    %315 = vmatpush1.msra.mxu0 0.0
    %316 = vmatprep.subr.mxu0 0.0
    %317 = vmatpush1.msra.mxu0 0.0
    %318 = vmatprep.subr.mxu0 0.0
    %319 = vmatpush1.msra.mxu0 0.0
    %320 = vmatprep.subr.mxu0 0.0
    %321 = vmatpush1.msra.mxu0 0.0
    %322 = vmatprep.subr.mxu0 0.0
    %323 = vmatpush1.msra.mxu0 0.0
    %324 = vmatprep.subr.mxu0 0.0
    %325 = vmatpush1.msra.mxu0 0.0
    %326 = vmatprep.subr.mxu0 0.0
    %327 = vmatpush1.msra.mxu0 0.0
    %328 = vmatprep.subr.mxu0 0.0
    %329 = vmatpush1.msra.mxu0 0.0
    %330 = vmatprep.subr.mxu0 0.0
    %331 = vmatpush1.msra.mxu0 0.0
    %332 = vmatprep.subr.mxu0 0.0
    %333 = vmatpush1.msra.mxu0 0.0
    %334 = vmatprep.subr.mxu0 0.0
    %335 = vmatpush1.msra.mxu0 0.0
    %336 = vmatprep.subr.mxu0 0.0
    %337 = vmatpush1.msra.mxu0 0.0
    %338 = vmatprep.subr.mxu0 0.0
    %339 = vmatpush1.msra.mxu0 0.0
    %340 = vmatprep.subr.mxu0 0.0
    %341 = vmatpush1.msra.mxu0 0.0
    %342 = vmatprep.subr.mxu0 0.0
    %343 = vmatpush1.msra.mxu0 0.0
    %344 = vmatprep.mubr.f32.mxu0 0.0
    %345 = vmatmul.mubr.f32.gmra.mrb[0].mxu0 %v272
    %v346 = vpop.f32.mrb[0].mxu0
    %v347 = vadd.f32 %v278, %v346
    %v348 = vpop.f32.mrb[0].mxu0
    %349 = vmatprep.mubr.f32.mxu0 0.0
    %350 = vmatmul.mubr.f32.gmra.mrb[0].mxu0 %v273
    %v351 = vpop.f32.mrb[0].mxu0
    %v352 = vadd.f32 %v278, %v351
    %v353 = vpop.f32.mrb[0].mxu0
    %354 = vdwg.mxu0
    %v355 = vmax.f32 %v347, 0.0
    %v356 = vmax.f32 %v352, 0.0
    %v357 = vadd.f32 %v355, %v41
    %v358 = vadd.f32 %v356, %v42
    %359 = vadd.xlane.f32.xlu0 %v357
    %v360 = vpop.xlane.xlu0 %359
    %361 = vadd.xlane.f32.xlu0 %v358
    %v362 = vpop.xlane.xlu0 %361
    %v363 = vmul.f32 %v360, 0.03125
    %v364 = vmul.f32 %v362, 0.03125
    %v365 = vmul.f32 %v357, %v357
    %v366 = vmul.f32 %v358, %v358
    %367 = vadd.xlane.f32.xlu0 %v365
    %v368 = vpop.xlane.xlu0 %367
    %369 = vadd.xlane.f32.xlu0 %v366
    %v370 = vpop.xlane.xlu0 %369
    %v371 = vmul.f32 %v368, 0.03125
    %v372 = vmul.f32 %v370, 0.03125
    %v373 = vmul.f32 %v363, %v363
    %v374 = vmul.f32 %v364, %v364
    %v375 = vsub.f32 %v371, %v373
    %v376 = vsub.f32 %v372, %v374
    %v377 = vsub.f32 %v357, %v363
    %v378 = vsub.f32 %v358, %v364
    %v379 = vadd.f32 %v375, 1e-05
    %v380 = vadd.f32 %v376, 1e-05
    %v381 = vrsqrt.pop %v379
    %v382 = vrsqrt.pop %v380
    %v383 = vmul.f32 %v377, %v381
    %v384 = vmul.f32 %v378, %v382
    %v385 = vmul.f32 %v383, %v119
    %v386 = vmul.f32 %v384, %v119
    %v387 = vadd.f32 %v385, %v125
    %v388 = vadd.f32 %v386, %v125
    %v389 = vrot.slane %v387, 5
    %v390 = vrot.slane %v388, 5
    %v391 = vsel %vm130, %v389, %v390
    %v392 = vsel %vm130, %v390, %v389
    %v393 = vsel %vm139, %v392, 0.0
    %v394 = vsel %vm140, %v391, 0.0
    %v395 = vmul.f32 %v393, %v146
    %v396 = vmul.f32 %v394, %v146
    %v397 = vadd.f32 %v395, 0.0
    %v398 = vadd.f32 %v396, 0.0
    %v399 = vrot.slane %v387, 6
    %v400 = vrot.slane %v388, 6
    %v401 = vsel %vm153, %v399, %v400
    %v402 = vsel %vm153, %v400, %v399
    %v403 = vsel %vm162, %v402, 0.0
    %v404 = vsel %vm163, %v401, 0.0
    %v405 = vmul.f32 %v403, %v169
    %v406 = vmul.f32 %v404, %v169
    %v407 = vadd.f32 %v397, %v405
    %v408 = vadd.f32 %v398, %v406
    %v409 = vrot.slane %v387, 7
    %v410 = vrot.slane %v388, 7
    %v411 = vsel %vm176, %v409, %v410
    %v412 = vsel %vm176, %v410, %v409
    %v413 = vsel %vm185, %v412, 0.0
    %v414 = vsel %vm186, %v411, 0.0
    %v415 = vmul.f32 %v413, %v192
    %v416 = vmul.f32 %v414, %v192
    %v417 = vadd.f32 %v407, %v415
    %v418 = vadd.f32 %v408, %v416
    %v419 = vmul.f32 %v387, %v200
    %v420 = vmul.f32 %v388, %v200
    %v421 = vadd.f32 %v417, %v419
    %v422 = vadd.f32 %v418, %v420
    %v423 = vrot.slane %v387, 1
    %v424 = vrot.slane %v388, 1
    %v425 = vsel %vm207, %v423, %v424
    %v426 = vsel %vm207, %v424, %v423
    %v427 = vsel %vm216, %v425, 0.0
    %v428 = vsel %vm217, %v426, 0.0
    %v429 = vmul.f32 %v427, %v223
    %v430 = vmul.f32 %v428, %v223
    %v431 = vadd.f32 %v421, %v429
    %v432 = vadd.f32 %v422, %v430
    %v433 = vrot.slane %v387, 2
    %v434 = vrot.slane %v388, 2
    %v435 = vsel %vm230, %v433, %v434
    %v436 = vsel %vm230, %v434, %v433
    %v437 = vsel %vm239, %v435, 0.0
    %v438 = vsel %vm240, %v436, 0.0
    %v439 = vmul.f32 %v437, %v246
    %v440 = vmul.f32 %v438, %v246
    %v441 = vadd.f32 %v431, %v439
    %v442 = vadd.f32 %v432, %v440
    %v443 = vrot.slane %v387, 3
    %v444 = vrot.slane %v388, 3
    %v445 = vsel %vm253, %v443, %v444
    %v446 = vsel %vm253, %v444, %v443
    %v447 = vsel %vm262, %v445, 0.0
    %v448 = vsel %vm263, %v446, 0.0
    %v449 = vmul.f32 %v447, %v269
    %v450 = vmul.f32 %v448, %v269
    %v451 = vadd.f32 %v441, %v449
    %v452 = vadd.f32 %v442, %v450
    %453 = vmatprep.subr.mxu0 0.0
    %454 = vmatpush1.msra.mxu0 %v46
    %455 = vmatprep.subr.mxu0 0.0
    %456 = vmatpush1.msra.mxu0 %v47
    %457 = vmatprep.subr.mxu0 0.0
    %458 = vmatpush1.msra.mxu0 %v48
    %459 = vmatprep.subr.mxu0 0.0
    %460 = vmatpush1.msra.mxu0 %v49
    %461 = vmatprep.subr.mxu0 0.0
    %462 = vmatpush1.msra.mxu0 %v50
    %463 = vmatprep.subr.mxu0 0.0
    %464 = vmatpush1.msra.mxu0 %v51
    %465 = vmatprep.subr.mxu0 0.0
    %466 = vmatpush1.msra.mxu0 %v52
    %467 = vmatprep.subr.mxu0 0.0
    %468 = vmatpush1.msra.mxu0 %v53
    %469 = vmatprep.subr.mxu0 0.0
    %470 = vmatpush1.msra.mxu0 %v54
    %471 = vmatprep.subr.mxu0 0.0
    %472 = vmatpush1.msra.mxu0 %v55
    %473 = vmatprep.subr.mxu0 0.0
    %474 = vmatpush1.msra.mxu0 %v56
    %475 = vmatprep.subr.mxu0 0.0
    %476 = vmatpush1.msra.mxu0 %v57
    %477 = vmatprep.subr.mxu0 0.0
    %478 = vmatpush1.msra.mxu0 %v58
    %479 = vmatprep.subr.mxu0 0.0
    %480 = vmatpush1.msra.mxu0 %v59
    %481 = vmatprep.subr.mxu0 0.0
    %482 = vmatpush1.msra.mxu0 %v60
    %483 = vmatprep.subr.mxu0 0.0
    %484 = vmatpush1.msra.mxu0 %v61
    %485 = vmatprep.subr.mxu0 0.0
    %486 = vmatpush1.msra.mxu0 0.0
    %487 = vmatprep.subr.mxu0 0.0
    %488 = vmatpush1.msra.mxu0 0.0
    %489 = vmatprep.subr.mxu0 0.0
    %490 = vmatpush1.msra.mxu0 0.0
    %491 = vmatprep.subr.mxu0 0.0
    %492 = vmatpush1.msra.mxu0 0.0
    %493 = vmatprep.subr.mxu0 0.0
    %494 = vmatpush1.msra.mxu0 0.0
    %495 = vmatprep.subr.mxu0 0.0
    %496 = vmatpush1.msra.mxu0 0.0
    %497 = vmatprep.subr.mxu0 0.0
    %498 = vmatpush1.msra.mxu0 0.0
    %499 = vmatprep.subr.mxu0 0.0
    %500 = vmatpush1.msra.mxu0 0.0
    %501 = vmatprep.subr.mxu0 0.0
    %502 = vmatpush1.msra.mxu0 0.0
    %503 = vmatprep.subr.mxu0 0.0
    %504 = vmatpush1.msra.mxu0 0.0
    %505 = vmatprep.subr.mxu0 0.0
    %506 = vmatpush1.msra.mxu0 0.0
    %507 = vmatprep.subr.mxu0 0.0
    %508 = vmatpush1.msra.mxu0 0.0
    %509 = vmatprep.subr.mxu0 0.0
    %510 = vmatpush1.msra.mxu0 0.0
    %511 = vmatprep.subr.mxu0 0.0
    %512 = vmatpush1.msra.mxu0 0.0
    %513 = vmatprep.subr.mxu0 0.0
    %514 = vmatpush1.msra.mxu0 0.0
    %515 = vmatprep.subr.mxu0 0.0
    %516 = vmatpush1.msra.mxu0 0.0
    %517 = vmatprep.mubr.f32.mxu0 0.0
    %518 = vmatmul.mubr.f32.gmra.mrb[0].mxu0 %v451
    %v519 = vpop.f32.mrb[0].mxu0
    %v520 = vadd.f32 %v278, %v519
    %v521 = vpop.f32.mrb[0].mxu0
    %522 = vmatprep.mubr.f32.mxu0 0.0
    %523 = vmatmul.mubr.f32.gmra.mrb[0].mxu0 %v452
    %v524 = vpop.f32.mrb[0].mxu0
    %v525 = vadd.f32 %v278, %v524
    %v526 = vpop.f32.mrb[0].mxu0
    %527 = vdwg.mxu0
    %v528 = vmax.f32 %v520, 0.0
    %v529 = vmax.f32 %v525, 0.0
    %v530 = vadd.f32 %v528, %v357
    %v531 = vadd.f32 %v529, %v358
    %v532 = vld [vmem:[%s3 + $0x2] sm:$0x1]
    %v533 = vld [vmem:[%s3 + $0x3] sm:$0x1]
    %534 = vadd.xlane.f32.xlu0 %v530
    %v535 = vpop.xlane.xlu0 %534
    %536 = vadd.xlane.f32.xlu0 %v531
    %v537 = vpop.xlane.xlu0 %536
    %v538 = vmul.f32 %v535, 0.03125
    %v539 = vmul.f32 %v537, 0.03125
    %v540 = vmul.f32 %v530, %v530
    %v541 = vmul.f32 %v531, %v531
    %542 = vadd.xlane.f32.xlu0 %v540
    %v543 = vpop.xlane.xlu0 %542
    %544 = vadd.xlane.f32.xlu0 %v541
    %v545 = vpop.xlane.xlu0 %544
    %v546 = vmul.f32 %v543, 0.03125
    %v547 = vmul.f32 %v545, 0.03125
    %v548 = vmul.f32 %v538, %v538
    %v549 = vmul.f32 %v539, %v539
    %v550 = vsub.f32 %v546, %v548
    %v551 = vsub.f32 %v547, %v549
    %v552 = vsub.f32 %v530, %v538
    %v553 = vsub.f32 %v531, %v539
    %v554 = vadd.f32 %v550, 1e-05
    %v555 = vadd.f32 %v551, 1e-05
    %v556 = vrsqrt.pop %v554
    %v557 = vrsqrt.pop %v555
    %v558 = vmul.f32 %v552, %v556
    %v559 = vmul.f32 %v553, %v557
    %v560 = vlaneseq
    %v561 = vshrl.u32 %v560, 7
    %v562 = vsub.s32 0, %v561
    %v563 = vrot.slane %v532, %v562
    %v564 = vmul.f32 %v558, %v563
    %v565 = vmul.f32 %v559, %v563
    %v566 = vlaneseq
    %v567 = vshrl.u32 %v566, 7
    %v568 = vsub.s32 0, %v567
    %v569 = vrot.slane %v533, %v568
    %v570 = vadd.f32 %v564, %v569
    %v571 = vadd.f32 %v565, %v569
    %v572 = vld [vmem:[#allocation2] sm:$0xff]
    %v573 = vld [vmem:[#allocation2 + $0x8] sm:$0xff]
    %v574 = vld [vmem:[#allocation2 + $0x10] sm:$0xff]
    %v575 = vld [vmem:[#allocation2 + $0x38] sm:$0xff]
    %v576 = vld [vmem:[#allocation2 + $0x40] sm:$0xff]
    %v577 = vld [vmem:[#allocation2 + $0x48] sm:$0xff]
    %v578 = vld [vmem:[#allocation2 + $0x70] sm:$0xff]
    %v579 = vld [vmem:[#allocation2 + $0x78] sm:$0xff]
    %v580 = vld [vmem:[#allocation2 + $0x80] sm:$0xff]
    %v581 = vld [vmem:[#allocation2 + $0xa8] sm:$0xff]
    %v582 = vld [vmem:[#allocation2 + $0xb0] sm:$0xff]
    %v583 = vld [vmem:[#allocation2 + $0xb8] sm:$0xff]
    %v584 = vld [vmem:[#allocation2 + $0xe0] sm:$0xff]
    %v585 = vld [vmem:[#allocation2 + $0xe8] sm:$0xff]
    %v586 = vld [vmem:[#allocation2 + $0xf0] sm:$0xff]
    %v587 = vld [vmem:[#allocation2 + $0x118] sm:$0xff]
    %v588 = vld [vmem:[#allocation2 + $0x120] sm:$0xff]
    %v589 = vld [vmem:[#allocation2 + $0x128] sm:$0xff]
    %v590 = vld [vmem:[#allocation2 + $0x150] sm:$0xff]
    %v591 = vld [vmem:[#allocation2 + $0x158] sm:$0xff]
    %v592 = vld [vmem:[#allocation2 + $0x160] sm:$0xff]
    %v593 = vld [vmem:[#allocation2 + $0x188] sm:$0xff]
    %v594 = vld [vmem:[#allocation2 + $0x190] sm:$0xff]
    %v595 = vld [vmem:[#allocation2 + $0x198] sm:$0xff]
    %v596 = vld [vmem:[#allocation2 + $0x1c0] sm:$0xff]
    %v597 = vld [vmem:[#allocation2 + $0x1c8] sm:$0xff]
    %v598 = vld [vmem:[#allocation2 + $0x1d0] sm:$0xff]
    %v599 = vld [vmem:[#allocation2 + $0x1f8] sm:$0xff]
    %v600 = vld [vmem:[#allocation2 + $0x200] sm:$0xff]
    %v601 = vld [vmem:[#allocation2 + $0x208] sm:$0xff]
    %v602 = vld [vmem:[#allocation2 + $0x230] sm:$0xff]
    %v603 = vld [vmem:[#allocation2 + $0x238] sm:$0xff]
    %v604 = vld [vmem:[#allocation2 + $0x240] sm:$0xff]
    %v605 = vld [vmem:[#allocation2 + $0x268] sm:$0xff]
    %v606 = vld [vmem:[#allocation2 + $0x270] sm:$0xff]
    %v607 = vld [vmem:[#allocation2 + $0x278] sm:$0xff]
    %v608 = vld [vmem:[#allocation2 + $0x2a0] sm:$0xff]
    %v609 = vld [vmem:[#allocation2 + $0x2a8] sm:$0xff]
    %v610 = vld [vmem:[#allocation2 + $0x2b0] sm:$0xff]
    %v611 = vld [vmem:[#allocation2 + $0x2d8] sm:$0xff]
    %v612 = vld [vmem:[#allocation2 + $0x2e0] sm:$0xff]
    %v613 = vld [vmem:[#allocation2 + $0x2e8] sm:$0xff]
    %v614 = vld [vmem:[#allocation2 + $0x310] sm:$0xff]
    %v615 = vld [vmem:[#allocation2 + $0x318] sm:$0xff]
    %v616 = vld [vmem:[#allocation2 + $0x320] sm:$0xff]
    %v617 = vld [vmem:[#allocation2 + $0x348] sm:$0xff]
    %v618 = vld [vmem:[#allocation2 + $0x350] sm:$0xff]
    %v619 = vld [vmem:[#allocation2 + $0x358] sm:$0xff]
    %v620 = vld [vmem:[%s5] sm:$0x7]
    %v622 = vlaneseq
    %v623 = vshrl.u32 %v622, 7
    %v624 = vsub.s32 0, %v623
    %v625 = vrot.slane %v620, %v624
    %v626 = vlaneseq
    %v627 = vshrl.u32 %v626, 7
    %v628 = vsub.s32 1, %v627
    %v629 = vrot.slane %v620, %v628
    %v630 = vlaneseq
    %v631 = vshrl.u32 %v630, 7
    %v632 = vsub.s32 2, %v631
    %v633 = vrot.slane %v620, %v632
    %637 = vmatprep.subr.mxu0 %v573
    %638 = vmatpush1.msra.mxu0 %v572
    %639 = vmatprep.subr.mxu0 %v576
    %640 = vmatpush1.msra.mxu0 %v575
    %641 = vmatprep.subr.mxu0 %v579
    %642 = vmatpush1.msra.mxu0 %v578
    %643 = vmatprep.subr.mxu0 %v582
    %644 = vmatpush1.msra.mxu0 %v581
    %645 = vmatprep.subr.mxu0 %v585
    %646 = vmatpush1.msra.mxu0 %v584
    %647 = vmatprep.subr.mxu0 %v588
    %648 = vmatpush1.msra.mxu0 %v587
    %649 = vmatprep.subr.mxu0 %v591
    %650 = vmatpush1.msra.mxu0 %v590
    %651 = vmatprep.subr.mxu0 %v594
    %652 = vmatpush1.msra.mxu0 %v593
    %653 = vmatprep.subr.mxu0 %v597
    %654 = vmatpush1.msra.mxu0 %v596
    %655 = vmatprep.subr.mxu0 %v600
    %656 = vmatpush1.msra.mxu0 %v599
    %657 = vmatprep.subr.mxu0 %v603
    %658 = vmatpush1.msra.mxu0 %v602
    %659 = vmatprep.subr.mxu0 %v606
    %660 = vmatpush1.msra.mxu0 %v605
    %661 = vmatprep.subr.mxu0 %v609
    %662 = vmatpush1.msra.mxu0 %v608
    %663 = vmatprep.subr.mxu0 %v612
    %664 = vmatpush1.msra.mxu0 %v611
    %665 = vmatprep.subr.mxu0 %v615
    %666 = vmatpush1.msra.mxu0 %v614
    %667 = vmatprep.subr.mxu0 %v618
    %668 = vmatpush1.msra.mxu0 %v617
    %669 = vmatprep.subr.mxu0 0.0
    %670 = vmatpush1.msra.mxu0 0.0
    %671 = vmatprep.subr.mxu0 0.0
    %672 = vmatpush1.msra.mxu0 0.0
    %673 = vmatprep.subr.mxu0 0.0
    %674 = vmatpush1.msra.mxu0 0.0
    %675 = vmatprep.subr.mxu0 0.0
    %676 = vmatpush1.msra.mxu0 0.0
    %677 = vmatprep.subr.mxu0 0.0
    %678 = vmatpush1.msra.mxu0 0.0
    %679 = vmatprep.subr.mxu0 0.0
    %680 = vmatpush1.msra.mxu0 0.0
    %681 = vmatprep.subr.mxu0 0.0
    %682 = vmatpush1.msra.mxu0 0.0
    %683 = vmatprep.subr.mxu0 0.0
    %684 = vmatpush1.msra.mxu0 0.0
    %685 = vmatprep.subr.mxu0 0.0
    %686 = vmatpush1.msra.mxu0 0.0
    %687 = vmatprep.subr.mxu0 0.0
    %688 = vmatpush1.msra.mxu0 0.0
    %689 = vmatprep.subr.mxu0 0.0
    %690 = vmatpush1.msra.mxu0 0.0
    %691 = vmatprep.subr.mxu0 0.0
    %692 = vmatpush1.msra.mxu0 0.0
    %693 = vmatprep.subr.mxu0 0.0
    %694 = vmatpush1.msra.mxu0 0.0
    %695 = vmatprep.subr.mxu0 0.0
    %696 = vmatpush1.msra.mxu0 0.0
    %697 = vmatprep.subr.mxu0 0.0
    %698 = vmatpush1.msra.mxu0 0.0
    %699 = vmatprep.subr.mxu0 0.0
    %700 = vmatpush1.msra.mxu0 0.0
    %701 = vmatprep.mubr.f32.mxu0 0.0
    %702 = vmatmul.mubr.f32.gmra.mrb[0].mxu0 %v570
    %v703 = vpop.f32.mrb[0].mxu0
    %v704 = vadd.f32 %v625, %v703
    %v705 = vpop.f32.mrb[0].mxu0
    %v706 = vadd.f32 %v629, %v705
    %707 = vmatprep.mubr.f32.mxu0 0.0
    %708 = vmatmul.mubr.f32.gmra.mrb[0].mxu0 %v571
    %v709 = vpop.f32.mrb[0].mxu0
    %v710 = vadd.f32 %v625, %v709
    %v711 = vpop.f32.mrb[0].mxu0
    %v712 = vadd.f32 %v629, %v711
    %713 = vdwg.mxu0
    %714 = vmatprep.subr.mxu0 0.0
    %715 = vmatpush1.msra.mxu0 %v574
    %716 = vmatprep.subr.mxu0 0.0
    %717 = vmatpush1.msra.mxu0 %v577
    %718 = vmatprep.subr.mxu0 0.0
    %719 = vmatpush1.msra.mxu0 %v580
    %720 = vmatprep.subr.mxu0 0.0
    %721 = vmatpush1.msra.mxu0 %v583
    %722 = vmatprep.subr.mxu0 0.0
    %723 = vmatpush1.msra.mxu0 %v586
    %724 = vmatprep.subr.mxu0 0.0
    %725 = vmatpush1.msra.mxu0 %v589
    %726 = vmatprep.subr.mxu0 0.0
    %727 = vmatpush1.msra.mxu0 %v592
    %728 = vmatprep.subr.mxu0 0.0
    %729 = vmatpush1.msra.mxu0 %v595
    %730 = vmatprep.subr.mxu0 0.0
    %731 = vmatpush1.msra.mxu0 %v598
    %732 = vmatprep.subr.mxu0 0.0
    %733 = vmatpush1.msra.mxu0 %v601
    %734 = vmatprep.subr.mxu0 0.0
    %735 = vmatpush1.msra.mxu0 %v604
    %736 = vmatprep.subr.mxu0 0.0
    %737 = vmatpush1.msra.mxu0 %v607
    %738 = vmatprep.subr.mxu0 0.0
    %739 = vmatpush1.msra.mxu0 %v610
    %740 = vmatprep.subr.mxu0 0.0
    %741 = vmatpush1.msra.mxu0 %v613
    %742 = vmatprep.subr.mxu0 0.0
    %743 = vmatpush1.msra.mxu0 %v616
    %744 = vmatprep.subr.mxu0 0.0
    %745 = vmatpush1.msra.mxu0 %v619
    %746 = vmatprep.subr.mxu0 0.0
    %747 = vmatpush1.msra.mxu0 0.0
    %748 = vmatprep.subr.mxu0 0.0
    %749 = vmatpush1.msra.mxu0 0.0
    %750 = vmatprep.subr.mxu0 0.0
    %751 = vmatpush1.msra.mxu0 0.0
    %752 = vmatprep.subr.mxu0 0.0
    %753 = vmatpush1.msra.mxu0 0.0
    %754 = vmatprep.subr.mxu0 0.0
    %755 = vmatpush1.msra.mxu0 0.0
    %756 = vmatprep.subr.mxu0 0.0
    %757 = vmatpush1.msra.mxu0 0.0
    %758 = vmatprep.subr.mxu0 0.0
    %759 = vmatpush1.msra.mxu0 0.0
    %760 = vmatprep.subr.mxu0 0.0
    %761 = vmatpush1.msra.mxu0 0.0
    %762 = vmatprep.subr.mxu0 0.0
    %763 = vmatpush1.msra.mxu0 0.0
    %764 = vmatprep.subr.mxu0 0.0
    %765 = vmatpush1.msra.mxu0 0.0
    %766 = vmatprep.subr.mxu0 0.0
    %767 = vmatpush1.msra.mxu0 0.0
    %768 = vmatprep.subr.mxu0 0.0
    %769 = vmatpush1.msra.mxu0 0.0
    %770 = vmatprep.subr.mxu0 0.0
    %771 = vmatpush1.msra.mxu0 0.0
    %772 = vmatprep.subr.mxu0 0.0
    %773 = vmatpush1.msra.mxu0 0.0
    %774 = vmatprep.subr.mxu0 0.0
    %775 = vmatpush1.msra.mxu0 0.0
    %776 = vmatprep.subr.mxu0 0.0
    %777 = vmatpush1.msra.mxu0 0.0
    %778 = vmatprep.mubr.f32.mxu0 0.0
    %779 = vmatmul.mubr.f32.gmra.mrb[0].mxu0 %v570
    %v780 = vpop.f32.mrb[0].mxu0
    %v781 = vadd.f32 %v633, %v780
    %v782 = vpop.f32.mrb[0].mxu0
    %783 = vmatprep.mubr.f32.mxu0 0.0
    %784 = vmatmul.mubr.f32.gmra.mrb[0].mxu0 %v571
    %v785 = vpop.f32.mrb[0].mxu0
    %v786 = vadd.f32 %v633, %v785
    %v787 = vpop.f32.mrb[0].mxu0
    %788 = vdwg.mxu0
    %v789 = vld [vmem:[%s2] sm:$0xff]
    %v790 = vld [vmem:[%s2 + $0x8] sm:$0xff]
    %v791 = vlaneseq
    %v792 = vand.u32 %v791, 127
    %vm793 = vcmp.ge.s32.totalorder %v792, 0
    %vm794 = vcmp.lt.s32.totalorder %v792, 4
    %vm795 = vmand %vm793, %vm794
    %v796 = vsel %vm795, 1, 0
    %vm797 = vcmp.eq.s32.totalorder %v796, 1
    %v798 = vsel %vm797, %v704, 0.0
    %v799 = vsel %vm797, %v710, 0.0
    %800 = vmatprep.subr.mxu0 0.0
    %801 = vmatpush1.xpose.msra.mxu0 %v706
    %802 = vmatprep.subr.mxu0 0.0
    %803 = vmatpush1.xpose.msra.mxu0 %v712
    %804 = vmatprep.subr.mxu0 0.0
    %805 = vmatpush1.xpose.msra.mxu0 0.0
    %806 = vmatprep.subr.mxu0 0.0
    %807 = vmatpush1.xpose.msra.mxu0 0.0
    %808 = vmatprep.subr.mxu0 0.0
    %809 = vmatpush1.xpose.msra.mxu0 0.0
    %810 = vmatprep.subr.mxu0 0.0
    %811 = vmatpush1.xpose.msra.mxu0 0.0
    %812 = vmatprep.subr.mxu0 0.0
    %813 = vmatpush1.xpose.msra.mxu0 0.0
    %814 = vmatprep.subr.mxu0 0.0
    %815 = vmatpush1.xpose.msra.mxu0 0.0
    %816 = vmatprep.subr.mxu0 0.0
    %817 = vmatpush1.xpose.msra.mxu0 0.0
    %818 = vmatprep.subr.mxu0 0.0
    %819 = vmatpush1.xpose.msra.mxu0 0.0
    %820 = vmatprep.subr.mxu0 0.0
    %821 = vmatpush1.xpose.msra.mxu0 0.0
    %822 = vmatprep.subr.mxu0 0.0
    %823 = vmatpush1.xpose.msra.mxu0 0.0
    %824 = vmatprep.subr.mxu0 0.0
    %825 = vmatpush1.xpose.msra.mxu0 0.0
    %826 = vmatprep.subr.mxu0 0.0
    %827 = vmatpush1.xpose.msra.mxu0 0.0
    %828 = vmatprep.subr.mxu0 0.0
    %829 = vmatpush1.xpose.msra.mxu0 0.0
    %830 = vmatprep.subr.mxu0 0.0
    %831 = vmatpush1.xpose.msra.mxu0 0.0
    %832 = vmatprep.subr.mxu0 0.0
    %833 = vmatpush1.xpose.msra.mxu0 0.0
    %834 = vmatprep.subr.mxu0 0.0
    %835 = vmatpush1.xpose.msra.mxu0 0.0
    %836 = vmatprep.subr.mxu0 0.0
    %837 = vmatpush1.xpose.msra.mxu0 0.0
    %838 = vmatprep.subr.mxu0 0.0
    %839 = vmatpush1.xpose.msra.mxu0 0.0
    %840 = vmatprep.subr.mxu0 0.0
    %841 = vmatpush1.xpose.msra.mxu0 0.0
    %842 = vmatprep.subr.mxu0 0.0
    %843 = vmatpush1.xpose.msra.mxu0 0.0
    %844 = vmatprep.subr.mxu0 0.0
    %845 = vmatpush1.xpose.msra.mxu0 0.0
    %846 = vmatprep.subr.mxu0 0.0
    %847 = vmatpush1.xpose.msra.mxu0 0.0
    %848 = vmatprep.subr.mxu0 0.0
    %849 = vmatpush1.xpose.msra.mxu0 0.0
    %850 = vmatprep.subr.mxu0 0.0
    %851 = vmatpush1.xpose.msra.mxu0 0.0
    %852 = vmatprep.subr.mxu0 0.0
    %853 = vmatpush1.xpose.msra.mxu0 0.0
    %854 = vmatprep.subr.mxu0 0.0
    %855 = vmatpush1.xpose.msra.mxu0 0.0
    %856 = vmatprep.subr.mxu0 0.0
    %857 = vmatpush1.xpose.msra.mxu0 0.0
    %858 = vmatprep.subr.mxu0 0.0
    %859 = vmatpush1.xpose.msra.mxu0 0.0
    %860 = vmatprep.subr.mxu0 0.0
    %861 = vmatpush1.xpose.msra.mxu0 0.0
    %862 = vmatprep.subr.mxu0 0.0
    %863 = vmatpush1.xpose.msra.mxu0 0.0
    %864 = vmatprep.mubr.f32.mxu0 0.0
    %865 = vmatmul.mubr.f32.gmra.mrb[0].mxu0 %v798
    %v866 = vpop.f32.mrb[0].mxu0
    %v867 = vadd.f32 %v789, %v866
    %v868 = vpop.f32.mrb[0].mxu0
    %869 = vmatprep.mubr.f32.mxu0 0.0
    %870 = vmatmul.mubr.f32.gmra.mrb[0].mxu0 %v799
    %v871 = vpop.f32.mrb[0].mxu0
    %v872 = vadd.f32 %v790, %v871
    %v873 = vpop.f32.mrb[0].mxu0
    %874 = vdwg.mxu0
    %vm875 = vcmask 130048
    %v876 = vsel %vm875, %v867, -inf
    %877 = vmax.xlane.f32.xlu0 %v876
    %v878 = vpop.xlane.xlu0 %877
    %v879 = vsel %vm875, %v872, -inf
    %880 = vmax.xlane.f32.xlu0 %v879
    %v881 = vpop.xlane.xlu0 %880
    %v882 = vsub.f32 %v867, %v878
    %v883 = vsub.f32 %v872, %v881
    %v884 = vmul.f32 %v882, 1.442695
    %v885 = vpow.pop %v884
    %v886 = vmul.f32 %v883, 1.442695
    %v887 = vpow.pop %v886
    %v888 = vsel %vm875, %v885, 0.0
    %889 = vadd.xlane.f32.xlu0 %v888
    %v890 = vpop.xlane.xlu0 %889
    %v891 = vsel %vm875, %v887, 0.0
    %892 = vadd.xlane.f32.xlu0 %v891
    %v893 = vpop.xlane.xlu0 %892
    %v894 = vrcp.pop %v890
    %v895 = vrcp.pop %v893
    %v896 = vmul.f32 %v885, %v894
    %v897 = vmul.f32 %v887, %v895
    %v899 = vsel %vm875, %v896, 0
    %v902 = vsel %vm875, %v897, 0
    %904 = vmatprep.subr.mxu0 0.0
    %905 = vmatpush1.msra.mxu0 %v781
    %906 = vmatprep.subr.mxu0 0.0
    %907 = vmatpush1.msra.mxu0 %v786
    %908 = vmatprep.subr.mxu0 0.0
    %909 = vmatpush1.msra.mxu0 0.0
    %910 = vmatprep.subr.mxu0 0.0
    %911 = vmatpush1.msra.mxu0 0.0
    %912 = vmatprep.subr.mxu0 0.0
    %913 = vmatpush1.msra.mxu0 0.0
    %914 = vmatprep.subr.mxu0 0.0
    %915 = vmatpush1.msra.mxu0 0.0
    %916 = vmatprep.subr.mxu0 0.0
    %917 = vmatpush1.msra.mxu0 0.0
    %918 = vmatprep.subr.mxu0 0.0
    %919 = vmatpush1.msra.mxu0 0.0
    %920 = vmatprep.subr.mxu0 0.0
    %921 = vmatpush1.msra.mxu0 0.0
    %922 = vmatprep.subr.mxu0 0.0
    %923 = vmatpush1.msra.mxu0 0.0
    %924 = vmatprep.subr.mxu0 0.0
    %925 = vmatpush1.msra.mxu0 0.0
    %926 = vmatprep.subr.mxu0 0.0
    %927 = vmatpush1.msra.mxu0 0.0
    %928 = vmatprep.subr.mxu0 0.0
    %929 = vmatpush1.msra.mxu0 0.0
    %930 = vmatprep.subr.mxu0 0.0
    %931 = vmatpush1.msra.mxu0 0.0
    %932 = vmatprep.subr.mxu0 0.0
    %933 = vmatpush1.msra.mxu0 0.0
    %934 = vmatprep.subr.mxu0 0.0
    %935 = vmatpush1.msra.mxu0 0.0
    %936 = vmatprep.subr.mxu0 0.0
    %937 = vmatpush1.msra.mxu0 0.0
    %938 = vmatprep.subr.mxu0 0.0
    %939 = vmatpush1.msra.mxu0 0.0
    %940 = vmatprep.subr.mxu0 0.0
    %941 = vmatpush1.msra.mxu0 0.0
    %942 = vmatprep.subr.mxu0 0.0
    %943 = vmatpush1.msra.mxu0 0.0
    %944 = vmatprep.subr.mxu0 0.0
    %945 = vmatpush1.msra.mxu0 0.0
    %946 = vmatprep.subr.mxu0 0.0
    %947 = vmatpush1.msra.mxu0 0.0
    %948 = vmatprep.subr.mxu0 0.0
    %949 = vmatpush1.msra.mxu0 0.0
    %950 = vmatprep.subr.mxu0 0.0
    %951 = vmatpush1.msra.mxu0 0.0
    %952 = vmatprep.subr.mxu0 0.0
    %953 = vmatpush1.msra.mxu0 0.0
    %954 = vmatprep.subr.mxu0 0.0
    %955 = vmatpush1.msra.mxu0 0.0
    %956 = vmatprep.subr.mxu0 0.0
    %957 = vmatpush1.msra.mxu0 0.0
    %958 = vmatprep.subr.mxu0 0.0
    %959 = vmatpush1.msra.mxu0 0.0
    %960 = vmatprep.subr.mxu0 0.0
    %961 = vmatpush1.msra.mxu0 0.0
    %962 = vmatprep.subr.mxu0 0.0
    %963 = vmatpush1.msra.mxu0 0.0
    %964 = vmatprep.subr.mxu0 0.0
    %965 = vmatpush1.msra.mxu0 0.0
    %966 = vmatprep.subr.mxu0 0.0
    %967 = vmatpush1.msra.mxu0 0.0
    %968 = vmatprep.mubr.f32.mxu0 0.0
    %969 = vmatmul.mubr.f32.gmra.mrb[0].mxu0 %v899
    %v970 = vpop.f32.mrb[0].mxu0
    %v971 = vadd.f32 0.0, %v970
    %v972 = vpop.f32.mrb[0].mxu0
    %973 = vmatprep.mubr.f32.mxu0 0.0
    %974 = vmatmul.mubr.f32.gmra.mrb[0].mxu0 %v902
    %v975 = vpop.f32.mrb[0].mxu0
    %v976 = vadd.f32 0.0, %v975
    %v977 = vpop.f32.mrb[0].mxu0
    %978 = vdwg.mxu0
    %v979 = vsel %vm797, %v971, 0.0
    %v980 = vsel %vm797, %v976, 0.0
    %v981 = vadd.f32 %v979, 0.0
    %v982 = vadd.f32 %v980, 0.0
    %vm983 = vcmp.ge.s32.totalorder %v792, 4
    %vm984 = vcmp.lt.s32.totalorder %v792, 8
    %vm985 = vmand %vm983, %vm984
    %v986 = vsel %vm985, 1, 0
    %vm987 = vcmp.eq.s32.totalorder %v986, 1
    %v988 = vsel %vm987, %v704, 0.0
    %v989 = vsel %vm987, %v710, 0.0
    %990 = vmatprep.subr.mxu0 0.0
    %991 = vmatpush1.xpose.msra.mxu0 %v706
    %992 = vmatprep.subr.mxu0 0.0
    %993 = vmatpush1.xpose.msra.mxu0 %v712
    %994 = vmatprep.subr.mxu0 0.0
    %995 = vmatpush1.xpose.msra.mxu0 0.0
    %996 = vmatprep.subr.mxu0 0.0
    %997 = vmatpush1.xpose.msra.mxu0 0.0
    %998 = vmatprep.subr.mxu0 0.0
    %999 = vmatpush1.xpose.msra.mxu0 0.0
    %1000 = vmatprep.subr.mxu0 0.0
    %1001 = vmatpush1.xpose.msra.mxu0 0.0
    %1002 = vmatprep.subr.mxu0 0.0
    %1003 = vmatpush1.xpose.msra.mxu0 0.0
    %1004 = vmatprep.subr.mxu0 0.0
    %1005 = vmatpush1.xpose.msra.mxu0 0.0
    %1006 = vmatprep.subr.mxu0 0.0
    %1007 = vmatpush1.xpose.msra.mxu0 0.0
    %1008 = vmatprep.subr.mxu0 0.0
    %1009 = vmatpush1.xpose.msra.mxu0 0.0
    %1010 = vmatprep.subr.mxu0 0.0
    %1011 = vmatpush1.xpose.msra.mxu0 0.0
    %1012 = vmatprep.subr.mxu0 0.0
    %1013 = vmatpush1.xpose.msra.mxu0 0.0
    %1014 = vmatprep.subr.mxu0 0.0
    %1015 = vmatpush1.xpose.msra.mxu0 0.0
    %1016 = vmatprep.subr.mxu0 0.0
    %1017 = vmatpush1.xpose.msra.mxu0 0.0
    %1018 = vmatprep.subr.mxu0 0.0
    %1019 = vmatpush1.xpose.msra.mxu0 0.0
    %1020 = vmatprep.subr.mxu0 0.0
    %1021 = vmatpush1.xpose.msra.mxu0 0.0
    %1022 = vmatprep.subr.mxu0 0.0
    %1023 = vmatpush1.xpose.msra.mxu0 0.0
    %1024 = vmatprep.subr.mxu0 0.0
    %1025 = vmatpush1.xpose.msra.mxu0 0.0
    %1026 = vmatprep.subr.mxu0 0.0
    %1027 = vmatpush1.xpose.msra.mxu0 0.0
    %1028 = vmatprep.subr.mxu0 0.0
    %1029 = vmatpush1.xpose.msra.mxu0 0.0
    %1030 = vmatprep.subr.mxu0 0.0
    %1031 = vmatpush1.xpose.msra.mxu0 0.0
    %1032 = vmatprep.subr.mxu0 0.0
    %1033 = vmatpush1.xpose.msra.mxu0 0.0
    %1034 = vmatprep.subr.mxu0 0.0
    %1035 = vmatpush1.xpose.msra.mxu0 0.0
    %1036 = vmatprep.subr.mxu0 0.0
    %1037 = vmatpush1.xpose.msra.mxu0 0.0
    %1038 = vmatprep.subr.mxu0 0.0
    %1039 = vmatpush1.xpose.msra.mxu0 0.0
    %1040 = vmatprep.subr.mxu0 0.0
    %1041 = vmatpush1.xpose.msra.mxu0 0.0
    %1042 = vmatprep.subr.mxu0 0.0
    %1043 = vmatpush1.xpose.msra.mxu0 0.0
    %1044 = vmatprep.subr.mxu0 0.0
    %1045 = vmatpush1.xpose.msra.mxu0 0.0
    %1046 = vmatprep.subr.mxu0 0.0
    %1047 = vmatpush1.xpose.msra.mxu0 0.0
    %1048 = vmatprep.subr.mxu0 0.0
    %1049 = vmatpush1.xpose.msra.mxu0 0.0
    %1050 = vmatprep.subr.mxu0 0.0
    %1051 = vmatpush1.xpose.msra.mxu0 0.0
    %1052 = vmatprep.subr.mxu0 0.0
    %1053 = vmatpush1.xpose.msra.mxu0 0.0
    %1054 = vmatprep.mubr.f32.mxu0 0.0
    %1055 = vmatmul.mubr.f32.gmra.mrb[0].mxu0 %v988
    %v1056 = vpop.f32.mrb[0].mxu0
    %v1057 = vadd.f32 %v789, %v1056
    %v1058 = vpop.f32.mrb[0].mxu0
    %1059 = vmatprep.mubr.f32.mxu0 0.0
    %1060 = vmatmul.mubr.f32.gmra.mrb[0].mxu0 %v989
    %v1061 = vpop.f32.mrb[0].mxu0
    %v1062 = vadd.f32 %v790, %v1061
    %v1063 = vpop.f32.mrb[0].mxu0
    %1064 = vdwg.mxu0
    %v1065 = vsel %vm875, %v1057, -inf
    %1066 = vmax.xlane.f32.xlu0 %v1065
    %v1067 = vpop.xlane.xlu0 %1066
    %v1068 = vsel %vm875, %v1062, -inf
    %1069 = vmax.xlane.f32.xlu0 %v1068
    %v1070 = vpop.xlane.xlu0 %1069
    %v1071 = vsub.f32 %v1057, %v1067
    %v1072 = vsub.f32 %v1062, %v1070
    %v1073 = vmul.f32 %v1071, 1.442695
    %v1074 = vpow.pop %v1073
    %v1075 = vmul.f32 %v1072, 1.442695
    %v1076 = vpow.pop %v1075
    %v1077 = vsel %vm875, %v1074, 0.0
    %1078 = vadd.xlane.f32.xlu0 %v1077
    %v1079 = vpop.xlane.xlu0 %1078
    %v1080 = vsel %vm875, %v1076, 0.0
    %1081 = vadd.xlane.f32.xlu0 %v1080
    %v1082 = vpop.xlane.xlu0 %1081
    %v1083 = vrcp.pop %v1079
    %v1084 = vrcp.pop %v1082
    %v1085 = vmul.f32 %v1074, %v1083
    %v1086 = vmul.f32 %v1076, %v1084
    %v1088 = vsel %vm875, %v1085, 0
    %v1091 = vsel %vm875, %v1086, 0
    %1093 = vmatprep.subr.mxu0 0.0
    %1094 = vmatpush1.msra.mxu0 %v781
    %1095 = vmatprep.subr.mxu0 0.0
    %1096 = vmatpush1.msra.mxu0 %v786
    %1097 = vmatprep.subr.mxu0 0.0
    %1098 = vmatpush1.msra.mxu0 0.0
    %1099 = vmatprep.subr.mxu0 0.0
    %1100 = vmatpush1.msra.mxu0 0.0
    %1101 = vmatprep.subr.mxu0 0.0
    %1102 = vmatpush1.msra.mxu0 0.0
    %1103 = vmatprep.subr.mxu0 0.0
    %1104 = vmatpush1.msra.mxu0 0.0
    %1105 = vmatprep.subr.mxu0 0.0
    %1106 = vmatpush1.msra.mxu0 0.0
    %1107 = vmatprep.subr.mxu0 0.0
    %1108 = vmatpush1.msra.mxu0 0.0
    %1109 = vmatprep.subr.mxu0 0.0
    %1110 = vmatpush1.msra.mxu0 0.0
    %1111 = vmatprep.subr.mxu0 0.0
    %1112 = vmatpush1.msra.mxu0 0.0
    %1113 = vmatprep.subr.mxu0 0.0
    %1114 = vmatpush1.msra.mxu0 0.0
    %1115 = vmatprep.subr.mxu0 0.0
    %1116 = vmatpush1.msra.mxu0 0.0
    %1117 = vmatprep.subr.mxu0 0.0
    %1118 = vmatpush1.msra.mxu0 0.0
    %1119 = vmatprep.subr.mxu0 0.0
    %1120 = vmatpush1.msra.mxu0 0.0
    %1121 = vmatprep.subr.mxu0 0.0
    %1122 = vmatpush1.msra.mxu0 0.0
    %1123 = vmatprep.subr.mxu0 0.0
    %1124 = vmatpush1.msra.mxu0 0.0
    %1125 = vmatprep.subr.mxu0 0.0
    %1126 = vmatpush1.msra.mxu0 0.0
    %1127 = vmatprep.subr.mxu0 0.0
    %1128 = vmatpush1.msra.mxu0 0.0
    %1129 = vmatprep.subr.mxu0 0.0
    %1130 = vmatpush1.msra.mxu0 0.0
    %1131 = vmatprep.subr.mxu0 0.0
    %1132 = vmatpush1.msra.mxu0 0.0
    %1133 = vmatprep.subr.mxu0 0.0
    %1134 = vmatpush1.msra.mxu0 0.0
    %1135 = vmatprep.subr.mxu0 0.0
    %1136 = vmatpush1.msra.mxu0 0.0
    %1137 = vmatprep.subr.mxu0 0.0
    %1138 = vmatpush1.msra.mxu0 0.0
    %1139 = vmatprep.subr.mxu0 0.0
    %1140 = vmatpush1.msra.mxu0 0.0
    %1141 = vmatprep.subr.mxu0 0.0
    %1142 = vmatpush1.msra.mxu0 0.0
    %1143 = vmatprep.subr.mxu0 0.0
    %1144 = vmatpush1.msra.mxu0 0.0
    %1145 = vmatprep.subr.mxu0 0.0
    %1146 = vmatpush1.msra.mxu0 0.0
    %1147 = vmatprep.subr.mxu0 0.0
    %1148 = vmatpush1.msra.mxu0 0.0
    %1149 = vmatprep.subr.mxu0 0.0
    %1150 = vmatpush1.msra.mxu0 0.0
    %1151 = vmatprep.subr.mxu0 0.0
    %1152 = vmatpush1.msra.mxu0 0.0
    %1153 = vmatprep.subr.mxu0 0.0
    %1154 = vmatpush1.msra.mxu0 0.0
    %1155 = vmatprep.subr.mxu0 0.0
    %1156 = vmatpush1.msra.mxu0 0.0
    %1157 = vmatprep.mubr.f32.mxu0 0.0
    %1158 = vmatmul.mubr.f32.gmra.mrb[0].mxu0 %v1088
    %v1159 = vpop.f32.mrb[0].mxu0
    %v1160 = vadd.f32 0.0, %v1159
    %v1161 = vpop.f32.mrb[0].mxu0
    %1162 = vmatprep.mubr.f32.mxu0 0.0
    %1163 = vmatmul.mubr.f32.gmra.mrb[0].mxu0 %v1091
    %v1164 = vpop.f32.mrb[0].mxu0
    %v1165 = vadd.f32 0.0, %v1164
    %v1166 = vpop.f32.mrb[0].mxu0
    %1167 = vdwg.mxu0
    %v1168 = vsel %vm987, %v1160, 0.0
    %v1169 = vsel %vm987, %v1165, 0.0
    %v1170 = vadd.f32 %v981, %v1168
    %v1171 = vadd.f32 %v982, %v1169
    %vm1172 = vcmp.ge.s32.totalorder %v792, 8
    %vm1173 = vcmp.lt.s32.totalorder %v792, 12
    %vm1174 = vmand %vm1172, %vm1173
    %v1175 = vsel %vm1174, 1, 0
    %vm1176 = vcmp.eq.s32.totalorder %v1175, 1
    %v1177 = vsel %vm1176, %v704, 0.0
    %v1178 = vsel %vm1176, %v710, 0.0
    %1179 = vmatprep.subr.mxu0 0.0
    %1180 = vmatpush1.xpose.msra.mxu0 %v706
    %1181 = vmatprep.subr.mxu0 0.0
    %1182 = vmatpush1.xpose.msra.mxu0 %v712
    %1183 = vmatprep.subr.mxu0 0.0
    %1184 = vmatpush1.xpose.msra.mxu0 0.0
    %1185 = vmatprep.subr.mxu0 0.0
    %1186 = vmatpush1.xpose.msra.mxu0 0.0
    %1187 = vmatprep.subr.mxu0 0.0
    %1188 = vmatpush1.xpose.msra.mxu0 0.0
    %1189 = vmatprep.subr.mxu0 0.0
    %1190 = vmatpush1.xpose.msra.mxu0 0.0
    %1191 = vmatprep.subr.mxu0 0.0
    %1192 = vmatpush1.xpose.msra.mxu0 0.0
    %1193 = vmatprep.subr.mxu0 0.0
    %1194 = vmatpush1.xpose.msra.mxu0 0.0
    %1195 = vmatprep.subr.mxu0 0.0
    %1196 = vmatpush1.xpose.msra.mxu0 0.0
    %1197 = vmatprep.subr.mxu0 0.0
    %1198 = vmatpush1.xpose.msra.mxu0 0.0
    %1199 = vmatprep.subr.mxu0 0.0
    %1200 = vmatpush1.xpose.msra.mxu0 0.0
    %1201 = vmatprep.subr.mxu0 0.0
    %1202 = vmatpush1.xpose.msra.mxu0 0.0
    %1203 = vmatprep.subr.mxu0 0.0
    %1204 = vmatpush1.xpose.msra.mxu0 0.0
    %1205 = vmatprep.subr.mxu0 0.0
    %1206 = vmatpush1.xpose.msra.mxu0 0.0
    %1207 = vmatprep.subr.mxu0 0.0
    %1208 = vmatpush1.xpose.msra.mxu0 0.0
    %1209 = vmatprep.subr.mxu0 0.0
    %1210 = vmatpush1.xpose.msra.mxu0 0.0
    %1211 = vmatprep.subr.mxu0 0.0
    %1212 = vmatpush1.xpose.msra.mxu0 0.0
    %1213 = vmatprep.subr.mxu0 0.0
    %1214 = vmatpush1.xpose.msra.mxu0 0.0
    %1215 = vmatprep.subr.mxu0 0.0
    %1216 = vmatpush1.xpose.msra.mxu0 0.0
    %1217 = vmatprep.subr.mxu0 0.0
    %1218 = vmatpush1.xpose.msra.mxu0 0.0
    %1219 = vmatprep.subr.mxu0 0.0
    %1220 = vmatpush1.xpose.msra.mxu0 0.0
    %1221 = vmatprep.subr.mxu0 0.0
    %1222 = vmatpush1.xpose.msra.mxu0 0.0
    %1223 = vmatprep.subr.mxu0 0.0
    %1224 = vmatpush1.xpose.msra.mxu0 0.0
    %1225 = vmatprep.subr.mxu0 0.0
    %1226 = vmatpush1.xpose.msra.mxu0 0.0
    %1227 = vmatprep.subr.mxu0 0.0
    %1228 = vmatpush1.xpose.msra.mxu0 0.0
    %1229 = vmatprep.subr.mxu0 0.0
    %1230 = vmatpush1.xpose.msra.mxu0 0.0
    %1231 = vmatprep.subr.mxu0 0.0
    %1232 = vmatpush1.xpose.msra.mxu0 0.0
    %1233 = vmatprep.subr.mxu0 0.0
    %1234 = vmatpush1.xpose.msra.mxu0 0.0
    %1235 = vmatprep.subr.mxu0 0.0
    %1236 = vmatpush1.xpose.msra.mxu0 0.0
    %1237 = vmatprep.subr.mxu0 0.0
    %1238 = vmatpush1.xpose.msra.mxu0 0.0
    %1239 = vmatprep.subr.mxu0 0.0
    %1240 = vmatpush1.xpose.msra.mxu0 0.0
    %1241 = vmatprep.subr.mxu0 0.0
    %1242 = vmatpush1.xpose.msra.mxu0 0.0
    %1243 = vmatprep.mubr.f32.mxu0 0.0
    %1244 = vmatmul.mubr.f32.gmra.mrb[0].mxu0 %v1177
    %v1245 = vpop.f32.mrb[0].mxu0
    %v1246 = vadd.f32 %v789, %v1245
    %v1247 = vpop.f32.mrb[0].mxu0
    %1248 = vmatprep.mubr.f32.mxu0 0.0
    %1249 = vmatmul.mubr.f32.gmra.mrb[0].mxu0 %v1178
    %v1250 = vpop.f32.mrb[0].mxu0
    %v1251 = vadd.f32 %v790, %v1250
    %v1252 = vpop.f32.mrb[0].mxu0
    %1253 = vdwg.mxu0
    %v1254 = vsel %vm875, %v1246, -inf
    %1255 = vmax.xlane.f32.xlu0 %v1254
    %v1256 = vpop.xlane.xlu0 %1255
    %v1257 = vsel %vm875, %v1251, -inf
    %1258 = vmax.xlane.f32.xlu0 %v1257
    %v1259 = vpop.xlane.xlu0 %1258
    %v1260 = vsub.f32 %v1246, %v1256
    %v1261 = vsub.f32 %v1251, %v1259
    %v1262 = vmul.f32 %v1260, 1.442695
    %v1263 = vpow.pop %v1262
    %v1264 = vmul.f32 %v1261, 1.442695
    %v1265 = vpow.pop %v1264
    %v1266 = vsel %vm875, %v1263, 0.0
    %1267 = vadd.xlane.f32.xlu0 %v1266
    %v1268 = vpop.xlane.xlu0 %1267
    %v1269 = vsel %vm875, %v1265, 0.0
    %1270 = vadd.xlane.f32.xlu0 %v1269
    %v1271 = vpop.xlane.xlu0 %1270
    %v1272 = vrcp.pop %v1268
    %v1273 = vrcp.pop %v1271
    %v1274 = vmul.f32 %v1263, %v1272
    %v1275 = vmul.f32 %v1265, %v1273
    %v1277 = vsel %vm875, %v1274, 0
    %v1280 = vsel %vm875, %v1275, 0
    %1282 = vmatprep.subr.mxu0 0.0
    %1283 = vmatpush1.msra.mxu0 %v781
    %1284 = vmatprep.subr.mxu0 0.0
    %1285 = vmatpush1.msra.mxu0 %v786
    %1286 = vmatprep.subr.mxu0 0.0
    %1287 = vmatpush1.msra.mxu0 0.0
    %1288 = vmatprep.subr.mxu0 0.0
    %1289 = vmatpush1.msra.mxu0 0.0
    %1290 = vmatprep.subr.mxu0 0.0
    %1291 = vmatpush1.msra.mxu0 0.0
    %1292 = vmatprep.subr.mxu0 0.0
    %1293 = vmatpush1.msra.mxu0 0.0
    %1294 = vmatprep.subr.mxu0 0.0
    %1295 = vmatpush1.msra.mxu0 0.0
    %1296 = vmatprep.subr.mxu0 0.0
    %1297 = vmatpush1.msra.mxu0 0.0
    %1298 = vmatprep.subr.mxu0 0.0
    %1299 = vmatpush1.msra.mxu0 0.0
    %1300 = vmatprep.subr.mxu0 0.0
    %1301 = vmatpush1.msra.mxu0 0.0
    %1302 = vmatprep.subr.mxu0 0.0
    %1303 = vmatpush1.msra.mxu0 0.0
    %1304 = vmatprep.subr.mxu0 0.0
    %1305 = vmatpush1.msra.mxu0 0.0
    %1306 = vmatprep.subr.mxu0 0.0
    %1307 = vmatpush1.msra.mxu0 0.0
    %1308 = vmatprep.subr.mxu0 0.0
    %1309 = vmatpush1.msra.mxu0 0.0
    %1310 = vmatprep.subr.mxu0 0.0
    %1311 = vmatpush1.msra.mxu0 0.0
    %1312 = vmatprep.subr.mxu0 0.0
    %1313 = vmatpush1.msra.mxu0 0.0
    %1314 = vmatprep.subr.mxu0 0.0
    %1315 = vmatpush1.msra.mxu0 0.0
    %1316 = vmatprep.subr.mxu0 0.0
    %1317 = vmatpush1.msra.mxu0 0.0
    %1318 = vmatprep.subr.mxu0 0.0
    %1319 = vmatpush1.msra.mxu0 0.0
    %1320 = vmatprep.subr.mxu0 0.0
    %1321 = vmatpush1.msra.mxu0 0.0
    %1322 = vmatprep.subr.mxu0 0.0
    %1323 = vmatpush1.msra.mxu0 0.0
    %1324 = vmatprep.subr.mxu0 0.0
    %1325 = vmatpush1.msra.mxu0 0.0
    %1326 = vmatprep.subr.mxu0 0.0
    %1327 = vmatpush1.msra.mxu0 0.0
    %1328 = vmatprep.subr.mxu0 0.0
    %1329 = vmatpush1.msra.mxu0 0.0
    %1330 = vmatprep.subr.mxu0 0.0
    %1331 = vmatpush1.msra.mxu0 0.0
    %1332 = vmatprep.subr.mxu0 0.0
    %1333 = vmatpush1.msra.mxu0 0.0
    %1334 = vmatprep.subr.mxu0 0.0
    %1335 = vmatpush1.msra.mxu0 0.0
    %1336 = vmatprep.subr.mxu0 0.0
    %1337 = vmatpush1.msra.mxu0 0.0
    %1338 = vmatprep.subr.mxu0 0.0
    %1339 = vmatpush1.msra.mxu0 0.0
    %1340 = vmatprep.subr.mxu0 0.0
    %1341 = vmatpush1.msra.mxu0 0.0
    %1342 = vmatprep.subr.mxu0 0.0
    %1343 = vmatpush1.msra.mxu0 0.0
    %1344 = vmatprep.subr.mxu0 0.0
    %1345 = vmatpush1.msra.mxu0 0.0
    %1346 = vmatprep.mubr.f32.mxu0 0.0
    %1347 = vmatmul.mubr.f32.gmra.mrb[0].mxu0 %v1277
    %v1348 = vpop.f32.mrb[0].mxu0
    %v1349 = vadd.f32 0.0, %v1348
    %v1350 = vpop.f32.mrb[0].mxu0
    %1351 = vmatprep.mubr.f32.mxu0 0.0
    %1352 = vmatmul.mubr.f32.gmra.mrb[0].mxu0 %v1280
    %v1353 = vpop.f32.mrb[0].mxu0
    %v1354 = vadd.f32 0.0, %v1353
    %v1355 = vpop.f32.mrb[0].mxu0
    %1356 = vdwg.mxu0
    %v1357 = vsel %vm1176, %v1349, 0.0
    %v1358 = vsel %vm1176, %v1354, 0.0
    %v1359 = vadd.f32 %v1170, %v1357
    %v1360 = vadd.f32 %v1171, %v1358
    %vm1361 = vcmp.ge.s32.totalorder %v792, 12
    %vm1362 = vcmp.lt.s32.totalorder %v792, 16
    %vm1363 = vmand %vm1361, %vm1362
    %v1364 = vsel %vm1363, 1, 0
    %vm1365 = vcmp.eq.s32.totalorder %v1364, 1
    %v1366 = vsel %vm1365, %v704, 0.0
    %v1367 = vsel %vm1365, %v710, 0.0
    %1368 = vmatprep.subr.mxu0 0.0
    %1369 = vmatpush1.xpose.msra.mxu0 %v706
    %1370 = vmatprep.subr.mxu0 0.0
    %1371 = vmatpush1.xpose.msra.mxu0 %v712
    %1372 = vmatprep.subr.mxu0 0.0
    %1373 = vmatpush1.xpose.msra.mxu0 0.0
    %1374 = vmatprep.subr.mxu0 0.0
    %1375 = vmatpush1.xpose.msra.mxu0 0.0
    %1376 = vmatprep.subr.mxu0 0.0
    %1377 = vmatpush1.xpose.msra.mxu0 0.0
    %1378 = vmatprep.subr.mxu0 0.0
    %1379 = vmatpush1.xpose.msra.mxu0 0.0
    %1380 = vmatprep.subr.mxu0 0.0
    %1381 = vmatpush1.xpose.msra.mxu0 0.0
    %1382 = vmatprep.subr.mxu0 0.0
    %1383 = vmatpush1.xpose.msra.mxu0 0.0
    %1384 = vmatprep.subr.mxu0 0.0
    %1385 = vmatpush1.xpose.msra.mxu0 0.0
    %1386 = vmatprep.subr.mxu0 0.0
    %1387 = vmatpush1.xpose.msra.mxu0 0.0
    %1388 = vmatprep.subr.mxu0 0.0
    %1389 = vmatpush1.xpose.msra.mxu0 0.0
    %1390 = vmatprep.subr.mxu0 0.0
    %1391 = vmatpush1.xpose.msra.mxu0 0.0
    %1392 = vmatprep.subr.mxu0 0.0
    %1393 = vmatpush1.xpose.msra.mxu0 0.0
    %1394 = vmatprep.subr.mxu0 0.0
    %1395 = vmatpush1.xpose.msra.mxu0 0.0
    %1396 = vmatprep.subr.mxu0 0.0
    %1397 = vmatpush1.xpose.msra.mxu0 0.0
    %1398 = vmatprep.subr.mxu0 0.0
    %1399 = vmatpush1.xpose.msra.mxu0 0.0
    %1400 = vmatprep.subr.mxu0 0.0
    %1401 = vmatpush1.xpose.msra.mxu0 0.0
    %1402 = vmatprep.subr.mxu0 0.0
    %1403 = vmatpush1.xpose.msra.mxu0 0.0
    %1404 = vmatprep.subr.mxu0 0.0
    %1405 = vmatpush1.xpose.msra.mxu0 0.0
    %1406 = vmatprep.subr.mxu0 0.0
    %1407 = vmatpush1.xpose.msra.mxu0 0.0
    %1408 = vmatprep.subr.mxu0 0.0
    %1409 = vmatpush1.xpose.msra.mxu0 0.0
    %1410 = vmatprep.subr.mxu0 0.0
    %1411 = vmatpush1.xpose.msra.mxu0 0.0
    %1412 = vmatprep.subr.mxu0 0.0
    %1413 = vmatpush1.xpose.msra.mxu0 0.0
    %1414 = vmatprep.subr.mxu0 0.0
    %1415 = vmatpush1.xpose.msra.mxu0 0.0
    %1416 = vmatprep.subr.mxu0 0.0
    %1417 = vmatpush1.xpose.msra.mxu0 0.0
    %1418 = vmatprep.subr.mxu0 0.0
    %1419 = vmatpush1.xpose.msra.mxu0 0.0
    %1420 = vmatprep.subr.mxu0 0.0
    %1421 = vmatpush1.xpose.msra.mxu0 0.0
    %1422 = vmatprep.subr.mxu0 0.0
    %1423 = vmatpush1.xpose.msra.mxu0 0.0
    %1424 = vmatprep.subr.mxu0 0.0
    %1425 = vmatpush1.xpose.msra.mxu0 0.0
    %1426 = vmatprep.subr.mxu0 0.0
    %1427 = vmatpush1.xpose.msra.mxu0 0.0
    %1428 = vmatprep.subr.mxu0 0.0
    %1429 = vmatpush1.xpose.msra.mxu0 0.0
    %1430 = vmatprep.subr.mxu0 0.0
    %1431 = vmatpush1.xpose.msra.mxu0 0.0
    %1432 = vmatprep.mubr.f32.mxu0 0.0
    %1433 = vmatmul.mubr.f32.gmra.mrb[0].mxu0 %v1366
    %v1434 = vpop.f32.mrb[0].mxu0
    %v1435 = vadd.f32 %v789, %v1434
    %v1436 = vpop.f32.mrb[0].mxu0
    %1437 = vmatprep.mubr.f32.mxu0 0.0
    %1438 = vmatmul.mubr.f32.gmra.mrb[0].mxu0 %v1367
    %v1439 = vpop.f32.mrb[0].mxu0
    %v1440 = vadd.f32 %v790, %v1439
    %v1441 = vpop.f32.mrb[0].mxu0
    %1442 = vdwg.mxu0
    %v1443 = vsel %vm875, %v1435, -inf
    %1444 = vmax.xlane.f32.xlu0 %v1443
    %v1445 = vpop.xlane.xlu0 %1444
    %v1446 = vsel %vm875, %v1440, -inf
    %1447 = vmax.xlane.f32.xlu0 %v1446
    %v1448 = vpop.xlane.xlu0 %1447
    %v1449 = vsub.f32 %v1435, %v1445
    %v1450 = vsub.f32 %v1440, %v1448
    %v1451 = vmul.f32 %v1449, 1.442695
    %v1452 = vpow.pop %v1451
    %v1453 = vmul.f32 %v1450, 1.442695
    %v1454 = vpow.pop %v1453
    %v1455 = vsel %vm875, %v1452, 0.0
    %1456 = vadd.xlane.f32.xlu0 %v1455
    %v1457 = vpop.xlane.xlu0 %1456
    %v1458 = vsel %vm875, %v1454, 0.0
    %1459 = vadd.xlane.f32.xlu0 %v1458
    %v1460 = vpop.xlane.xlu0 %1459
    %v1461 = vrcp.pop %v1457
    %v1462 = vrcp.pop %v1460
    %v1463 = vmul.f32 %v1452, %v1461
    %v1464 = vmul.f32 %v1454, %v1462
    %v1466 = vsel %vm875, %v1463, 0
    %v1469 = vsel %vm875, %v1464, 0
    %1471 = vmatprep.subr.mxu0 0.0
    %1472 = vmatpush1.msra.mxu0 %v781
    %1473 = vmatprep.subr.mxu0 0.0
    %1474 = vmatpush1.msra.mxu0 %v786
    %1475 = vmatprep.subr.mxu0 0.0
    %1476 = vmatpush1.msra.mxu0 0.0
    %1477 = vmatprep.subr.mxu0 0.0
    %1478 = vmatpush1.msra.mxu0 0.0
    %1479 = vmatprep.subr.mxu0 0.0
    %1480 = vmatpush1.msra.mxu0 0.0
    %1481 = vmatprep.subr.mxu0 0.0
    %1482 = vmatpush1.msra.mxu0 0.0
    %1483 = vmatprep.subr.mxu0 0.0
    %1484 = vmatpush1.msra.mxu0 0.0
    %1485 = vmatprep.subr.mxu0 0.0
    %1486 = vmatpush1.msra.mxu0 0.0
    %1487 = vmatprep.subr.mxu0 0.0
    %1488 = vmatpush1.msra.mxu0 0.0
    %1489 = vmatprep.subr.mxu0 0.0
    %1490 = vmatpush1.msra.mxu0 0.0
    %1491 = vmatprep.subr.mxu0 0.0
    %1492 = vmatpush1.msra.mxu0 0.0
    %1493 = vmatprep.subr.mxu0 0.0
    %1494 = vmatpush1.msra.mxu0 0.0
    %1495 = vmatprep.subr.mxu0 0.0
    %1496 = vmatpush1.msra.mxu0 0.0
    %1497 = vmatprep.subr.mxu0 0.0
    %1498 = vmatpush1.msra.mxu0 0.0
    %1499 = vmatprep.subr.mxu0 0.0
    %1500 = vmatpush1.msra.mxu0 0.0
    %1501 = vmatprep.subr.mxu0 0.0
    %1502 = vmatpush1.msra.mxu0 0.0
    %1503 = vmatprep.subr.mxu0 0.0
    %1504 = vmatpush1.msra.mxu0 0.0
    %1505 = vmatprep.subr.mxu0 0.0
    %1506 = vmatpush1.msra.mxu0 0.0
    %1507 = vmatprep.subr.mxu0 0.0
    %1508 = vmatpush1.msra.mxu0 0.0
    %1509 = vmatprep.subr.mxu0 0.0
    %1510 = vmatpush1.msra.mxu0 0.0
    %1511 = vmatprep.subr.mxu0 0.0
    %1512 = vmatpush1.msra.mxu0 0.0
    %1513 = vmatprep.subr.mxu0 0.0
    %1514 = vmatpush1.msra.mxu0 0.0
    %1515 = vmatprep.subr.mxu0 0.0
    %1516 = vmatpush1.msra.mxu0 0.0
    %1517 = vmatprep.subr.mxu0 0.0
    %1518 = vmatpush1.msra.mxu0 0.0
    %1519 = vmatprep.subr.mxu0 0.0
    %1520 = vmatpush1.msra.mxu0 0.0
    %1521 = vmatprep.subr.mxu0 0.0
    %1522 = vmatpush1.msra.mxu0 0.0
    %1523 = vmatprep.subr.mxu0 0.0
    %1524 = vmatpush1.msra.mxu0 0.0
    %1525 = vmatprep.subr.mxu0 0.0
    %1526 = vmatpush1.msra.mxu0 0.0
    %1527 = vmatprep.subr.mxu0 0.0
    %1528 = vmatpush1.msra.mxu0 0.0
    %1529 = vmatprep.subr.mxu0 0.0
    %1530 = vmatpush1.msra.mxu0 0.0
    %1531 = vmatprep.subr.mxu0 0.0
    %1532 = vmatpush1.msra.mxu0 0.0
    %1533 = vmatprep.subr.mxu0 0.0
    %1534 = vmatpush1.msra.mxu0 0.0
    %1535 = vmatprep.mubr.f32.mxu0 0.0
    %1536 = vmatmul.mubr.f32.gmra.mrb[0].mxu0 %v1466
    %v1537 = vpop.f32.mrb[0].mxu0
    %v1538 = vadd.f32 0.0, %v1537
    %v1539 = vpop.f32.mrb[0].mxu0
    %1540 = vmatprep.mubr.f32.mxu0 0.0
    %1541 = vmatmul.mubr.f32.gmra.mrb[0].mxu0 %v1469
    %v1542 = vpop.f32.mrb[0].mxu0
    %v1543 = vadd.f32 0.0, %v1542
    %v1544 = vpop.f32.mrb[0].mxu0
    %1545 = vdwg.mxu0
    %v1546 = vsel %vm1365, %v1538, 0.0
    %v1547 = vsel %vm1365, %v1543, 0.0
    %v1548 = vadd.f32 %v1359, %v1546
    %v1549 = vadd.f32 %v1360, %v1547
    %vm1550 = vcmp.ge.s32.totalorder %v792, 16
    %vm1551 = vcmp.lt.s32.totalorder %v792, 20
    %vm1552 = vmand %vm1550, %vm1551
    %v1553 = vsel %vm1552, 1, 0
    %vm1554 = vcmp.eq.s32.totalorder %v1553, 1
    %v1555 = vsel %vm1554, %v704, 0.0
    %v1556 = vsel %vm1554, %v710, 0.0
    %1557 = vmatprep.subr.mxu0 0.0
    %1558 = vmatpush1.xpose.msra.mxu0 %v706
    %1559 = vmatprep.subr.mxu0 0.0
    %1560 = vmatpush1.xpose.msra.mxu0 %v712
    %1561 = vmatprep.subr.mxu0 0.0
    %1562 = vmatpush1.xpose.msra.mxu0 0.0
    %1563 = vmatprep.subr.mxu0 0.0
    %1564 = vmatpush1.xpose.msra.mxu0 0.0
    %1565 = vmatprep.subr.mxu0 0.0
    %1566 = vmatpush1.xpose.msra.mxu0 0.0
    %1567 = vmatprep.subr.mxu0 0.0
    %1568 = vmatpush1.xpose.msra.mxu0 0.0
    %1569 = vmatprep.subr.mxu0 0.0
    %1570 = vmatpush1.xpose.msra.mxu0 0.0
    %1571 = vmatprep.subr.mxu0 0.0
    %1572 = vmatpush1.xpose.msra.mxu0 0.0
    %1573 = vmatprep.subr.mxu0 0.0
    %1574 = vmatpush1.xpose.msra.mxu0 0.0
    %1575 = vmatprep.subr.mxu0 0.0
    %1576 = vmatpush1.xpose.msra.mxu0 0.0
    %1577 = vmatprep.subr.mxu0 0.0
    %1578 = vmatpush1.xpose.msra.mxu0 0.0
    %1579 = vmatprep.subr.mxu0 0.0
    %1580 = vmatpush1.xpose.msra.mxu0 0.0
    %1581 = vmatprep.subr.mxu0 0.0
    %1582 = vmatpush1.xpose.msra.mxu0 0.0
    %1583 = vmatprep.subr.mxu0 0.0
    %1584 = vmatpush1.xpose.msra.mxu0 0.0
    %1585 = vmatprep.subr.mxu0 0.0
    %1586 = vmatpush1.xpose.msra.mxu0 0.0
    %1587 = vmatprep.subr.mxu0 0.0
    %1588 = vmatpush1.xpose.msra.mxu0 0.0
    %1589 = vmatprep.subr.mxu0 0.0
    %1590 = vmatpush1.xpose.msra.mxu0 0.0
    %1591 = vmatprep.subr.mxu0 0.0
    %1592 = vmatpush1.xpose.msra.mxu0 0.0
    %1593 = vmatprep.subr.mxu0 0.0
    %1594 = vmatpush1.xpose.msra.mxu0 0.0
    %1595 = vmatprep.subr.mxu0 0.0
    %1596 = vmatpush1.xpose.msra.mxu0 0.0
    %1597 = vmatprep.subr.mxu0 0.0
    %1598 = vmatpush1.xpose.msra.mxu0 0.0
    %1599 = vmatprep.subr.mxu0 0.0
    %1600 = vmatpush1.xpose.msra.mxu0 0.0
    %1601 = vmatprep.subr.mxu0 0.0
    %1602 = vmatpush1.xpose.msra.mxu0 0.0
    %1603 = vmatprep.subr.mxu0 0.0
    %1604 = vmatpush1.xpose.msra.mxu0 0.0
    %1605 = vmatprep.subr.mxu0 0.0
    %1606 = vmatpush1.xpose.msra.mxu0 0.0
    %1607 = vmatprep.subr.mxu0 0.0
    %1608 = vmatpush1.xpose.msra.mxu0 0.0
    %1609 = vmatprep.subr.mxu0 0.0
    %1610 = vmatpush1.xpose.msra.mxu0 0.0
    %1611 = vmatprep.subr.mxu0 0.0
    %1612 = vmatpush1.xpose.msra.mxu0 0.0
    %1613 = vmatprep.subr.mxu0 0.0
    %1614 = vmatpush1.xpose.msra.mxu0 0.0
    %1615 = vmatprep.subr.mxu0 0.0
    %1616 = vmatpush1.xpose.msra.mxu0 0.0
    %1617 = vmatprep.subr.mxu0 0.0
    %1618 = vmatpush1.xpose.msra.mxu0 0.0
    %1619 = vmatprep.subr.mxu0 0.0
    %1620 = vmatpush1.xpose.msra.mxu0 0.0
    %1621 = vmatprep.mubr.f32.mxu0 0.0
    %1622 = vmatmul.mubr.f32.gmra.mrb[0].mxu0 %v1555
    %v1623 = vpop.f32.mrb[0].mxu0
    %v1624 = vadd.f32 %v789, %v1623
    %v1625 = vpop.f32.mrb[0].mxu0
    %1626 = vmatprep.mubr.f32.mxu0 0.0
    %1627 = vmatmul.mubr.f32.gmra.mrb[0].mxu0 %v1556
    %v1628 = vpop.f32.mrb[0].mxu0
    %v1629 = vadd.f32 %v790, %v1628
    %v1630 = vpop.f32.mrb[0].mxu0
    %1631 = vdwg.mxu0
    %v1632 = vsel %vm875, %v1624, -inf
    %1633 = vmax.xlane.f32.xlu0 %v1632
    %v1634 = vpop.xlane.xlu0 %1633
    %v1635 = vsel %vm875, %v1629, -inf
    %1636 = vmax.xlane.f32.xlu0 %v1635
    %v1637 = vpop.xlane.xlu0 %1636
    %v1638 = vsub.f32 %v1624, %v1634
    %v1639 = vsub.f32 %v1629, %v1637
    %v1640 = vmul.f32 %v1638, 1.442695
    %v1641 = vpow.pop %v1640
    %v1642 = vmul.f32 %v1639, 1.442695
    %v1643 = vpow.pop %v1642
    %v1644 = vsel %vm875, %v1641, 0.0
    %1645 = vadd.xlane.f32.xlu0 %v1644
    %v1646 = vpop.xlane.xlu0 %1645
    %v1647 = vsel %vm875, %v1643, 0.0
    %1648 = vadd.xlane.f32.xlu0 %v1647
    %v1649 = vpop.xlane.xlu0 %1648
    %v1650 = vrcp.pop %v1646
    %v1651 = vrcp.pop %v1649
    %v1652 = vmul.f32 %v1641, %v1650
    %v1653 = vmul.f32 %v1643, %v1651
    %v1655 = vsel %vm875, %v1652, 0
    %v1658 = vsel %vm875, %v1653, 0
    %1660 = vmatprep.subr.mxu0 0.0
    %1661 = vmatpush1.msra.mxu0 %v781
    %1662 = vmatprep.subr.mxu0 0.0
    %1663 = vmatpush1.msra.mxu0 %v786
    %1664 = vmatprep.subr.mxu0 0.0
    %1665 = vmatpush1.msra.mxu0 0.0
    %1666 = vmatprep.subr.mxu0 0.0
    %1667 = vmatpush1.msra.mxu0 0.0
    %1668 = vmatprep.subr.mxu0 0.0
    %1669 = vmatpush1.msra.mxu0 0.0
    %1670 = vmatprep.subr.mxu0 0.0
    %1671 = vmatpush1.msra.mxu0 0.0
    %1672 = vmatprep.subr.mxu0 0.0
    %1673 = vmatpush1.msra.mxu0 0.0
    %1674 = vmatprep.subr.mxu0 0.0
    %1675 = vmatpush1.msra.mxu0 0.0
    %1676 = vmatprep.subr.mxu0 0.0
    %1677 = vmatpush1.msra.mxu0 0.0
    %1678 = vmatprep.subr.mxu0 0.0
    %1679 = vmatpush1.msra.mxu0 0.0
    %1680 = vmatprep.subr.mxu0 0.0
    %1681 = vmatpush1.msra.mxu0 0.0
    %1682 = vmatprep.subr.mxu0 0.0
    %1683 = vmatpush1.msra.mxu0 0.0
    %1684 = vmatprep.subr.mxu0 0.0
    %1685 = vmatpush1.msra.mxu0 0.0
    %1686 = vmatprep.subr.mxu0 0.0
    %1687 = vmatpush1.msra.mxu0 0.0
    %1688 = vmatprep.subr.mxu0 0.0
    %1689 = vmatpush1.msra.mxu0 0.0
    %1690 = vmatprep.subr.mxu0 0.0
    %1691 = vmatpush1.msra.mxu0 0.0
    %1692 = vmatprep.subr.mxu0 0.0
    %1693 = vmatpush1.msra.mxu0 0.0
    %1694 = vmatprep.subr.mxu0 0.0
    %1695 = vmatpush1.msra.mxu0 0.0
    %1696 = vmatprep.subr.mxu0 0.0
    %1697 = vmatpush1.msra.mxu0 0.0
    %1698 = vmatprep.subr.mxu0 0.0
    %1699 = vmatpush1.msra.mxu0 0.0
    %1700 = vmatprep.subr.mxu0 0.0
    %1701 = vmatpush1.msra.mxu0 0.0
    %1702 = vmatprep.subr.mxu0 0.0
    %1703 = vmatpush1.msra.mxu0 0.0
    %1704 = vmatprep.subr.mxu0 0.0
    %1705 = vmatpush1.msra.mxu0 0.0
    %1706 = vmatprep.subr.mxu0 0.0
    %1707 = vmatpush1.msra.mxu0 0.0
    %1708 = vmatprep.subr.mxu0 0.0
    %1709 = vmatpush1.msra.mxu0 0.0
    %1710 = vmatprep.subr.mxu0 0.0
    %1711 = vmatpush1.msra.mxu0 0.0
    %1712 = vmatprep.subr.mxu0 0.0
    %1713 = vmatpush1.msra.mxu0 0.0
    %1714 = vmatprep.subr.mxu0 0.0
    %1715 = vmatpush1.msra.mxu0 0.0
    %1716 = vmatprep.subr.mxu0 0.0
    %1717 = vmatpush1.msra.mxu0 0.0
    %1718 = vmatprep.subr.mxu0 0.0
    %1719 = vmatpush1.msra.mxu0 0.0
    %1720 = vmatprep.subr.mxu0 0.0
    %1721 = vmatpush1.msra.mxu0 0.0
    %1722 = vmatprep.subr.mxu0 0.0
    %1723 = vmatpush1.msra.mxu0 0.0
    %1724 = vmatprep.mubr.f32.mxu0 0.0
    %1725 = vmatmul.mubr.f32.gmra.mrb[0].mxu0 %v1655
    %v1726 = vpop.f32.mrb[0].mxu0
    %v1727 = vadd.f32 0.0, %v1726
    %v1728 = vpop.f32.mrb[0].mxu0
    %1729 = vmatprep.mubr.f32.mxu0 0.0
    %1730 = vmatmul.mubr.f32.gmra.mrb[0].mxu0 %v1658
    %v1731 = vpop.f32.mrb[0].mxu0
    %v1732 = vadd.f32 0.0, %v1731
    %v1733 = vpop.f32.mrb[0].mxu0
    %1734 = vdwg.mxu0
    %v1735 = vsel %vm1554, %v1727, 0.0
    %v1736 = vsel %vm1554, %v1732, 0.0
    %v1737 = vadd.f32 %v1548, %v1735
    %v1738 = vadd.f32 %v1549, %v1736
    %vm1739 = vcmp.ge.s32.totalorder %v792, 20
    %vm1740 = vcmp.lt.s32.totalorder %v792, 24
    %vm1741 = vmand %vm1739, %vm1740
    %v1742 = vsel %vm1741, 1, 0
    %vm1743 = vcmp.eq.s32.totalorder %v1742, 1
    %v1744 = vsel %vm1743, %v704, 0.0
    %v1745 = vsel %vm1743, %v710, 0.0
    %1746 = vmatprep.subr.mxu0 0.0
    %1747 = vmatpush1.xpose.msra.mxu0 %v706
    %1748 = vmatprep.subr.mxu0 0.0
    %1749 = vmatpush1.xpose.msra.mxu0 %v712
    %1750 = vmatprep.subr.mxu0 0.0
    %1751 = vmatpush1.xpose.msra.mxu0 0.0
    %1752 = vmatprep.subr.mxu0 0.0
    %1753 = vmatpush1.xpose.msra.mxu0 0.0
    %1754 = vmatprep.subr.mxu0 0.0
    %1755 = vmatpush1.xpose.msra.mxu0 0.0
    %1756 = vmatprep.subr.mxu0 0.0
    %1757 = vmatpush1.xpose.msra.mxu0 0.0
    %1758 = vmatprep.subr.mxu0 0.0
    %1759 = vmatpush1.xpose.msra.mxu0 0.0
    %1760 = vmatprep.subr.mxu0 0.0
    %1761 = vmatpush1.xpose.msra.mxu0 0.0
    %1762 = vmatprep.subr.mxu0 0.0
    %1763 = vmatpush1.xpose.msra.mxu0 0.0
    %1764 = vmatprep.subr.mxu0 0.0
    %1765 = vmatpush1.xpose.msra.mxu0 0.0
    %1766 = vmatprep.subr.mxu0 0.0
    %1767 = vmatpush1.xpose.msra.mxu0 0.0
    %1768 = vmatprep.subr.mxu0 0.0
    %1769 = vmatpush1.xpose.msra.mxu0 0.0
    %1770 = vmatprep.subr.mxu0 0.0
    %1771 = vmatpush1.xpose.msra.mxu0 0.0
    %1772 = vmatprep.subr.mxu0 0.0
    %1773 = vmatpush1.xpose.msra.mxu0 0.0
    %1774 = vmatprep.subr.mxu0 0.0
    %1775 = vmatpush1.xpose.msra.mxu0 0.0
    %1776 = vmatprep.subr.mxu0 0.0
    %1777 = vmatpush1.xpose.msra.mxu0 0.0
    %1778 = vmatprep.subr.mxu0 0.0
    %1779 = vmatpush1.xpose.msra.mxu0 0.0
    %1780 = vmatprep.subr.mxu0 0.0
    %1781 = vmatpush1.xpose.msra.mxu0 0.0
    %1782 = vmatprep.subr.mxu0 0.0
    %1783 = vmatpush1.xpose.msra.mxu0 0.0
    %1784 = vmatprep.subr.mxu0 0.0
    %1785 = vmatpush1.xpose.msra.mxu0 0.0
    %1786 = vmatprep.subr.mxu0 0.0
    %1787 = vmatpush1.xpose.msra.mxu0 0.0
    %1788 = vmatprep.subr.mxu0 0.0
    %1789 = vmatpush1.xpose.msra.mxu0 0.0
    %1790 = vmatprep.subr.mxu0 0.0
    %1791 = vmatpush1.xpose.msra.mxu0 0.0
    %1792 = vmatprep.subr.mxu0 0.0
    %1793 = vmatpush1.xpose.msra.mxu0 0.0
    %1794 = vmatprep.subr.mxu0 0.0
    %1795 = vmatpush1.xpose.msra.mxu0 0.0
    %1796 = vmatprep.subr.mxu0 0.0
    %1797 = vmatpush1.xpose.msra.mxu0 0.0
    %1798 = vmatprep.subr.mxu0 0.0
    %1799 = vmatpush1.xpose.msra.mxu0 0.0
    %1800 = vmatprep.subr.mxu0 0.0
    %1801 = vmatpush1.xpose.msra.mxu0 0.0
    %1802 = vmatprep.subr.mxu0 0.0
    %1803 = vmatpush1.xpose.msra.mxu0 0.0
    %1804 = vmatprep.subr.mxu0 0.0
    %1805 = vmatpush1.xpose.msra.mxu0 0.0
    %1806 = vmatprep.subr.mxu0 0.0
    %1807 = vmatpush1.xpose.msra.mxu0 0.0
    %1808 = vmatprep.subr.mxu0 0.0
    %1809 = vmatpush1.xpose.msra.mxu0 0.0
    %1810 = vmatprep.mubr.f32.mxu0 0.0
    %1811 = vmatmul.mubr.f32.gmra.mrb[0].mxu0 %v1744
    %v1812 = vpop.f32.mrb[0].mxu0
    %v1813 = vadd.f32 %v789, %v1812
    %v1814 = vpop.f32.mrb[0].mxu0
    %1815 = vmatprep.mubr.f32.mxu0 0.0
    %1816 = vmatmul.mubr.f32.gmra.mrb[0].mxu0 %v1745
    %v1817 = vpop.f32.mrb[0].mxu0
    %v1818 = vadd.f32 %v790, %v1817
    %v1819 = vpop.f32.mrb[0].mxu0
    %1820 = vdwg.mxu0
    %v1821 = vsel %vm875, %v1813, -inf
    %1822 = vmax.xlane.f32.xlu0 %v1821
    %v1823 = vpop.xlane.xlu0 %1822
    %v1824 = vsel %vm875, %v1818, -inf
    %1825 = vmax.xlane.f32.xlu0 %v1824
    %v1826 = vpop.xlane.xlu0 %1825
    %v1827 = vsub.f32 %v1813, %v1823
    %v1828 = vsub.f32 %v1818, %v1826
    %v1829 = vmul.f32 %v1827, 1.442695
    %v1830 = vpow.pop %v1829
    %v1831 = vmul.f32 %v1828, 1.442695
    %v1832 = vpow.pop %v1831
    %v1833 = vsel %vm875, %v1830, 0.0
    %1834 = vadd.xlane.f32.xlu0 %v1833
    %v1835 = vpop.xlane.xlu0 %1834
    %v1836 = vsel %vm875, %v1832, 0.0
    %1837 = vadd.xlane.f32.xlu0 %v1836
    %v1838 = vpop.xlane.xlu0 %1837
    %v1839 = vrcp.pop %v1835
    %v1840 = vrcp.pop %v1838
    %v1841 = vmul.f32 %v1830, %v1839
    %v1842 = vmul.f32 %v1832, %v1840
    %v1844 = vsel %vm875, %v1841, 0
    %v1847 = vsel %vm875, %v1842, 0
    %1849 = vmatprep.subr.mxu0 0.0
    %1850 = vmatpush1.msra.mxu0 %v781
    %1851 = vmatprep.subr.mxu0 0.0
    %1852 = vmatpush1.msra.mxu0 %v786
    %1853 = vmatprep.subr.mxu0 0.0
    %1854 = vmatpush1.msra.mxu0 0.0
    %1855 = vmatprep.subr.mxu0 0.0
    %1856 = vmatpush1.msra.mxu0 0.0
    %1857 = vmatprep.subr.mxu0 0.0
    %1858 = vmatpush1.msra.mxu0 0.0
    %1859 = vmatprep.subr.mxu0 0.0
    %1860 = vmatpush1.msra.mxu0 0.0
    %1861 = vmatprep.subr.mxu0 0.0
    %1862 = vmatpush1.msra.mxu0 0.0
    %1863 = vmatprep.subr.mxu0 0.0
    %1864 = vmatpush1.msra.mxu0 0.0
    %1865 = vmatprep.subr.mxu0 0.0
    %1866 = vmatpush1.msra.mxu0 0.0
    %1867 = vmatprep.subr.mxu0 0.0
    %1868 = vmatpush1.msra.mxu0 0.0
    %1869 = vmatprep.subr.mxu0 0.0
    %1870 = vmatpush1.msra.mxu0 0.0
    %1871 = vmatprep.subr.mxu0 0.0
    %1872 = vmatpush1.msra.mxu0 0.0
    %1873 = vmatprep.subr.mxu0 0.0
    %1874 = vmatpush1.msra.mxu0 0.0
    %1875 = vmatprep.subr.mxu0 0.0
    %1876 = vmatpush1.msra.mxu0 0.0
    %1877 = vmatprep.subr.mxu0 0.0
    %1878 = vmatpush1.msra.mxu0 0.0
    %1879 = vmatprep.subr.mxu0 0.0
    %1880 = vmatpush1.msra.mxu0 0.0
    %1881 = vmatprep.subr.mxu0 0.0
    %1882 = vmatpush1.msra.mxu0 0.0
    %1883 = vmatprep.subr.mxu0 0.0
    %1884 = vmatpush1.msra.mxu0 0.0
    %1885 = vmatprep.subr.mxu0 0.0
    %1886 = vmatpush1.msra.mxu0 0.0
    %1887 = vmatprep.subr.mxu0 0.0
    %1888 = vmatpush1.msra.mxu0 0.0
    %1889 = vmatprep.subr.mxu0 0.0
    %1890 = vmatpush1.msra.mxu0 0.0
    %1891 = vmatprep.subr.mxu0 0.0
    %1892 = vmatpush1.msra.mxu0 0.0
    %1893 = vmatprep.subr.mxu0 0.0
    %1894 = vmatpush1.msra.mxu0 0.0
    %1895 = vmatprep.subr.mxu0 0.0
    %1896 = vmatpush1.msra.mxu0 0.0
    %1897 = vmatprep.subr.mxu0 0.0
    %1898 = vmatpush1.msra.mxu0 0.0
    %1899 = vmatprep.subr.mxu0 0.0
    %1900 = vmatpush1.msra.mxu0 0.0
    %1901 = vmatprep.subr.mxu0 0.0
    %1902 = vmatpush1.msra.mxu0 0.0
    %1903 = vmatprep.subr.mxu0 0.0
    %1904 = vmatpush1.msra.mxu0 0.0
    %1905 = vmatprep.subr.mxu0 0.0
    %1906 = vmatpush1.msra.mxu0 0.0
    %1907 = vmatprep.subr.mxu0 0.0
    %1908 = vmatpush1.msra.mxu0 0.0
    %1909 = vmatprep.subr.mxu0 0.0
    %1910 = vmatpush1.msra.mxu0 0.0
    %1911 = vmatprep.subr.mxu0 0.0
    %1912 = vmatpush1.msra.mxu0 0.0
    %1913 = vmatprep.mubr.f32.mxu0 0.0
    %1914 = vmatmul.mubr.f32.gmra.mrb[0].mxu0 %v1844
    %v1915 = vpop.f32.mrb[0].mxu0
    %v1916 = vadd.f32 0.0, %v1915
    %v1917 = vpop.f32.mrb[0].mxu0
    %1918 = vmatprep.mubr.f32.mxu0 0.0
    %1919 = vmatmul.mubr.f32.gmra.mrb[0].mxu0 %v1847
    %v1920 = vpop.f32.mrb[0].mxu0
    %v1921 = vadd.f32 0.0, %v1920
    %v1922 = vpop.f32.mrb[0].mxu0
    %1923 = vdwg.mxu0
    %v1924 = vsel %vm1743, %v1916, 0.0
    %v1925 = vsel %vm1743, %v1921, 0.0
    %v1926 = vadd.f32 %v1737, %v1924
    %v1927 = vadd.f32 %v1738, %v1925
    %vm1928 = vcmp.ge.s32.totalorder %v792, 24
    %vm1929 = vcmp.lt.s32.totalorder %v792, 28
    %vm1930 = vmand %vm1928, %vm1929
    %v1931 = vsel %vm1930, 1, 0
    %vm1932 = vcmp.eq.s32.totalorder %v1931, 1
    %v1933 = vsel %vm1932, %v704, 0.0
    %v1934 = vsel %vm1932, %v710, 0.0
    %1935 = vmatprep.subr.mxu0 0.0
    %1936 = vmatpush1.xpose.msra.mxu0 %v706
    %1937 = vmatprep.subr.mxu0 0.0
    %1938 = vmatpush1.xpose.msra.mxu0 %v712
    %1939 = vmatprep.subr.mxu0 0.0
    %1940 = vmatpush1.xpose.msra.mxu0 0.0
    %1941 = vmatprep.subr.mxu0 0.0
    %1942 = vmatpush1.xpose.msra.mxu0 0.0
    %1943 = vmatprep.subr.mxu0 0.0
    %1944 = vmatpush1.xpose.msra.mxu0 0.0
    %1945 = vmatprep.subr.mxu0 0.0
    %1946 = vmatpush1.xpose.msra.mxu0 0.0
    %1947 = vmatprep.subr.mxu0 0.0
    %1948 = vmatpush1.xpose.msra.mxu0 0.0
    %1949 = vmatprep.subr.mxu0 0.0
    %1950 = vmatpush1.xpose.msra.mxu0 0.0
    %1951 = vmatprep.subr.mxu0 0.0
    %1952 = vmatpush1.xpose.msra.mxu0 0.0
    %1953 = vmatprep.subr.mxu0 0.0
    %1954 = vmatpush1.xpose.msra.mxu0 0.0
    %1955 = vmatprep.subr.mxu0 0.0
    %1956 = vmatpush1.xpose.msra.mxu0 0.0
    %1957 = vmatprep.subr.mxu0 0.0
    %1958 = vmatpush1.xpose.msra.mxu0 0.0
    %1959 = vmatprep.subr.mxu0 0.0
    %1960 = vmatpush1.xpose.msra.mxu0 0.0
    %1961 = vmatprep.subr.mxu0 0.0
    %1962 = vmatpush1.xpose.msra.mxu0 0.0
    %1963 = vmatprep.subr.mxu0 0.0
    %1964 = vmatpush1.xpose.msra.mxu0 0.0
    %1965 = vmatprep.subr.mxu0 0.0
    %1966 = vmatpush1.xpose.msra.mxu0 0.0
    %1967 = vmatprep.subr.mxu0 0.0
    %1968 = vmatpush1.xpose.msra.mxu0 0.0
    %1969 = vmatprep.subr.mxu0 0.0
    %1970 = vmatpush1.xpose.msra.mxu0 0.0
    %1971 = vmatprep.subr.mxu0 0.0
    %1972 = vmatpush1.xpose.msra.mxu0 0.0
    %1973 = vmatprep.subr.mxu0 0.0
    %1974 = vmatpush1.xpose.msra.mxu0 0.0
    %1975 = vmatprep.subr.mxu0 0.0
    %1976 = vmatpush1.xpose.msra.mxu0 0.0
    %1977 = vmatprep.subr.mxu0 0.0
    %1978 = vmatpush1.xpose.msra.mxu0 0.0
    %1979 = vmatprep.subr.mxu0 0.0
    %1980 = vmatpush1.xpose.msra.mxu0 0.0
    %1981 = vmatprep.subr.mxu0 0.0
    %1982 = vmatpush1.xpose.msra.mxu0 0.0
    %1983 = vmatprep.subr.mxu0 0.0
    %1984 = vmatpush1.xpose.msra.mxu0 0.0
    %1985 = vmatprep.subr.mxu0 0.0
    %1986 = vmatpush1.xpose.msra.mxu0 0.0
    %1987 = vmatprep.subr.mxu0 0.0
    %1988 = vmatpush1.xpose.msra.mxu0 0.0
    %1989 = vmatprep.subr.mxu0 0.0
    %1990 = vmatpush1.xpose.msra.mxu0 0.0
    %1991 = vmatprep.subr.mxu0 0.0
    %1992 = vmatpush1.xpose.msra.mxu0 0.0
    %1993 = vmatprep.subr.mxu0 0.0
    %1994 = vmatpush1.xpose.msra.mxu0 0.0
    %1995 = vmatprep.subr.mxu0 0.0
    %1996 = vmatpush1.xpose.msra.mxu0 0.0
    %1997 = vmatprep.subr.mxu0 0.0
    %1998 = vmatpush1.xpose.msra.mxu0 0.0
    %1999 = vmatprep.mubr.f32.mxu0 0.0
    %2000 = vmatmul.mubr.f32.gmra.mrb[0].mxu0 %v1933
    %v2001 = vpop.f32.mrb[0].mxu0
    %v2002 = vadd.f32 %v789, %v2001
    %v2003 = vpop.f32.mrb[0].mxu0
    %2004 = vmatprep.mubr.f32.mxu0 0.0
    %2005 = vmatmul.mubr.f32.gmra.mrb[0].mxu0 %v1934
    %v2006 = vpop.f32.mrb[0].mxu0
    %v2007 = vadd.f32 %v790, %v2006
    %v2008 = vpop.f32.mrb[0].mxu0
    %2009 = vdwg.mxu0
    %v2010 = vsel %vm875, %v2002, -inf
    %2011 = vmax.xlane.f32.xlu0 %v2010
    %v2012 = vpop.xlane.xlu0 %2011
    %v2013 = vsel %vm875, %v2007, -inf
    %2014 = vmax.xlane.f32.xlu0 %v2013
    %v2015 = vpop.xlane.xlu0 %2014
    %v2016 = vsub.f32 %v2002, %v2012
    %v2017 = vsub.f32 %v2007, %v2015
    %v2018 = vmul.f32 %v2016, 1.442695
    %v2019 = vpow.pop %v2018
    %v2020 = vmul.f32 %v2017, 1.442695
    %v2021 = vpow.pop %v2020
    %v2022 = vsel %vm875, %v2019, 0.0
    %2023 = vadd.xlane.f32.xlu0 %v2022
    %v2024 = vpop.xlane.xlu0 %2023
    %v2025 = vsel %vm875, %v2021, 0.0
    %2026 = vadd.xlane.f32.xlu0 %v2025
    %v2027 = vpop.xlane.xlu0 %2026
    %v2028 = vrcp.pop %v2024
    %v2029 = vrcp.pop %v2027
    %v2030 = vmul.f32 %v2019, %v2028
    %v2031 = vmul.f32 %v2021, %v2029
    %v2033 = vsel %vm875, %v2030, 0
    %v2036 = vsel %vm875, %v2031, 0
    %2038 = vmatprep.subr.mxu0 0.0
    %2039 = vmatpush1.msra.mxu0 %v781
    %2040 = vmatprep.subr.mxu0 0.0
    %2041 = vmatpush1.msra.mxu0 %v786
    %2042 = vmatprep.subr.mxu0 0.0
    %2043 = vmatpush1.msra.mxu0 0.0
    %2044 = vmatprep.subr.mxu0 0.0
    %2045 = vmatpush1.msra.mxu0 0.0
    %2046 = vmatprep.subr.mxu0 0.0
    %2047 = vmatpush1.msra.mxu0 0.0
    %2048 = vmatprep.subr.mxu0 0.0
    %2049 = vmatpush1.msra.mxu0 0.0
    %2050 = vmatprep.subr.mxu0 0.0
    %2051 = vmatpush1.msra.mxu0 0.0
    %2052 = vmatprep.subr.mxu0 0.0
    %2053 = vmatpush1.msra.mxu0 0.0
    %2054 = vmatprep.subr.mxu0 0.0
    %2055 = vmatpush1.msra.mxu0 0.0
    %2056 = vmatprep.subr.mxu0 0.0
    %2057 = vmatpush1.msra.mxu0 0.0
    %2058 = vmatprep.subr.mxu0 0.0
    %2059 = vmatpush1.msra.mxu0 0.0
    %2060 = vmatprep.subr.mxu0 0.0
    %2061 = vmatpush1.msra.mxu0 0.0
    %2062 = vmatprep.subr.mxu0 0.0
    %2063 = vmatpush1.msra.mxu0 0.0
    %2064 = vmatprep.subr.mxu0 0.0
    %2065 = vmatpush1.msra.mxu0 0.0
    %2066 = vmatprep.subr.mxu0 0.0
    %2067 = vmatpush1.msra.mxu0 0.0
    %2068 = vmatprep.subr.mxu0 0.0
    %2069 = vmatpush1.msra.mxu0 0.0
    %2070 = vmatprep.subr.mxu0 0.0
    %2071 = vmatpush1.msra.mxu0 0.0
    %2072 = vmatprep.subr.mxu0 0.0
    %2073 = vmatpush1.msra.mxu0 0.0
    %2074 = vmatprep.subr.mxu0 0.0
    %2075 = vmatpush1.msra.mxu0 0.0
    %2076 = vmatprep.subr.mxu0 0.0
    %2077 = vmatpush1.msra.mxu0 0.0
    %2078 = vmatprep.subr.mxu0 0.0
    %2079 = vmatpush1.msra.mxu0 0.0
    %2080 = vmatprep.subr.mxu0 0.0
    %2081 = vmatpush1.msra.mxu0 0.0
    %2082 = vmatprep.subr.mxu0 0.0
    %2083 = vmatpush1.msra.mxu0 0.0
    %2084 = vmatprep.subr.mxu0 0.0
    %2085 = vmatpush1.msra.mxu0 0.0
    %2086 = vmatprep.subr.mxu0 0.0
    %2087 = vmatpush1.msra.mxu0 0.0
    %2088 = vmatprep.subr.mxu0 0.0
    %2089 = vmatpush1.msra.mxu0 0.0
    %2090 = vmatprep.subr.mxu0 0.0
    %2091 = vmatpush1.msra.mxu0 0.0
    %2092 = vmatprep.subr.mxu0 0.0
    %2093 = vmatpush1.msra.mxu0 0.0
    %2094 = vmatprep.subr.mxu0 0.0
    %2095 = vmatpush1.msra.mxu0 0.0
    %2096 = vmatprep.subr.mxu0 0.0
    %2097 = vmatpush1.msra.mxu0 0.0
    %2098 = vmatprep.subr.mxu0 0.0
    %2099 = vmatpush1.msra.mxu0 0.0
    %2100 = vmatprep.subr.mxu0 0.0
    %2101 = vmatpush1.msra.mxu0 0.0
    %2102 = vmatprep.mubr.f32.mxu0 0.0
    %2103 = vmatmul.mubr.f32.gmra.mrb[0].mxu0 %v2033
    %v2104 = vpop.f32.mrb[0].mxu0
    %v2105 = vadd.f32 0.0, %v2104
    %v2106 = vpop.f32.mrb[0].mxu0
    %2107 = vmatprep.mubr.f32.mxu0 0.0
    %2108 = vmatmul.mubr.f32.gmra.mrb[0].mxu0 %v2036
    %v2109 = vpop.f32.mrb[0].mxu0
    %v2110 = vadd.f32 0.0, %v2109
    %v2111 = vpop.f32.mrb[0].mxu0
    %2112 = vdwg.mxu0
    %v2113 = vsel %vm1932, %v2105, 0.0
    %v2114 = vsel %vm1932, %v2110, 0.0
    %v2115 = vadd.f32 %v1926, %v2113
    %v2116 = vadd.f32 %v1927, %v2114
    %vm2117 = vcmp.ge.s32.totalorder %v792, 28
    %vm2118 = vcmp.lt.s32.totalorder %v792, 32
    %vm2119 = vmand %vm2117, %vm2118
    %v2120 = vsel %vm2119, 1, 0
    %vm2121 = vcmp.eq.s32.totalorder %v2120, 1
    %v2122 = vsel %vm2121, %v704, 0.0
    %v2123 = vsel %vm2121, %v710, 0.0
    %2124 = vmatprep.subr.mxu0 0.0
    %2125 = vmatpush1.xpose.msra.mxu0 %v706
    %2126 = vmatprep.subr.mxu0 0.0
    %2127 = vmatpush1.xpose.msra.mxu0 %v712
    %2128 = vmatprep.subr.mxu0 0.0
    %2129 = vmatpush1.xpose.msra.mxu0 0.0
    %2130 = vmatprep.subr.mxu0 0.0
    %2131 = vmatpush1.xpose.msra.mxu0 0.0
    %2132 = vmatprep.subr.mxu0 0.0
    %2133 = vmatpush1.xpose.msra.mxu0 0.0
    %2134 = vmatprep.subr.mxu0 0.0
    %2135 = vmatpush1.xpose.msra.mxu0 0.0
    %2136 = vmatprep.subr.mxu0 0.0
    %2137 = vmatpush1.xpose.msra.mxu0 0.0
    %2138 = vmatprep.subr.mxu0 0.0
    %2139 = vmatpush1.xpose.msra.mxu0 0.0
    %2140 = vmatprep.subr.mxu0 0.0
    %2141 = vmatpush1.xpose.msra.mxu0 0.0
    %2142 = vmatprep.subr.mxu0 0.0
    %2143 = vmatpush1.xpose.msra.mxu0 0.0
    %2144 = vmatprep.subr.mxu0 0.0
    %2145 = vmatpush1.xpose.msra.mxu0 0.0
    %2146 = vmatprep.subr.mxu0 0.0
    %2147 = vmatpush1.xpose.msra.mxu0 0.0
    %2148 = vmatprep.subr.mxu0 0.0
    %2149 = vmatpush1.xpose.msra.mxu0 0.0
    %2150 = vmatprep.subr.mxu0 0.0
    %2151 = vmatpush1.xpose.msra.mxu0 0.0
    %2152 = vmatprep.subr.mxu0 0.0
    %2153 = vmatpush1.xpose.msra.mxu0 0.0
    %2154 = vmatprep.subr.mxu0 0.0
    %2155 = vmatpush1.xpose.msra.mxu0 0.0
    %2156 = vmatprep.subr.mxu0 0.0
    %2157 = vmatpush1.xpose.msra.mxu0 0.0
    %2158 = vmatprep.subr.mxu0 0.0
    %2159 = vmatpush1.xpose.msra.mxu0 0.0
    %2160 = vmatprep.subr.mxu0 0.0
    %2161 = vmatpush1.xpose.msra.mxu0 0.0
    %2162 = vmatprep.subr.mxu0 0.0
    %2163 = vmatpush1.xpose.msra.mxu0 0.0
    %2164 = vmatprep.subr.mxu0 0.0
    %2165 = vmatpush1.xpose.msra.mxu0 0.0
    %2166 = vmatprep.subr.mxu0 0.0
    %2167 = vmatpush1.xpose.msra.mxu0 0.0
    %2168 = vmatprep.subr.mxu0 0.0
    %2169 = vmatpush1.xpose.msra.mxu0 0.0
    %2170 = vmatprep.subr.mxu0 0.0
    %2171 = vmatpush1.xpose.msra.mxu0 0.0
    %2172 = vmatprep.subr.mxu0 0.0
    %2173 = vmatpush1.xpose.msra.mxu0 0.0
    %2174 = vmatprep.subr.mxu0 0.0
    %2175 = vmatpush1.xpose.msra.mxu0 0.0
    %2176 = vmatprep.subr.mxu0 0.0
    %2177 = vmatpush1.xpose.msra.mxu0 0.0
    %2178 = vmatprep.subr.mxu0 0.0
    %2179 = vmatpush1.xpose.msra.mxu0 0.0
    %2180 = vmatprep.subr.mxu0 0.0
    %2181 = vmatpush1.xpose.msra.mxu0 0.0
    %2182 = vmatprep.subr.mxu0 0.0
    %2183 = vmatpush1.xpose.msra.mxu0 0.0
    %2184 = vmatprep.subr.mxu0 0.0
    %2185 = vmatpush1.xpose.msra.mxu0 0.0
    %2186 = vmatprep.subr.mxu0 0.0
    %2187 = vmatpush1.xpose.msra.mxu0 0.0
    %2188 = vmatprep.mubr.f32.mxu0 0.0
    %2189 = vmatmul.mubr.f32.gmra.mrb[0].mxu0 %v2122
    %v2190 = vpop.f32.mrb[0].mxu0
    %v2191 = vadd.f32 %v789, %v2190
    %v2192 = vpop.f32.mrb[0].mxu0
    %2193 = vmatprep.mubr.f32.mxu0 0.0
    %2194 = vmatmul.mubr.f32.gmra.mrb[0].mxu0 %v2123
    %v2195 = vpop.f32.mrb[0].mxu0
    %v2196 = vadd.f32 %v790, %v2195
    %v2197 = vpop.f32.mrb[0].mxu0
    %2198 = vdwg.mxu0
    %v2199 = vsel %vm875, %v2191, -inf
    %2200 = vmax.xlane.f32.xlu0 %v2199
    %v2201 = vpop.xlane.xlu0 %2200
    %v2202 = vsel %vm875, %v2196, -inf
    %2203 = vmax.xlane.f32.xlu0 %v2202
    %v2204 = vpop.xlane.xlu0 %2203
    %v2205 = vsub.f32 %v2191, %v2201
    %v2206 = vsub.f32 %v2196, %v2204
    %v2207 = vmul.f32 %v2205, 1.442695
    %v2208 = vpow.pop %v2207
    %v2209 = vmul.f32 %v2206, 1.442695
    %v2210 = vpow.pop %v2209
    %v2211 = vsel %vm875, %v2208, 0.0
    %2212 = vadd.xlane.f32.xlu0 %v2211
    %v2213 = vpop.xlane.xlu0 %2212
    %v2214 = vsel %vm875, %v2210, 0.0
    %2215 = vadd.xlane.f32.xlu0 %v2214
    %v2216 = vpop.xlane.xlu0 %2215
    %v2217 = vrcp.pop %v2213
    %v2218 = vrcp.pop %v2216
    %v2219 = vmul.f32 %v2208, %v2217
    %v2220 = vmul.f32 %v2210, %v2218
    %v2222 = vsel %vm875, %v2219, 0
    %v2225 = vsel %vm875, %v2220, 0
    %2227 = vmatprep.subr.mxu0 0.0
    %2228 = vmatpush1.msra.mxu0 %v781
    %2229 = vmatprep.subr.mxu0 0.0
    %2230 = vmatpush1.msra.mxu0 %v786
    %2231 = vmatprep.subr.mxu0 0.0
    %2232 = vmatpush1.msra.mxu0 0.0
    %2233 = vmatprep.subr.mxu0 0.0
    %2234 = vmatpush1.msra.mxu0 0.0
    %2235 = vmatprep.subr.mxu0 0.0
    %2236 = vmatpush1.msra.mxu0 0.0
    %2237 = vmatprep.subr.mxu0 0.0
    %2238 = vmatpush1.msra.mxu0 0.0
    %2239 = vmatprep.subr.mxu0 0.0
    %2240 = vmatpush1.msra.mxu0 0.0
    %2241 = vmatprep.subr.mxu0 0.0
    %2242 = vmatpush1.msra.mxu0 0.0
    %2243 = vmatprep.subr.mxu0 0.0
    %2244 = vmatpush1.msra.mxu0 0.0
    %2245 = vmatprep.subr.mxu0 0.0
    %2246 = vmatpush1.msra.mxu0 0.0
    %2247 = vmatprep.subr.mxu0 0.0
    %2248 = vmatpush1.msra.mxu0 0.0
    %2249 = vmatprep.subr.mxu0 0.0
    %2250 = vmatpush1.msra.mxu0 0.0
    %2251 = vmatprep.subr.mxu0 0.0
    %2252 = vmatpush1.msra.mxu0 0.0
    %2253 = vmatprep.subr.mxu0 0.0
    %2254 = vmatpush1.msra.mxu0 0.0
    %2255 = vmatprep.subr.mxu0 0.0
    %2256 = vmatpush1.msra.mxu0 0.0
    %2257 = vmatprep.subr.mxu0 0.0
    %2258 = vmatpush1.msra.mxu0 0.0
    %2259 = vmatprep.subr.mxu0 0.0
    %2260 = vmatpush1.msra.mxu0 0.0
    %2261 = vmatprep.subr.mxu0 0.0
    %2262 = vmatpush1.msra.mxu0 0.0
    %2263 = vmatprep.subr.mxu0 0.0
    %2264 = vmatpush1.msra.mxu0 0.0
    %2265 = vmatprep.subr.mxu0 0.0
    %2266 = vmatpush1.msra.mxu0 0.0
    %2267 = vmatprep.subr.mxu0 0.0
    %2268 = vmatpush1.msra.mxu0 0.0
    %2269 = vmatprep.subr.mxu0 0.0
    %2270 = vmatpush1.msra.mxu0 0.0
    %2271 = vmatprep.subr.mxu0 0.0
    %2272 = vmatpush1.msra.mxu0 0.0
    %2273 = vmatprep.subr.mxu0 0.0
    %2274 = vmatpush1.msra.mxu0 0.0
    %2275 = vmatprep.subr.mxu0 0.0
    %2276 = vmatpush1.msra.mxu0 0.0
    %2277 = vmatprep.subr.mxu0 0.0
    %2278 = vmatpush1.msra.mxu0 0.0
    %2279 = vmatprep.subr.mxu0 0.0
    %2280 = vmatpush1.msra.mxu0 0.0
    %2281 = vmatprep.subr.mxu0 0.0
    %2282 = vmatpush1.msra.mxu0 0.0
    %2283 = vmatprep.subr.mxu0 0.0
    %2284 = vmatpush1.msra.mxu0 0.0
    %2285 = vmatprep.subr.mxu0 0.0
    %2286 = vmatpush1.msra.mxu0 0.0
    %2287 = vmatprep.subr.mxu0 0.0
    %2288 = vmatpush1.msra.mxu0 0.0
    %2289 = vmatprep.subr.mxu0 0.0
    %2290 = vmatpush1.msra.mxu0 0.0
    %2291 = vmatprep.mubr.f32.mxu0 0.0
    %2292 = vmatmul.mubr.f32.gmra.mrb[0].mxu0 %v2222
    %v2293 = vpop.f32.mrb[0].mxu0
    %v2294 = vadd.f32 0.0, %v2293
    %v2295 = vpop.f32.mrb[0].mxu0
    %2296 = vmatprep.mubr.f32.mxu0 0.0
    %2297 = vmatmul.mubr.f32.gmra.mrb[0].mxu0 %v2225
    %v2298 = vpop.f32.mrb[0].mxu0
    %v2299 = vadd.f32 0.0, %v2298
    %v2300 = vpop.f32.mrb[0].mxu0
    %2301 = vdwg.mxu0
    %v2302 = vsel %vm2121, %v2294, 0.0
    %v2303 = vsel %vm2121, %v2299, 0.0
    %v2304 = vadd.f32 %v2115, %v2302
    %v2305 = vadd.f32 %v2116, %v2303
    %v2306 = vld [vmem:[#allocation2 + $0x20] sm:$0xff]
    %v2307 = vld [vmem:[#allocation2 + $0x58] sm:$0xff]
    %v2308 = vld [vmem:[#allocation2 + $0x90] sm:$0xff]
    %v2309 = vld [vmem:[#allocation2 + $0xc8] sm:$0xff]
    %v2310 = vld [vmem:[#allocation2 + $0x100] sm:$0xff]
    %v2311 = vld [vmem:[#allocation2 + $0x138] sm:$0xff]
    %v2312 = vld [vmem:[#allocation2 + $0x170] sm:$0xff]
    %v2313 = vld [vmem:[#allocation2 + $0x1a8] sm:$0xff]
    %v2314 = vld [vmem:[#allocation2 + $0x1e0] sm:$0xff]
    %v2315 = vld [vmem:[#allocation2 + $0x218] sm:$0xff]
    %v2316 = vld [vmem:[#allocation2 + $0x250] sm:$0xff]
    %v2317 = vld [vmem:[#allocation2 + $0x288] sm:$0xff]
    %v2318 = vld [vmem:[#allocation2 + $0x2c0] sm:$0xff]
    %v2319 = vld [vmem:[#allocation2 + $0x2f8] sm:$0xff]
    %v2320 = vld [vmem:[#allocation2 + $0x330] sm:$0xff]
    %v2321 = vld [vmem:[#allocation2 + $0x368] sm:$0xff]
    %v2322 = vld [vmem:[%s5 + $0x4] sm:$0x1]
    %v2324 = vlaneseq
    %v2325 = vshrl.u32 %v2324, 7
    %v2326 = vsub.s32 0, %v2325
    %v2327 = vrot.slane %v2322, %v2326
    %2329 = vmatprep.subr.mxu0 0.0
    %2330 = vmatpush1.msra.mxu0 %v2306
    %2331 = vmatprep.subr.mxu0 0.0
    %2332 = vmatpush1.msra.mxu0 %v2307
    %2333 = vmatprep.subr.mxu0 0.0
    %2334 = vmatpush1.msra.mxu0 %v2308
    %2335 = vmatprep.subr.mxu0 0.0
    %2336 = vmatpush1.msra.mxu0 %v2309
    %2337 = vmatprep.subr.mxu0 0.0
    %2338 = vmatpush1.msra.mxu0 %v2310
    %2339 = vmatprep.subr.mxu0 0.0
    %2340 = vmatpush1.msra.mxu0 %v2311
    %2341 = vmatprep.subr.mxu0 0.0
    %2342 = vmatpush1.msra.mxu0 %v2312
    %2343 = vmatprep.subr.mxu0 0.0
    %2344 = vmatpush1.msra.mxu0 %v2313
    %2345 = vmatprep.subr.mxu0 0.0
    %2346 = vmatpush1.msra.mxu0 %v2314
    %2347 = vmatprep.subr.mxu0 0.0
    %2348 = vmatpush1.msra.mxu0 %v2315
    %2349 = vmatprep.subr.mxu0 0.0
    %2350 = vmatpush1.msra.mxu0 %v2316
    %2351 = vmatprep.subr.mxu0 0.0
    %2352 = vmatpush1.msra.mxu0 %v2317
    %2353 = vmatprep.subr.mxu0 0.0
    %2354 = vmatpush1.msra.mxu0 %v2318
    %2355 = vmatprep.subr.mxu0 0.0
    %2356 = vmatpush1.msra.mxu0 %v2319
    %2357 = vmatprep.subr.mxu0 0.0
    %2358 = vmatpush1.msra.mxu0 %v2320
    %2359 = vmatprep.subr.mxu0 0.0
    %2360 = vmatpush1.msra.mxu0 %v2321
    %2361 = vmatprep.subr.mxu0 0.0
    %2362 = vmatpush1.msra.mxu0 0.0
    %2363 = vmatprep.subr.mxu0 0.0
    %2364 = vmatpush1.msra.mxu0 0.0
    %2365 = vmatprep.subr.mxu0 0.0
    %2366 = vmatpush1.msra.mxu0 0.0
    %2367 = vmatprep.subr.mxu0 0.0
    %2368 = vmatpush1.msra.mxu0 0.0
    %2369 = vmatprep.subr.mxu0 0.0
    %2370 = vmatpush1.msra.mxu0 0.0
    %2371 = vmatprep.subr.mxu0 0.0
    %2372 = vmatpush1.msra.mxu0 0.0
    %2373 = vmatprep.subr.mxu0 0.0
    %2374 = vmatpush1.msra.mxu0 0.0
    %2375 = vmatprep.subr.mxu0 0.0
    %2376 = vmatpush1.msra.mxu0 0.0
    %2377 = vmatprep.subr.mxu0 0.0
    %2378 = vmatpush1.msra.mxu0 0.0
    %2379 = vmatprep.subr.mxu0 0.0
    %2380 = vmatpush1.msra.mxu0 0.0
    %2381 = vmatprep.subr.mxu0 0.0
    %2382 = vmatpush1.msra.mxu0 0.0
    %2383 = vmatprep.subr.mxu0 0.0
    %2384 = vmatpush1.msra.mxu0 0.0
    %2385 = vmatprep.subr.mxu0 0.0
    %2386 = vmatpush1.msra.mxu0 0.0
    %2387 = vmatprep.subr.mxu0 0.0
    %2388 = vmatpush1.msra.mxu0 0.0
    %2389 = vmatprep.subr.mxu0 0.0
    %2390 = vmatpush1.msra.mxu0 0.0
    %2391 = vmatprep.subr.mxu0 0.0
    %2392 = vmatpush1.msra.mxu0 0.0
    %2393 = vmatprep.mubr.f32.mxu0 0.0
    %2394 = vmatmul.mubr.f32.gmra.mrb[0].mxu0 %v2304
    %v2395 = vpop.f32.mrb[0].mxu0
    %v2396 = vadd.f32 %v2327, %v2395
    %v2397 = vpop.f32.mrb[0].mxu0
    %2398 = vmatprep.mubr.f32.mxu0 0.0
    %2399 = vmatmul.mubr.f32.gmra.mrb[0].mxu0 %v2305
    %v2400 = vpop.f32.mrb[0].mxu0
    %v2401 = vadd.f32 %v2327, %v2400
    %v2402 = vpop.f32.mrb[0].mxu0
    %2403 = vdwg.mxu0
    %v2404 = vadd.f32 %v570, %v2396
    %v2405 = vadd.f32 %v571, %v2401
    %v2406 = vadd.f32 %v2404, %v530
    %v2407 = vadd.f32 %v2405, %v531
    %v2408 = vld [vmem:[%s3 + $0x4] sm:$0x1]
    %v2409 = vld [vmem:[%s3 + $0x5] sm:$0x1]
    %2410 = vadd.xlane.f32.xlu0 %v2406
    %v2411 = vpop.xlane.xlu0 %2410
    %2412 = vadd.xlane.f32.xlu0 %v2407
    %v2413 = vpop.xlane.xlu0 %2412
    %v2414 = vmul.f32 %v2411, 0.03125
    %v2415 = vmul.f32 %v2413, 0.03125
    %v2416 = vmul.f32 %v2406, %v2406
    %v2417 = vmul.f32 %v2407, %v2407
    %2418 = vadd.xlane.f32.xlu0 %v2416
    %v2419 = vpop.xlane.xlu0 %2418
    %2420 = vadd.xlane.f32.xlu0 %v2417
    %v2421 = vpop.xlane.xlu0 %2420
    %v2422 = vmul.f32 %v2419, 0.03125
    %v2423 = vmul.f32 %v2421, 0.03125
    %v2424 = vmul.f32 %v2414, %v2414
    %v2425 = vmul.f32 %v2415, %v2415
    %v2426 = vsub.f32 %v2422, %v2424
    %v2427 = vsub.f32 %v2423, %v2425
    %v2428 = vsub.f32 %v2406, %v2414
    %v2429 = vsub.f32 %v2407, %v2415
    %v2430 = vadd.f32 %v2426, 1e-05
    %v2431 = vadd.f32 %v2427, 1e-05
    %v2432 = vrsqrt.pop %v2430
    %v2433 = vrsqrt.pop %v2431
    %v2434 = vmul.f32 %v2428, %v2432
    %v2435 = vmul.f32 %v2429, %v2433
    %v2436 = vlaneseq
    %v2437 = vshrl.u32 %v2436, 7
    %v2438 = vsub.s32 0, %v2437
    %v2439 = vrot.slane %v2408, %v2438
    %v2440 = vmul.f32 %v2434, %v2439
    %v2441 = vmul.f32 %v2435, %v2439
    %v2442 = vlaneseq
    %v2443 = vshrl.u32 %v2442, 7
    %v2444 = vsub.s32 0, %v2443
    %v2445 = vrot.slane %v2409, %v2444
    %v2446 = vadd.f32 %v2440, %v2445
    %v2447 = vadd.f32 %v2441, %v2445
    %v2448 = vld [vmem:[#allocation2 + $0x28] sm:$0xff]
    %v2449 = vld [vmem:[#allocation2 + $0x60] sm:$0xff]
    %v2450 = vld [vmem:[#allocation2 + $0x98] sm:$0xff]
    %v2451 = vld [vmem:[#allocation2 + $0xd0] sm:$0xff]
    %v2452 = vld [vmem:[#allocation2 + $0x108] sm:$0xff]
    %v2453 = vld [vmem:[#allocation2 + $0x140] sm:$0xff]
    %v2454 = vld [vmem:[#allocation2 + $0x178] sm:$0xff]
    %v2455 = vld [vmem:[#allocation2 + $0x1b0] sm:$0xff]
    %v2456 = vld [vmem:[#allocation2 + $0x1e8] sm:$0xff]
    %v2457 = vld [vmem:[#allocation2 + $0x220] sm:$0xff]
    %v2458 = vld [vmem:[#allocation2 + $0x258] sm:$0xff]
    %v2459 = vld [vmem:[#allocation2 + $0x290] sm:$0xff]
    %v2460 = vld [vmem:[#allocation2 + $0x2c8] sm:$0xff]
    %v2461 = vld [vmem:[#allocation2 + $0x300] sm:$0xff]
    %v2462 = vld [vmem:[#allocation2 + $0x338] sm:$0xff]
    %v2463 = vld [vmem:[#allocation2 + $0x370] sm:$0xff]
    %v2464 = vld [vmem:[%s5 + $0x5] sm:$0x1]
    %v2466 = vlaneseq
    %v2467 = vshrl.u32 %v2466, 7
    %v2468 = vsub.s32 0, %v2467
    %v2469 = vrot.slane %v2464, %v2468
    %2471 = vmatprep.subr.mxu0 0.0
    %2472 = vmatpush1.msra.mxu0 %v2448
    %2473 = vmatprep.subr.mxu0 0.0
    %2474 = vmatpush1.msra.mxu0 %v2449
    %2475 = vmatprep.subr.mxu0 0.0
    %2476 = vmatpush1.msra.mxu0 %v2450
    %2477 = vmatprep.subr.mxu0 0.0
    %2478 = vmatpush1.msra.mxu0 %v2451
    %2479 = vmatprep.subr.mxu0 0.0
    %2480 = vmatpush1.msra.mxu0 %v2452
    %2481 = vmatprep.subr.mxu0 0.0
    %2482 = vmatpush1.msra.mxu0 %v2453
    %2483 = vmatprep.subr.mxu0 0.0
    %2484 = vmatpush1.msra.mxu0 %v2454
    %2485 = vmatprep.subr.mxu0 0.0
    %2486 = vmatpush1.msra.mxu0 %v2455
    %2487 = vmatprep.subr.mxu0 0.0
    %2488 = vmatpush1.msra.mxu0 %v2456
    %2489 = vmatprep.subr.mxu0 0.0
    %2490 = vmatpush1.msra.mxu0 %v2457
    %2491 = vmatprep.subr.mxu0 0.0
    %2492 = vmatpush1.msra.mxu0 %v2458
    %2493 = vmatprep.subr.mxu0 0.0
    %2494 = vmatpush1.msra.mxu0 %v2459
    %2495 = vmatprep.subr.mxu0 0.0
    %2496 = vmatpush1.msra.mxu0 %v2460
    %2497 = vmatprep.subr.mxu0 0.0
    %2498 = vmatpush1.msra.mxu0 %v2461
    %2499 = vmatprep.subr.mxu0 0.0
    %2500 = vmatpush1.msra.mxu0 %v2462
    %2501 = vmatprep.subr.mxu0 0.0
    %2502 = vmatpush1.msra.mxu0 %v2463
    %2503 = vmatprep.subr.mxu0 0.0
    %2504 = vmatpush1.msra.mxu0 0.0
    %2505 = vmatprep.subr.mxu0 0.0
    %2506 = vmatpush1.msra.mxu0 0.0
    %2507 = vmatprep.subr.mxu0 0.0
    %2508 = vmatpush1.msra.mxu0 0.0
    %2509 = vmatprep.subr.mxu0 0.0
    %2510 = vmatpush1.msra.mxu0 0.0
    %2511 = vmatprep.subr.mxu0 0.0
    %2512 = vmatpush1.msra.mxu0 0.0
    %2513 = vmatprep.subr.mxu0 0.0
    %2514 = vmatpush1.msra.mxu0 0.0
    %2515 = vmatprep.subr.mxu0 0.0
    %2516 = vmatpush1.msra.mxu0 0.0
    %2517 = vmatprep.subr.mxu0 0.0
    %2518 = vmatpush1.msra.mxu0 0.0
    %2519 = vmatprep.subr.mxu0 0.0
    %2520 = vmatpush1.msra.mxu0 0.0
    %2521 = vmatprep.subr.mxu0 0.0
    %2522 = vmatpush1.msra.mxu0 0.0
    %2523 = vmatprep.subr.mxu0 0.0
    %2524 = vmatpush1.msra.mxu0 0.0
    %2525 = vmatprep.subr.mxu0 0.0
    %2526 = vmatpush1.msra.mxu0 0.0
    %2527 = vmatprep.subr.mxu0 0.0
    %2528 = vmatpush1.msra.mxu0 0.0
    %2529 = vmatprep.subr.mxu0 0.0
    %2530 = vmatpush1.msra.mxu0 0.0
    %2531 = vmatprep.subr.mxu0 0.0
    %2532 = vmatpush1.msra.mxu0 0.0
    %2533 = vmatprep.subr.mxu0 0.0
    %2534 = vmatpush1.msra.mxu0 0.0
    %2535 = vmatprep.mubr.f32.mxu0 0.0
    %2536 = vmatmul.mubr.f32.gmra.mrb[0].mxu0 %v2446
    %v2537 = vpop.f32.mrb[0].mxu0
    %v2538 = vadd.f32 %v2469, %v2537
    %v2539 = vpop.f32.mrb[0].mxu0
    %2540 = vmatprep.mubr.f32.mxu0 0.0
    %2541 = vmatmul.mubr.f32.gmra.mrb[0].mxu0 %v2447
    %v2542 = vpop.f32.mrb[0].mxu0
    %v2543 = vadd.f32 %v2469, %v2542
    %v2544 = vpop.f32.mrb[0].mxu0
    %2545 = vdwg.mxu0
    %v2546 = vmax.f32 %v2538, 0.0
    %v2547 = vmax.f32 %v2543, 0.0
    %v2548 = vld [vmem:[#allocation2 + $0x30] sm:$0xff]
    %v2549 = vld [vmem:[#allocation2 + $0x68] sm:$0xff]
    %v2550 = vld [vmem:[#allocation2 + $0xa0] sm:$0xff]
    %v2551 = vld [vmem:[#allocation2 + $0xd8] sm:$0xff]
    %v2552 = vld [vmem:[#allocation2 + $0x110] sm:$0xff]
    %v2553 = vld [vmem:[#allocation2 + $0x148] sm:$0xff]
    %v2554 = vld [vmem:[#allocation2 + $0x180] sm:$0xff]
    %v2555 = vld [vmem:[#allocation2 + $0x1b8] sm:$0xff]
    %v2556 = vld [vmem:[#allocation2 + $0x1f0] sm:$0xff]
    %v2557 = vld [vmem:[#allocation2 + $0x228] sm:$0xff]
    %v2558 = vld [vmem:[#allocation2 + $0x260] sm:$0xff]
    %v2559 = vld [vmem:[#allocation2 + $0x298] sm:$0xff]
    %v2560 = vld [vmem:[#allocation2 + $0x2d0] sm:$0xff]
    %v2561 = vld [vmem:[#allocation2 + $0x308] sm:$0xff]
    %v2562 = vld [vmem:[#allocation2 + $0x340] sm:$0xff]
    %v2563 = vld [vmem:[#allocation2 + $0x378] sm:$0xff]
    %v2564 = vld [vmem:[%s5 + $0x6] sm:$0x1]
    %v2566 = vlaneseq
    %v2567 = vshrl.u32 %v2566, 7
    %v2568 = vsub.s32 0, %v2567
    %v2569 = vrot.slane %v2564, %v2568
    %2571 = vmatprep.subr.mxu0 0.0
    %2572 = vmatpush1.msra.mxu0 %v2548
    %2573 = vmatprep.subr.mxu0 0.0
    %2574 = vmatpush1.msra.mxu0 %v2549
    %2575 = vmatprep.subr.mxu0 0.0
    %2576 = vmatpush1.msra.mxu0 %v2550
    %2577 = vmatprep.subr.mxu0 0.0
    %2578 = vmatpush1.msra.mxu0 %v2551
    %2579 = vmatprep.subr.mxu0 0.0
    %2580 = vmatpush1.msra.mxu0 %v2552
    %2581 = vmatprep.subr.mxu0 0.0
    %2582 = vmatpush1.msra.mxu0 %v2553
    %2583 = vmatprep.subr.mxu0 0.0
    %2584 = vmatpush1.msra.mxu0 %v2554
    %2585 = vmatprep.subr.mxu0 0.0
    %2586 = vmatpush1.msra.mxu0 %v2555
    %2587 = vmatprep.subr.mxu0 0.0
    %2588 = vmatpush1.msra.mxu0 %v2556
    %2589 = vmatprep.subr.mxu0 0.0
    %2590 = vmatpush1.msra.mxu0 %v2557
    %2591 = vmatprep.subr.mxu0 0.0
    %2592 = vmatpush1.msra.mxu0 %v2558
    %2593 = vmatprep.subr.mxu0 0.0
    %2594 = vmatpush1.msra.mxu0 %v2559
    %2595 = vmatprep.subr.mxu0 0.0
    %2596 = vmatpush1.msra.mxu0 %v2560
    %2597 = vmatprep.subr.mxu0 0.0
    %2598 = vmatpush1.msra.mxu0 %v2561
    %2599 = vmatprep.subr.mxu0 0.0
    %2600 = vmatpush1.msra.mxu0 %v2562
    %2601 = vmatprep.subr.mxu0 0.0
    %2602 = vmatpush1.msra.mxu0 %v2563
    %2603 = vmatprep.subr.mxu0 0.0
    %2604 = vmatpush1.msra.mxu0 0.0
    %2605 = vmatprep.subr.mxu0 0.0
    %2606 = vmatpush1.msra.mxu0 0.0
    %2607 = vmatprep.subr.mxu0 0.0
    %2608 = vmatpush1.msra.mxu0 0.0
    %2609 = vmatprep.subr.mxu0 0.0
    %2610 = vmatpush1.msra.mxu0 0.0
    %2611 = vmatprep.subr.mxu0 0.0
    %2612 = vmatpush1.msra.mxu0 0.0
    %2613 = vmatprep.subr.mxu0 0.0
    %2614 = vmatpush1.msra.mxu0 0.0
    %2615 = vmatprep.subr.mxu0 0.0
    %2616 = vmatpush1.msra.mxu0 0.0
    %2617 = vmatprep.subr.mxu0 0.0
    %2618 = vmatpush1.msra.mxu0 0.0
    %2619 = vmatprep.subr.mxu0 0.0
    %2620 = vmatpush1.msra.mxu0 0.0
    %2621 = vmatprep.subr.mxu0 0.0
    %2622 = vmatpush1.msra.mxu0 0.0
    %2623 = vmatprep.subr.mxu0 0.0
    %2624 = vmatpush1.msra.mxu0 0.0
    %2625 = vmatprep.subr.mxu0 0.0
    %2626 = vmatpush1.msra.mxu0 0.0
    %2627 = vmatprep.subr.mxu0 0.0
    %2628 = vmatpush1.msra.mxu0 0.0
    %2629 = vmatprep.subr.mxu0 0.0
    %2630 = vmatpush1.msra.mxu0 0.0
    %2631 = vmatprep.subr.mxu0 0.0
    %2632 = vmatpush1.msra.mxu0 0.0
    %2633 = vmatprep.subr.mxu0 0.0
    %2634 = vmatpush1.msra.mxu0 0.0
    %2635 = vmatprep.mubr.f32.mxu0 0.0
    %2636 = vmatmul.mubr.f32.gmra.mrb[0].mxu0 %v2546
    %v2637 = vpop.f32.mrb[0].mxu0
    %v2638 = vadd.f32 %v2569, %v2637
    %v2639 = vpop.f32.mrb[0].mxu0
    %2640 = vmatprep.mubr.f32.mxu0 0.0
    %2641 = vmatmul.mubr.f32.gmra.mrb[0].mxu0 %v2547
    %v2642 = vpop.f32.mrb[0].mxu0
    %v2643 = vadd.f32 %v2569, %v2642
    %v2644 = vpop.f32.mrb[0].mxu0
    %2645 = vdwg.mxu0
    %v2646 = vadd.f32 %v2638, %v2406
    %v2647 = vadd.f32 %v2643, %v2407
    %2648 = vst [vmem:[%s6] sm:$0xff] %v2646
    %2649 = vst [vmem:[%s6 + $0x8] sm:$0xff] %v2647
    // Predicated region
    $region30: #{qanet_block.1} parent=1 // pred_check
      _
    $region31: #{qanet_block.1} parent=1 // pred_check_branch
      %2651 = sbr.rel (0) target = $region33
    $region32: #{qanet_block.1} parent=1 // pred_region
      _
    $region33: #{qanet_block.1} parent=1 // pred_fallthru
      _
    // Predicated region
    $region34: #{qanet_block.1} parent=1 // pred_check
      _
    $region35: #{qanet_block.1} parent=1 // pred_check_branch
      %2653 = sbr.rel (0) target = $region37
    $region36: #{qanet_block.1} parent=1 // pred_region
      _
    $region37: #{qanet_block.1} parent=1 // pred_fallthru
      _
    %2654 = vsyncpa [#allocation3], 1

</llo_original>
